<compile_context>
chip_gen: v6e
topology: v6e:2x2x1
jax: 0.10.0
libtpu: 0.0.40
codegen_flags: <defaults>
</compile_context>

<pallas_src>
import functools
import math

import jax
import jax.numpy as jnp
import numpy as np
from jax.experimental import pallas as pl
from jax.experimental.pallas import tpu as pltpu  # noqa: F401  (kept per template)

LN_EPS = 1e-12

# ----------------------------- config (small) --------------------------------
HIDDEN = 32            # config.hidden_size
NUM_HEADS = 4          # config.num_attention_heads
HEAD = HIDDEN // NUM_HEADS
INTER = 64             # config.intermediate_size
ENC_HIDDEN = 48        # config.encoder_hidden_size (image encoder)
TEXT_ENC_HIDDEN = 24   # config.text_encoder_hidden_size
BATCH = 2
QUERY_LEN = 8          # query tokens
TEXT_LEN = 8           # text tokens appended to the queries
SEQ = QUERY_LEN + TEXT_LEN
ENC_SEQ = 16           # multiple of 8 so batch-fold reshapes stay tile-aligned
TEXT_ENC_SEQ = 8

WPAD = 16   # bf16 sublane-tile alignment for weight blocks inside the slabs
BPAD = 8    # f32 sublane-tile alignment for bias / LayerNorm rows


# ----------------------------- in-kernel math ---------------------------------
def _erf(x):
    # Abramowitz & Stegun 7.1.26 rational approximation (|err| < 1.5e-7);
    # exp issues on the EUP, the polynomial is a few VALU ops on a tiny tile.
    a1, a2, a3, a4, a5 = 0.254829592, -0.284496736, 1.421413741, -1.453152027, 1.061405429
    p = 0.3275911
    s = jnp.where(x >= 0.0, 1.0, -1.0)
    ax = jnp.abs(x)
    t = 1.0 / (1.0 + p * ax)
    poly = ((((a5 * t + a4) * t + a3) * t + a2) * t + a1) * t
    return s * (1.0 - poly * jnp.exp(-ax * ax))


def _gelu(x):
    # erf-based GELU (A&S approximation of erf), matching ACT2FN['gelu'] semantics
    return 0.5 * x * (1.0 + _erf(x * (1.0 / math.sqrt(2.0))))


def _layernorm(y, gamma, beta):
    mean = jnp.mean(y, axis=-1, keepdims=True)
    var = jnp.mean((y - mean) ** 2, axis=-1, keepdims=True)
    return (y - mean) * jax.lax.rsqrt(var + LN_EPS) * gamma + beta


# ----------------------------- parameter packing -------------------------------
class _SlabPacker:
    """Packs many small parameter arrays into one tall slab per (dtype, lane-width)
    class so the kernel issues a handful of prologue DMAs instead of 36."""

    def __init__(self, width, row_align, out_dtype):
        self.width = width
        self.row_align = row_align
        self.out_dtype = out_dtype
        self.blocks = []
        self.rows = 0

    def add(self, arr):
        assert arr.ndim == 2 and arr.shape[1] == self.width
        start = self.rows
        r = arr.shape[0]
        pad = (-r) % self.row_align            # keep every block sublane-tile aligned
        if pad:
            arr = jnp.concatenate([arr, jnp.zeros((pad, self.width), arr.dtype)], axis=0)
        self.blocks.append(arr)
        self.rows += r + pad
        return start

    def finish(self):
        return jnp.concatenate(self.blocks, axis=0).astype(self.out_dtype)


def pack_iqm_params(params):
    """One-time offline packing:
       * 4 slabs: bf16 weights of out-width 32 / 64, f32 bias+LN rows of width 32 / 64.
       * softmax scale 1/sqrt(head_dim) folded into wq / bq.
    Returns (slabs, static row-offset table)."""
    w32 = _SlabPacker(HIDDEN, WPAD, jnp.bfloat16)
    w64 = _SlabPacker(2 * HIDDEN, WPAD, jnp.bfloat16)
    b32 = _SlabPacker(HIDDEN, BPAD, jnp.float32)
    b64 = _SlabPacker(2 * HIDDEN, BPAD, jnp.float32)
    scale = 1.0 / math.sqrt(HEAD)

    offs = {}
    for name in ("self_attn", "cross_attn", "text_cross_attn"):
        p = params[name]
        offs[name] = dict(
            wq=w32.add(p["wq"] * scale),           # scale folded into Q projection
            wo=w32.add(p["wo"]),
            wkv=w64.add(p["wkv"]),                  # fused K|V weights
            kv_rows=int(p["wkv"].shape[0]),
            bq=b32.add(p["bq"] * scale),
            bo=b32.add(p["bo"]),
            ln_g=b32.add(p["ln_g"]),
            ln_b=b32.add(p["ln_b"]),
            bkv=b64.add(p["bkv"]),
        )
    for name in ("ffn_query", "ffn_text"):
        p = params[name]
        offs[name] = dict(
            w1=w64.add(p["w1"]),
            w2=w32.add(p["w2"]),
            b1=b64.add(p["b1"]),
            b2=b32.add(p["b2"]),
            ln_g=b32.add(p["ln_g"]),
            ln_b=b32.add(p["ln_b"]),
        )
    slabs = (w32.finish(), w64.finish(), b32.finish(), b64.finish())
    return slabs, offs


# ----------------------------- fused Pallas kernel -----------------------------
def _iqm_kernel(x_ref, enc_ref, tenc_ref, w32_ref, w64_ref, b32_ref, b64_ref,
                out_ref, *, offs, query_length):
    """Whole IQM layer in one gridless call; every weight is read from the packed
    slabs by a static, tile-aligned row slice at its point of use."""

    def brow32(off):                       # (1, 32) f32 bias / LN row
        return b32_ref[off:off + 1, :]

    def brow64(off):                       # (1, 64) f32 bias row
        return b64_ref[off:off + 1, :]

    def mha(x3, kv3, o):
        B, Sq, _ = x3.shape
        _, Skv, Hkv = kv3.shape
        x2 = x3.reshape(B * Sq, HIDDEN)                         # batch-folded rows
        kv2b = kv3.reshape(B * Skv, Hkv).astype(jnp.bfloat16)

        # Q projection (softmax scale pre-folded into wq / bq at pack time).
        wq = w32_ref[o["wq"]:o["wq"] + HIDDEN, :]
        q2 = jnp.dot(x2.astype(jnp.bfloat16), wq,
                     preferred_element_type=jnp.float32) + brow32(o["bq"])
        # Fused K|V projection: one (Hkv, 2H) matmul.
        wkv = w64_ref[o["wkv"]:o["wkv"] + o["kv_rows"], :]
        kvp = jnp.dot(kv2b, wkv, preferred_element_type=jnp.float32) + brow64(o["bkv"])

        q3 = q2.reshape(B, Sq, HIDDEN)
        kvp3 = kvp.reshape(B, Skv, 2 * HIDDEN)

        # Per-head score/softmax/context, statically unrolled (4 heads, 8-lane
        # slices taken directly from the fused K|V result).  Softmax math stays
        # f32; the denominator reciprocal goes to the EUP slot.
        ctxs = []
        for h in range(NUM_HEADS):
            sl = slice(h * HEAD, (h + 1) * HEAD)
            qh = q3[:, :, sl].astype(jnp.bfloat16)
            kh = kvp3[:, :, sl].astype(jnp.bfloat16)
            vh = kvp3[:, :, HIDDEN + h * HEAD:HIDDEN + (h + 1) * HEAD].astype(jnp.bfloat16)
            s = jnp.einsum("bqd,bkd->bqk", qh, kh, preferred_element_type=jnp.float32)
            s = s - jnp.max(s, axis=-1, keepdims=True)
            e = jnp.exp(s)
            p = e * pl.reciprocal(jnp.sum(e, axis=-1, keepdims=True), approx=True)
            ctxs.append(jnp.einsum("bqk,bkd->bqd", p.astype(jnp.bfloat16), vh,
                                   preferred_element_type=jnp.float32))
        # lane-concat the 4 head contexts -> one K=32 Wo matmul (no zeros init,
        # no 4x K=8 partial accumulations).
        ctx = jnp.concatenate(ctxs, axis=-1).reshape(B * Sq, HIDDEN)

        wo = w32_ref[o["wo"]:o["wo"] + HIDDEN, :]
        y = jnp.dot(ctx.astype(jnp.bfloat16), wo,
                    preferred_element_type=jnp.float32) + brow32(o["bo"]) + x2
        return _layernorm(y, brow32(o["ln_g"]), brow32(o["ln_b"])).reshape(B, Sq, HIDDEN)

    def ffn(x3, o):
        B, S, _ = x3.shape
        x2 = x3.reshape(B * S, HIDDEN)
        w1 = w64_ref[o["w1"]:o["w1"] + HIDDEN, :]
        h = jnp.dot(x2.astype(jnp.bfloat16), w1,
                    preferred_element_type=jnp.float32) + brow64(o["b1"])
        h = _gelu(h)                                           # f32 VPU/EUP math
        w2 = w32_ref[o["w2"]:o["w2"] + INTER, :]
        y = jnp.dot(h.astype(jnp.bfloat16), w2,
                    preferred_element_type=jnp.float32) + brow32(o["b2"]) + x2
        return _layernorm(y, brow32(o["ln_g"]), brow32(o["ln_b"])).reshape(B, S, HIDDEN)

    x = x_ref[...]                                             # (B, S, H)
    # 1) self-attention over (query + text) tokens
    ao = mha(x, x, offs["self_attn"])
    # 2) cross attention for the query tokens (image encoder, then text encoder)
    q = ao[:, :query_length, :]                                # static, 8-aligned slice
    q = mha(q, enc_ref[...], offs["cross_attn"])
    q = mha(q, tenc_ref[...], offs["text_cross_attn"])
    # 3) feed-forward branches (query branch and text branch)
    out_q = ffn(q, offs["ffn_query"])                          # (B, Q, H)
    out_t = ffn(ao[:, query_length:, :], offs["ffn_text"])     # (B, T, H)

    # single full-ref store (sublane concat at the 8-aligned query boundary)
    out_ref[...] = jnp.concatenate([out_q, out_t], axis=1).astype(out_ref.dtype)


def iqm_layer_forward(hidden_states, encoder_hidden_states, text_encoder_hidden_states,
                      slabs, offs, query_length):
    # Single fused, gridless pallas_call: 3 activation inputs + 4 parameter slabs
    # (< 100 KB total) are mapped whole into VMEM; the whole layer runs in one
    # dispatch with 7 prologue DMAs.
    kern = functools.partial(_iqm_kernel, offs=offs, query_length=query_length)
    return pl.pallas_call(
        kern,
        out_shape=jax.ShapeDtypeStruct(hidden_states.shape, hidden_states.dtype),
    )(hidden_states, encoder_hidden_states, text_encoder_hidden_states, *slabs)


# ----------------------------- parameters --------------------------------------
def _linear_params(key, din, dout):
    kw, kb = jax.random.split(key)
    w = jax.random.normal(kw, (din, dout), jnp.float32) * 0.02
    b = jax.random.normal(kb, (1, dout), jnp.float32) * 0.02
    return w, b


def init_attention_params(key, hidden, kv_hidden):
    ks = jax.random.split(key, 4)
    wq, bq = _linear_params(ks[0], hidden, hidden)
    wk, bk = _linear_params(ks[1], kv_hidden, hidden)
    wv, bv = _linear_params(ks[2], kv_hidden, hidden)
    wo, bo = _linear_params(ks[3], hidden, hidden)
    return dict(wq=wq, bq=bq,
                wkv=jnp.concatenate([wk, wv], axis=1),     # fused K|V weights
                bkv=jnp.concatenate([bk, bv], axis=1),
                wo=wo, bo=bo,
                ln_g=jnp.ones((1, hidden), jnp.float32),
                ln_b=jnp.zeros((1, hidden), jnp.float32))


def init_ffn_params(key, hidden, inter):
    k1, k2 = jax.random.split(key)
    w1, b1 = _linear_params(k1, hidden, inter)
    w2, b2 = _linear_params(k2, inter, hidden)
    return dict(w1=w1, b1=b1, w2=w2, b2=b2,
                ln_g=jnp.ones((1, hidden), jnp.float32),
                ln_b=jnp.zeros((1, hidden), jnp.float32))


def init_iqm_layer_params(key):
    ks = jax.random.split(key, 5)
    return dict(
        self_attn=init_attention_params(ks[0], HIDDEN, HIDDEN),
        cross_attn=init_attention_params(ks[1], HIDDEN, ENC_HIDDEN),
        text_cross_attn=init_attention_params(ks[2], HIDDEN, TEXT_ENC_HIDDEN),
        ffn_query=init_ffn_params(ks[3], HIDDEN, INTER),
        ffn_text=init_ffn_params(ks[4], HIDDEN, INTER),
    )


# ----------------------------- pure-JAX reference --------------------------------
def _ref_ln(y, g, b):
    mean = jnp.mean(y, axis=-1, keepdims=True)
    var = jnp.mean((y - mean) ** 2, axis=-1, keepdims=True)
    return (y - mean) / jnp.sqrt(var + LN_EPS) * g + b


def _ref_attention(x, kv, p):
    q = x @ p["wq"] + p["bq"]
    k = kv @ p["wkv"][:, :HIDDEN] + p["bkv"][:, :HIDDEN]
    v = kv @ p["wkv"][:, HIDDEN:] + p["bkv"][:, HIDDEN:]

    def split(t):
        B, S, _ = t.shape
        return t.reshape(B, S, NUM_HEADS, HEAD).transpose(0, 2, 1, 3)

    qh, kh, vh = split(q), split(k), split(v)
    scores = jnp.einsum("bhqd,bhkd->bhqk", qh, kh) / math.sqrt(HEAD)
    probs = jax.nn.softmax(scores, axis=-1)
    ctx = jnp.einsum("bhqk,bhkd->bhqd", probs, vh).transpose(0, 2, 1, 3)
    ctx = ctx.reshape(x.shape)
    y = ctx @ p["wo"] + p["bo"] + x
    return _ref_ln(y, p["ln_g"], p["ln_b"])


def _ref_ffn(x, p):
    h = jax.nn.gelu(x @ p["w1"] + p["b1"], approximate=False)
    y = h @ p["w2"] + p["b2"] + x
    return _ref_ln(y, p["ln_g"], p["ln_b"])


def _ref_forward(hidden, enc, text_enc, params, query_length):
    ao = _ref_attention(hidden, hidden, params["self_attn"])
    q = ao[:, :query_length, :]
    q = _ref_attention(q, enc, params["cross_attn"])[:, :query_length, :]
    q = _ref_attention(q, text_enc, params["text_cross_attn"])
    out_q = _ref_ffn(q, params["ffn_query"])
    out_t = _ref_ffn(ao[:, query_length:, :], params["ffn_text"])
    return jnp.concatenate([out_q, out_t], axis=1)


# ----------------------------- main ----------------------------------------------
if __name__ == "__main__":
    key = jax.random.PRNGKey(0)
    k_x, k_e, k_t, k_p = jax.random.split(key, 4)

    hidden_states = jax.random.normal(k_x, (BATCH, SEQ, HIDDEN), jnp.float32)
    encoder_hidden_states = jax.random.normal(k_e, (BATCH, ENC_SEQ, ENC_HIDDEN), jnp.float32)
    text_encoder_hidden_states = jax.random.normal(
        k_t, (BATCH, TEXT_ENC_SEQ, TEXT_ENC_HIDDEN), jnp.float32)
    params = init_iqm_layer_params(k_p)
    slabs, offs = pack_iqm_params(params)   # one-time offline packing / scale folding

    out = iqm_layer_forward(hidden_states, encoder_hidden_states,
                            text_encoder_hidden_states, slabs, offs, QUERY_LEN)
    out = jax.block_until_ready(out)

    ref = _ref_forward(hidden_states, encoder_hidden_states,
                       text_encoder_hidden_states, params, QUERY_LEN)
    # Tolerance covers bf16 MXU operands (f32 accumulation), the approx
    # softmax-denominator reciprocal (EUP vrcp) and the A&S erf approximation;
    # the f32 reference keeps everything in f32.
    np.testing.assert_allclose(np.asarray(out), np.asarray(ref), atol=2e-2, rtol=2e-2)

    print("KERNEL_OK")
</pallas_src>

<mosaic_0001>
module attributes {stable_mosaic.version = 11 : i64} {
  func.func @_iqm_kernel(%arg0: memref<2x16x32xf32, #tpu.memory_space<vmem>>, %arg1: memref<2x16x48xf32, #tpu.memory_space<vmem>>, %arg2: memref<2x8x24xf32, #tpu.memory_space<vmem>>, %arg3: memref<320x32xbf16, #tpu.memory_space<vmem>>, %arg4: memref<176x64xbf16, #tpu.memory_space<vmem>>, %arg5: memref<144x32xf32, #tpu.memory_space<vmem>>, %arg6: memref<40x64xf32, #tpu.memory_space<vmem>>, %arg7: memref<2x16x32xf32, #tpu.memory_space<vmem>>) attributes {dimension_semantics = [], scalar_prefetch = 0 : i64, scratch_operands = 0 : i64, tpu.core_type = #tpu.core_type<tc>} {
    %c0 = arith.constant 0 : index
    %c0_0 = arith.constant 0 : index
    %c0_1 = arith.constant 0 : index
    %0 = vector.load %arg0[%c0, %c0_0, %c0_1] : memref<2x16x32xf32, #tpu.memory_space<vmem>>, vector<2x16x32xf32>
    %1 = vector.shape_cast %0 : vector<2x16x32xf32> to vector<32x32xf32>
    %2 = vector.shape_cast %0 : vector<2x16x32xf32> to vector<32x32xf32>
    %3 = arith.truncf %2 : vector<32x32xf32> to vector<32x32xbf16>
    %c0_2 = arith.constant 0 : index
    %c0_3 = arith.constant 0 : index
    %4 = vector.load %arg3[%c0_2, %c0_3] : memref<320x32xbf16, #tpu.memory_space<vmem>>, vector<32x32xbf16>
    %5 = arith.truncf %1 : vector<32x32xf32> to vector<32x32xbf16>
    %cst = arith.constant dense<0.000000e+00> : vector<32x32xf32>
    %6 = tpu.matmul %5, %4, %cst {dimension_numbers = #tpu.dot_dimension_numbers<[1], [0], [0], [1], [0, 0, 1, 1], [], []>} : vector<32x32xbf16>, vector<32x32xbf16>, vector<32x32xf32> -> vector<32x32xf32>
    %c0_4 = arith.constant 0 : index
    %c0_5 = arith.constant 0 : index
    %7 = vector.load %arg5[%c0_4, %c0_5] : memref<144x32xf32, #tpu.memory_space<vmem>>, vector<1x32xf32>
    %8 = vector.broadcast %7 : vector<1x32xf32> to vector<32x32xf32>
    %9 = arith.addf %6, %8 : vector<32x32xf32>
    %c0_6 = arith.constant 0 : index
    %c0_7 = arith.constant 0 : index
    %10 = vector.load %arg4[%c0_6, %c0_7] : memref<176x64xbf16, #tpu.memory_space<vmem>>, vector<32x64xbf16>
    %cst_8 = arith.constant dense<0.000000e+00> : vector<32x64xf32>
    %11 = tpu.matmul %3, %10, %cst_8 {dimension_numbers = #tpu.dot_dimension_numbers<[1], [0], [0], [1], [0, 0, 1, 1], [], []>} : vector<32x32xbf16>, vector<32x64xbf16>, vector<32x64xf32> -> vector<32x64xf32>
    %c0_9 = arith.constant 0 : index
    %c0_10 = arith.constant 0 : index
    %12 = vector.load %arg6[%c0_9, %c0_10] : memref<40x64xf32, #tpu.memory_space<vmem>>, vector<1x64xf32>
    %13 = vector.broadcast %12 : vector<1x64xf32> to vector<32x64xf32>
    %14 = arith.addf %11, %13 : vector<32x64xf32>
    %15 = vector.shape_cast %9 : vector<32x32xf32> to vector<2x16x32xf32>
    %16 = vector.shape_cast %14 : vector<32x64xf32> to vector<2x16x64xf32>
    %17 = vector.extract_strided_slice %15 {offsets = [0, 0, 0], sizes = [2, 16, 8], strides = [1, 1, 1]} : vector<2x16x32xf32> to vector<2x16x8xf32>
    %18 = arith.truncf %17 : vector<2x16x8xf32> to vector<2x16x8xbf16>
    %19 = vector.extract_strided_slice %16 {offsets = [0, 0, 0], sizes = [2, 16, 8], strides = [1, 1, 1]} : vector<2x16x64xf32> to vector<2x16x8xf32>
    %20 = arith.truncf %19 : vector<2x16x8xf32> to vector<2x16x8xbf16>
    %21 = vector.extract_strided_slice %16 {offsets = [0, 0, 32], sizes = [2, 16, 8], strides = [1, 1, 1]} : vector<2x16x64xf32> to vector<2x16x8xf32>
    %22 = arith.truncf %21 : vector<2x16x8xf32> to vector<2x16x8xbf16>
    "tpu.trace_start"() <{level = 10 : i32, message = "bqd,bkd->bqk"}> : () -> ()
    %cst_11 = arith.constant dense<0.000000e+00> : vector<2x16x16xf32>
    %23 = tpu.matmul %18, %20, %cst_11 {dimension_numbers = #tpu.dot_dimension_numbers<[2], [2], [1], [1], [0, 0, 0, 1, 1, 1], [0], [0]>} : vector<2x16x8xbf16>, vector<2x16x8xbf16>, vector<2x16x16xf32> -> vector<2x16x16xf32>
    "tpu.trace_stop"() : () -> ()
    %cst_12 = arith.constant dense<0xFF800000> : vector<2x16xf32>
    %24 = vector.multi_reduction <maximumf>, %23, %cst_12 [2] : vector<2x16x16xf32> to vector<2x16xf32>
    %25 = vector.shape_cast %24 : vector<2x16xf32> to vector<2x16x1xf32>
    %26 = vector.broadcast %25 : vector<2x16x1xf32> to vector<2x16x16xf32>
    %27 = arith.subf %23, %26 : vector<2x16x16xf32>
    %28 = math.exp %27 : vector<2x16x16xf32>
    %cst_13 = arith.constant dense<0.000000e+00> : vector<2x16xf32>
    %29 = vector.multi_reduction <add>, %28, %cst_13 [2] : vector<2x16x16xf32> to vector<2x16xf32>
    %30 = vector.shape_cast %29 : vector<2x16xf32> to vector<2x16x1xf32>
    %31 = tpu.reciprocal %30 {approx = true} : vector<2x16x1xf32> -> vector<2x16x1xf32>
    %32 = vector.broadcast %31 : vector<2x16x1xf32> to vector<2x16x16xf32>
    %33 = arith.mulf %28, %32 : vector<2x16x16xf32>
    %34 = arith.truncf %33 : vector<2x16x16xf32> to vector<2x16x16xbf16>
    "tpu.trace_start"() <{level = 10 : i32, message = "bqk,bkd->bqd"}> : () -> ()
    %cst_14 = arith.constant dense<0.000000e+00> : vector<2x16x8xf32>
    %35 = tpu.matmul %34, %22, %cst_14 {dimension_numbers = #tpu.dot_dimension_numbers<[2], [1], [1], [2], [0, 0, 0, 1, 1, 2], [0], [0]>} : vector<2x16x16xbf16>, vector<2x16x8xbf16>, vector<2x16x8xf32> -> vector<2x16x8xf32>
    "tpu.trace_stop"() : () -> ()
    %36 = vector.extract_strided_slice %15 {offsets = [0, 0, 8], sizes = [2, 16, 8], strides = [1, 1, 1]} : vector<2x16x32xf32> to vector<2x16x8xf32>
    %37 = arith.truncf %36 : vector<2x16x8xf32> to vector<2x16x8xbf16>
    %38 = vector.extract_strided_slice %16 {offsets = [0, 0, 8], sizes = [2, 16, 8], strides = [1, 1, 1]} : vector<2x16x64xf32> to vector<2x16x8xf32>
    %39 = arith.truncf %38 : vector<2x16x8xf32> to vector<2x16x8xbf16>
    %40 = vector.extract_strided_slice %16 {offsets = [0, 0, 40], sizes = [2, 16, 8], strides = [1, 1, 1]} : vector<2x16x64xf32> to vector<2x16x8xf32>
    %41 = arith.truncf %40 : vector<2x16x8xf32> to vector<2x16x8xbf16>
    "tpu.trace_start"() <{level = 10 : i32, message = "bqd,bkd->bqk"}> : () -> ()
    %cst_15 = arith.constant dense<0.000000e+00> : vector<2x16x16xf32>
    %42 = tpu.matmul %37, %39, %cst_15 {dimension_numbers = #tpu.dot_dimension_numbers<[2], [2], [1], [1], [0, 0, 0, 1, 1, 1], [0], [0]>} : vector<2x16x8xbf16>, vector<2x16x8xbf16>, vector<2x16x16xf32> -> vector<2x16x16xf32>
    "tpu.trace_stop"() : () -> ()
    %cst_16 = arith.constant dense<0xFF800000> : vector<2x16xf32>
    %43 = vector.multi_reduction <maximumf>, %42, %cst_16 [2] : vector<2x16x16xf32> to vector<2x16xf32>
    %44 = vector.shape_cast %43 : vector<2x16xf32> to vector<2x16x1xf32>
    %45 = vector.broadcast %44 : vector<2x16x1xf32> to vector<2x16x16xf32>
    %46 = arith.subf %42, %45 : vector<2x16x16xf32>
    %47 = math.exp %46 : vector<2x16x16xf32>
    %cst_17 = arith.constant dense<0.000000e+00> : vector<2x16xf32>
    %48 = vector.multi_reduction <add>, %47, %cst_17 [2] : vector<2x16x16xf32> to vector<2x16xf32>
    %49 = vector.shape_cast %48 : vector<2x16xf32> to vector<2x16x1xf32>
    %50 = tpu.reciprocal %49 {approx = true} : vector<2x16x1xf32> -> vector<2x16x1xf32>
    %51 = vector.broadcast %50 : vector<2x16x1xf32> to vector<2x16x16xf32>
    %52 = arith.mulf %47, %51 : vector<2x16x16xf32>
    %53 = arith.truncf %52 : vector<2x16x16xf32> to vector<2x16x16xbf16>
    "tpu.trace_start"() <{level = 10 : i32, message = "bqk,bkd->bqd"}> : () -> ()
    %cst_18 = arith.constant dense<0.000000e+00> : vector<2x16x8xf32>
    %54 = tpu.matmul %53, %41, %cst_18 {dimension_numbers = #tpu.dot_dimension_numbers<[2], [1], [1], [2], [0, 0, 0, 1, 1, 2], [0], [0]>} : vector<2x16x16xbf16>, vector<2x16x8xbf16>, vector<2x16x8xf32> -> vector<2x16x8xf32>
    "tpu.trace_stop"() : () -> ()
    %55 = vector.extract_strided_slice %15 {offsets = [0, 0, 16], sizes = [2, 16, 8], strides = [1, 1, 1]} : vector<2x16x32xf32> to vector<2x16x8xf32>
    %56 = arith.truncf %55 : vector<2x16x8xf32> to vector<2x16x8xbf16>
    %57 = vector.extract_strided_slice %16 {offsets = [0, 0, 16], sizes = [2, 16, 8], strides = [1, 1, 1]} : vector<2x16x64xf32> to vector<2x16x8xf32>
    %58 = arith.truncf %57 : vector<2x16x8xf32> to vector<2x16x8xbf16>
    %59 = vector.extract_strided_slice %16 {offsets = [0, 0, 48], sizes = [2, 16, 8], strides = [1, 1, 1]} : vector<2x16x64xf32> to vector<2x16x8xf32>
    %60 = arith.truncf %59 : vector<2x16x8xf32> to vector<2x16x8xbf16>
    "tpu.trace_start"() <{level = 10 : i32, message = "bqd,bkd->bqk"}> : () -> ()
    %cst_19 = arith.constant dense<0.000000e+00> : vector<2x16x16xf32>
    %61 = tpu.matmul %56, %58, %cst_19 {dimension_numbers = #tpu.dot_dimension_numbers<[2], [2], [1], [1], [0, 0, 0, 1, 1, 1], [0], [0]>} : vector<2x16x8xbf16>, vector<2x16x8xbf16>, vector<2x16x16xf32> -> vector<2x16x16xf32>
    "tpu.trace_stop"() : () -> ()
    %cst_20 = arith.constant dense<0xFF800000> : vector<2x16xf32>
    %62 = vector.multi_reduction <maximumf>, %61, %cst_20 [2] : vector<2x16x16xf32> to vector<2x16xf32>
    %63 = vector.shape_cast %62 : vector<2x16xf32> to vector<2x16x1xf32>
    %64 = vector.broadcast %63 : vector<2x16x1xf32> to vector<2x16x16xf32>
    %65 = arith.subf %61, %64 : vector<2x16x16xf32>
    %66 = math.exp %65 : vector<2x16x16xf32>
    %cst_21 = arith.constant dense<0.000000e+00> : vector<2x16xf32>
    %67 = vector.multi_reduction <add>, %66, %cst_21 [2] : vector<2x16x16xf32> to vector<2x16xf32>
    %68 = vector.shape_cast %67 : vector<2x16xf32> to vector<2x16x1xf32>
    %69 = tpu.reciprocal %68 {approx = true} : vector<2x16x1xf32> -> vector<2x16x1xf32>
    %70 = vector.broadcast %69 : vector<2x16x1xf32> to vector<2x16x16xf32>
    %71 = arith.mulf %66, %70 : vector<2x16x16xf32>
    %72 = arith.truncf %71 : vector<2x16x16xf32> to vector<2x16x16xbf16>
    "tpu.trace_start"() <{level = 10 : i32, message = "bqk,bkd->bqd"}> : () -> ()
    %cst_22 = arith.constant dense<0.000000e+00> : vector<2x16x8xf32>
    %73 = tpu.matmul %72, %60, %cst_22 {dimension_numbers = #tpu.dot_dimension_numbers<[2], [1], [1], [2], [0, 0, 0, 1, 1, 2], [0], [0]>} : vector<2x16x16xbf16>, vector<2x16x8xbf16>, vector<2x16x8xf32> -> vector<2x16x8xf32>
    "tpu.trace_stop"() : () -> ()
    %74 = vector.extract_strided_slice %15 {offsets = [0, 0, 24], sizes = [2, 16, 8], strides = [1, 1, 1]} : vector<2x16x32xf32> to vector<2x16x8xf32>
    %75 = arith.truncf %74 : vector<2x16x8xf32> to vector<2x16x8xbf16>
    %76 = vector.extract_strided_slice %16 {offsets = [0, 0, 24], sizes = [2, 16, 8], strides = [1, 1, 1]} : vector<2x16x64xf32> to vector<2x16x8xf32>
    %77 = arith.truncf %76 : vector<2x16x8xf32> to vector<2x16x8xbf16>
    %78 = vector.extract_strided_slice %16 {offsets = [0, 0, 56], sizes = [2, 16, 8], strides = [1, 1, 1]} : vector<2x16x64xf32> to vector<2x16x8xf32>
    %79 = arith.truncf %78 : vector<2x16x8xf32> to vector<2x16x8xbf16>
    "tpu.trace_start"() <{level = 10 : i32, message = "bqd,bkd->bqk"}> : () -> ()
    %cst_23 = arith.constant dense<0.000000e+00> : vector<2x16x16xf32>
    %80 = tpu.matmul %75, %77, %cst_23 {dimension_numbers = #tpu.dot_dimension_numbers<[2], [2], [1], [1], [0, 0, 0, 1, 1, 1], [0], [0]>} : vector<2x16x8xbf16>, vector<2x16x8xbf16>, vector<2x16x16xf32> -> vector<2x16x16xf32>
    "tpu.trace_stop"() : () -> ()
    %cst_24 = arith.constant dense<0xFF800000> : vector<2x16xf32>
    %81 = vector.multi_reduction <maximumf>, %80, %cst_24 [2] : vector<2x16x16xf32> to vector<2x16xf32>
    %82 = vector.shape_cast %81 : vector<2x16xf32> to vector<2x16x1xf32>
    %83 = vector.broadcast %82 : vector<2x16x1xf32> to vector<2x16x16xf32>
    %84 = arith.subf %80, %83 : vector<2x16x16xf32>
    %85 = math.exp %84 : vector<2x16x16xf32>
    %cst_25 = arith.constant dense<0.000000e+00> : vector<2x16xf32>
    %86 = vector.multi_reduction <add>, %85, %cst_25 [2] : vector<2x16x16xf32> to vector<2x16xf32>
    %87 = vector.shape_cast %86 : vector<2x16xf32> to vector<2x16x1xf32>
    %88 = tpu.reciprocal %87 {approx = true} : vector<2x16x1xf32> -> vector<2x16x1xf32>
    %89 = vector.broadcast %88 : vector<2x16x1xf32> to vector<2x16x16xf32>
    %90 = arith.mulf %85, %89 : vector<2x16x16xf32>
    %91 = arith.truncf %90 : vector<2x16x16xf32> to vector<2x16x16xbf16>
    "tpu.trace_start"() <{level = 10 : i32, message = "bqk,bkd->bqd"}> : () -> ()
    %cst_26 = arith.constant dense<0.000000e+00> : vector<2x16x8xf32>
    %92 = tpu.matmul %91, %79, %cst_26 {dimension_numbers = #tpu.dot_dimension_numbers<[2], [1], [1], [2], [0, 0, 0, 1, 1, 2], [0], [0]>} : vector<2x16x16xbf16>, vector<2x16x8xbf16>, vector<2x16x8xf32> -> vector<2x16x8xf32>
    "tpu.trace_stop"() : () -> ()
    %93 = tpu.concatenate %35, %54, %73, %92 in 2 : vector<2x16x8xf32>, vector<2x16x8xf32>, vector<2x16x8xf32>, vector<2x16x8xf32> -> vector<2x16x32xf32>
    %94 = vector.shape_cast %93 : vector<2x16x32xf32> to vector<32x32xf32>
    %c32 = arith.constant 32 : index
    %c0_27 = arith.constant 0 : index
    %95 = vector.load %arg3[%c32, %c0_27] : memref<320x32xbf16, #tpu.memory_space<vmem>>, vector<32x32xbf16>
    %96 = arith.truncf %94 : vector<32x32xf32> to vector<32x32xbf16>
    %cst_28 = arith.constant dense<0.000000e+00> : vector<32x32xf32>
    %97 = tpu.matmul %96, %95, %cst_28 {dimension_numbers = #tpu.dot_dimension_numbers<[1], [0], [0], [1], [0, 0, 1, 1], [], []>} : vector<32x32xbf16>, vector<32x32xbf16>, vector<32x32xf32> -> vector<32x32xf32>
    %c8 = arith.constant 8 : index
    %c0_29 = arith.constant 0 : index
    %98 = vector.load %arg5[%c8, %c0_29] : memref<144x32xf32, #tpu.memory_space<vmem>>, vector<1x32xf32>
    %99 = vector.broadcast %98 : vector<1x32xf32> to vector<32x32xf32>
    %100 = arith.addf %97, %99 : vector<32x32xf32>
    %101 = arith.addf %100, %1 : vector<32x32xf32>
    %c16 = arith.constant 16 : index
    %c0_30 = arith.constant 0 : index
    %102 = vector.load %arg5[%c16, %c0_30] : memref<144x32xf32, #tpu.memory_space<vmem>>, vector<1x32xf32>
    %c24 = arith.constant 24 : index
    %c0_31 = arith.constant 0 : index
    %103 = vector.load %arg5[%c24, %c0_31] : memref<144x32xf32, #tpu.memory_space<vmem>>, vector<1x32xf32>
    %cst_32 = arith.constant dense<0.000000e+00> : vector<32xf32>
    %104 = vector.multi_reduction <add>, %101, %cst_32 [1] : vector<32x32xf32> to vector<32xf32>
    %105 = vector.shape_cast %104 : vector<32xf32> to vector<32x1xf32>
    %cst_33 = arith.constant 3.200000e+01 : f32
    %106 = vector.broadcast %cst_33 : f32 to vector<32x1xf32>
    %107 = arith.divf %105, %106 : vector<32x1xf32>
    %108 = vector.broadcast %107 : vector<32x1xf32> to vector<32x32xf32>
    %109 = arith.subf %101, %108 : vector<32x32xf32>
    %110 = arith.mulf %109, %109 : vector<32x32xf32>
    %cst_34 = arith.constant dense<0.000000e+00> : vector<32xf32>
    %111 = vector.multi_reduction <add>, %110, %cst_34 [1] : vector<32x32xf32> to vector<32xf32>
    %112 = vector.shape_cast %111 : vector<32xf32> to vector<32x1xf32>
    %cst_35 = arith.constant 3.200000e+01 : f32
    %113 = vector.broadcast %cst_35 : f32 to vector<32x1xf32>
    %114 = arith.divf %112, %113 : vector<32x1xf32>
    %115 = vector.broadcast %107 : vector<32x1xf32> to vector<32x32xf32>
    %116 = arith.subf %101, %115 : vector<32x32xf32>
    %cst_36 = arith.constant 9.99999996E-13 : f32
    %117 = vector.broadcast %cst_36 : f32 to vector<32x1xf32>
    %118 = arith.addf %114, %117 : vector<32x1xf32>
    %119 = math.rsqrt %118 : vector<32x1xf32>
    %120 = vector.broadcast %119 : vector<32x1xf32> to vector<32x32xf32>
    %121 = arith.mulf %116, %120 : vector<32x32xf32>
    %122 = vector.broadcast %102 : vector<1x32xf32> to vector<32x32xf32>
    %123 = arith.mulf %121, %122 : vector<32x32xf32>
    %124 = vector.broadcast %103 : vector<1x32xf32> to vector<32x32xf32>
    %125 = arith.addf %123, %124 : vector<32x32xf32>
    %126 = vector.shape_cast %125 : vector<32x32xf32> to vector<2x16x32xf32>
    %127 = vector.extract_strided_slice %126 {offsets = [0, 0, 0], sizes = [2, 8, 32], strides = [1, 1, 1]} : vector<2x16x32xf32> to vector<2x8x32xf32>
    %c0_37 = arith.constant 0 : index
    %c0_38 = arith.constant 0 : index
    %c0_39 = arith.constant 0 : index
    %128 = vector.load %arg1[%c0_37, %c0_38, %c0_39] : memref<2x16x48xf32, #tpu.memory_space<vmem>>, vector<2x16x48xf32>
    %129 = vector.shape_cast %127 : vector<2x8x32xf32> to vector<16x32xf32>
    %130 = vector.shape_cast %128 : vector<2x16x48xf32> to vector<32x48xf32>
    %131 = arith.truncf %130 : vector<32x48xf32> to vector<32x48xbf16>
    %c64 = arith.constant 64 : index
    %c0_40 = arith.constant 0 : index
    %132 = vector.load %arg3[%c64, %c0_40] : memref<320x32xbf16, #tpu.memory_space<vmem>>, vector<32x32xbf16>
    %133 = arith.truncf %129 : vector<16x32xf32> to vector<16x32xbf16>
    %cst_41 = arith.constant dense<0.000000e+00> : vector<16x32xf32>
    %134 = tpu.matmul %133, %132, %cst_41 {dimension_numbers = #tpu.dot_dimension_numbers<[1], [0], [0], [1], [0, 0, 1, 1], [], []>} : vector<16x32xbf16>, vector<32x32xbf16>, vector<16x32xf32> -> vector<16x32xf32>
    %c32_42 = arith.constant 32 : index
    %c0_43 = arith.constant 0 : index
    %135 = vector.load %arg5[%c32_42, %c0_43] : memref<144x32xf32, #tpu.memory_space<vmem>>, vector<1x32xf32>
    %136 = vector.broadcast %135 : vector<1x32xf32> to vector<16x32xf32>
    %137 = arith.addf %134, %136 : vector<16x32xf32>
    %c32_44 = arith.constant 32 : index
    %c0_45 = arith.constant 0 : index
    %138 = vector.load %arg4[%c32_44, %c0_45] : memref<176x64xbf16, #tpu.memory_space<vmem>>, vector<48x64xbf16>
    %cst_46 = arith.constant dense<0.000000e+00> : vector<32x64xf32>
    %139 = tpu.matmul %131, %138, %cst_46 {dimension_numbers = #tpu.dot_dimension_numbers<[1], [0], [0], [1], [0, 0, 1, 1], [], []>} : vector<32x48xbf16>, vector<48x64xbf16>, vector<32x64xf32> -> vector<32x64xf32>
    %c8_47 = arith.constant 8 : index
    %c0_48 = arith.constant 0 : index
    %140 = vector.load %arg6[%c8_47, %c0_48] : memref<40x64xf32, #tpu.memory_space<vmem>>, vector<1x64xf32>
    %141 = vector.broadcast %140 : vector<1x64xf32> to vector<32x64xf32>
    %142 = arith.addf %139, %141 : vector<32x64xf32>
    %143 = vector.shape_cast %137 : vector<16x32xf32> to vector<2x8x32xf32>
    %144 = vector.shape_cast %142 : vector<32x64xf32> to vector<2x16x64xf32>
    %145 = vector.extract_strided_slice %143 {offsets = [0, 0, 0], sizes = [2, 8, 8], strides = [1, 1, 1]} : vector<2x8x32xf32> to vector<2x8x8xf32>
    %146 = arith.truncf %145 : vector<2x8x8xf32> to vector<2x8x8xbf16>
    %147 = vector.extract_strided_slice %144 {offsets = [0, 0, 0], sizes = [2, 16, 8], strides = [1, 1, 1]} : vector<2x16x64xf32> to vector<2x16x8xf32>
    %148 = arith.truncf %147 : vector<2x16x8xf32> to vector<2x16x8xbf16>
    %149 = vector.extract_strided_slice %144 {offsets = [0, 0, 32], sizes = [2, 16, 8], strides = [1, 1, 1]} : vector<2x16x64xf32> to vector<2x16x8xf32>
    %150 = arith.truncf %149 : vector<2x16x8xf32> to vector<2x16x8xbf16>
    "tpu.trace_start"() <{level = 10 : i32, message = "bqd,bkd->bqk"}> : () -> ()
    %cst_49 = arith.constant dense<0.000000e+00> : vector<2x8x16xf32>
    %151 = tpu.matmul %146, %148, %cst_49 {dimension_numbers = #tpu.dot_dimension_numbers<[2], [2], [1], [1], [0, 0, 0, 1, 1, 1], [0], [0]>} : vector<2x8x8xbf16>, vector<2x16x8xbf16>, vector<2x8x16xf32> -> vector<2x8x16xf32>
    "tpu.trace_stop"() : () -> ()
    %cst_50 = arith.constant dense<0xFF800000> : vector<2x8xf32>
    %152 = vector.multi_reduction <maximumf>, %151, %cst_50 [2] : vector<2x8x16xf32> to vector<2x8xf32>
    %153 = vector.shape_cast %152 : vector<2x8xf32> to vector<2x8x1xf32>
    %154 = vector.broadcast %153 : vector<2x8x1xf32> to vector<2x8x16xf32>
    %155 = arith.subf %151, %154 : vector<2x8x16xf32>
    %156 = math.exp %155 : vector<2x8x16xf32>
    %cst_51 = arith.constant dense<0.000000e+00> : vector<2x8xf32>
    %157 = vector.multi_reduction <add>, %156, %cst_51 [2] : vector<2x8x16xf32> to vector<2x8xf32>
    %158 = vector.shape_cast %157 : vector<2x8xf32> to vector<2x8x1xf32>
    %159 = tpu.reciprocal %158 {approx = true} : vector<2x8x1xf32> -> vector<2x8x1xf32>
    %160 = vector.broadcast %159 : vector<2x8x1xf32> to vector<2x8x16xf32>
    %161 = arith.mulf %156, %160 : vector<2x8x16xf32>
    %162 = arith.truncf %161 : vector<2x8x16xf32> to vector<2x8x16xbf16>
    "tpu.trace_start"() <{level = 10 : i32, message = "bqk,bkd->bqd"}> : () -> ()
    %cst_52 = arith.constant dense<0.000000e+00> : vector<2x8x8xf32>
    %163 = tpu.matmul %162, %150, %cst_52 {dimension_numbers = #tpu.dot_dimension_numbers<[2], [1], [1], [2], [0, 0, 0, 1, 1, 2], [0], [0]>} : vector<2x8x16xbf16>, vector<2x16x8xbf16>, vector<2x8x8xf32> -> vector<2x8x8xf32>
    "tpu.trace_stop"() : () -> ()
    %164 = vector.extract_strided_slice %143 {offsets = [0, 0, 8], sizes = [2, 8, 8], strides = [1, 1, 1]} : vector<2x8x32xf32> to vector<2x8x8xf32>
    %165 = arith.truncf %164 : vector<2x8x8xf32> to vector<2x8x8xbf16>
    %166 = vector.extract_strided_slice %144 {offsets = [0, 0, 8], sizes = [2, 16, 8], strides = [1, 1, 1]} : vector<2x16x64xf32> to vector<2x16x8xf32>
    %167 = arith.truncf %166 : vector<2x16x8xf32> to vector<2x16x8xbf16>
    %168 = vector.extract_strided_slice %144 {offsets = [0, 0, 40], sizes = [2, 16, 8], strides = [1, 1, 1]} : vector<2x16x64xf32> to vector<2x16x8xf32>
    %169 = arith.truncf %168 : vector<2x16x8xf32> to vector<2x16x8xbf16>
    "tpu.trace_start"() <{level = 10 : i32, message = "bqd,bkd->bqk"}> : () -> ()
    %cst_53 = arith.constant dense<0.000000e+00> : vector<2x8x16xf32>
    %170 = tpu.matmul %165, %167, %cst_53 {dimension_numbers = #tpu.dot_dimension_numbers<[2], [2], [1], [1], [0, 0, 0, 1, 1, 1], [0], [0]>} : vector<2x8x8xbf16>, vector<2x16x8xbf16>, vector<2x8x16xf32> -> vector<2x8x16xf32>
    "tpu.trace_stop"() : () -> ()
    %cst_54 = arith.constant dense<0xFF800000> : vector<2x8xf32>
    %171 = vector.multi_reduction <maximumf>, %170, %cst_54 [2] : vector<2x8x16xf32> to vector<2x8xf32>
    %172 = vector.shape_cast %171 : vector<2x8xf32> to vector<2x8x1xf32>
    %173 = vector.broadcast %172 : vector<2x8x1xf32> to vector<2x8x16xf32>
    %174 = arith.subf %170, %173 : vector<2x8x16xf32>
    %175 = math.exp %174 : vector<2x8x16xf32>
    %cst_55 = arith.constant dense<0.000000e+00> : vector<2x8xf32>
    %176 = vector.multi_reduction <add>, %175, %cst_55 [2] : vector<2x8x16xf32> to vector<2x8xf32>
    %177 = vector.shape_cast %176 : vector<2x8xf32> to vector<2x8x1xf32>
    %178 = tpu.reciprocal %177 {approx = true} : vector<2x8x1xf32> -> vector<2x8x1xf32>
    %179 = vector.broadcast %178 : vector<2x8x1xf32> to vector<2x8x16xf32>
    %180 = arith.mulf %175, %179 : vector<2x8x16xf32>
    %181 = arith.truncf %180 : vector<2x8x16xf32> to vector<2x8x16xbf16>
    "tpu.trace_start"() <{level = 10 : i32, message = "bqk,bkd->bqd"}> : () -> ()
    %cst_56 = arith.constant dense<0.000000e+00> : vector<2x8x8xf32>
    %182 = tpu.matmul %181, %169, %cst_56 {dimension_numbers = #tpu.dot_dimension_numbers<[2], [1], [1], [2], [0, 0, 0, 1, 1, 2], [0], [0]>} : vector<2x8x16xbf16>, vector<2x16x8xbf16>, vector<2x8x8xf32> -> vector<2x8x8xf32>
    "tpu.trace_stop"() : () -> ()
    %183 = vector.extract_strided_slice %143 {offsets = [0, 0, 16], sizes = [2, 8, 8], strides = [1, 1, 1]} : vector<2x8x32xf32> to vector<2x8x8xf32>
    %184 = arith.truncf %183 : vector<2x8x8xf32> to vector<2x8x8xbf16>
    %185 = vector.extract_strided_slice %144 {offsets = [0, 0, 16], sizes = [2, 16, 8], strides = [1, 1, 1]} : vector<2x16x64xf32> to vector<2x16x8xf32>
    %186 = arith.truncf %185 : vector<2x16x8xf32> to vector<2x16x8xbf16>
    %187 = vector.extract_strided_slice %144 {offsets = [0, 0, 48], sizes = [2, 16, 8], strides = [1, 1, 1]} : vector<2x16x64xf32> to vector<2x16x8xf32>
    %188 = arith.truncf %187 : vector<2x16x8xf32> to vector<2x16x8xbf16>
    "tpu.trace_start"() <{level = 10 : i32, message = "bqd,bkd->bqk"}> : () -> ()
    %cst_57 = arith.constant dense<0.000000e+00> : vector<2x8x16xf32>
    %189 = tpu.matmul %184, %186, %cst_57 {dimension_numbers = #tpu.dot_dimension_numbers<[2], [2], [1], [1], [0, 0, 0, 1, 1, 1], [0], [0]>} : vector<2x8x8xbf16>, vector<2x16x8xbf16>, vector<2x8x16xf32> -> vector<2x8x16xf32>
    "tpu.trace_stop"() : () -> ()
    %cst_58 = arith.constant dense<0xFF800000> : vector<2x8xf32>
    %190 = vector.multi_reduction <maximumf>, %189, %cst_58 [2] : vector<2x8x16xf32> to vector<2x8xf32>
    %191 = vector.shape_cast %190 : vector<2x8xf32> to vector<2x8x1xf32>
    %192 = vector.broadcast %191 : vector<2x8x1xf32> to vector<2x8x16xf32>
    %193 = arith.subf %189, %192 : vector<2x8x16xf32>
    %194 = math.exp %193 : vector<2x8x16xf32>
    %cst_59 = arith.constant dense<0.000000e+00> : vector<2x8xf32>
    %195 = vector.multi_reduction <add>, %194, %cst_59 [2] : vector<2x8x16xf32> to vector<2x8xf32>
    %196 = vector.shape_cast %195 : vector<2x8xf32> to vector<2x8x1xf32>
    %197 = tpu.reciprocal %196 {approx = true} : vector<2x8x1xf32> -> vector<2x8x1xf32>
    %198 = vector.broadcast %197 : vector<2x8x1xf32> to vector<2x8x16xf32>
    %199 = arith.mulf %194, %198 : vector<2x8x16xf32>
    %200 = arith.truncf %199 : vector<2x8x16xf32> to vector<2x8x16xbf16>
    "tpu.trace_start"() <{level = 10 : i32, message = "bqk,bkd->bqd"}> : () -> ()
    %cst_60 = arith.constant dense<0.000000e+00> : vector<2x8x8xf32>
    %201 = tpu.matmul %200, %188, %cst_60 {dimension_numbers = #tpu.dot_dimension_numbers<[2], [1], [1], [2], [0, 0, 0, 1, 1, 2], [0], [0]>} : vector<2x8x16xbf16>, vector<2x16x8xbf16>, vector<2x8x8xf32> -> vector<2x8x8xf32>
    "tpu.trace_stop"() : () -> ()
    %202 = vector.extract_strided_slice %143 {offsets = [0, 0, 24], sizes = [2, 8, 8], strides = [1, 1, 1]} : vector<2x8x32xf32> to vector<2x8x8xf32>
    %203 = arith.truncf %202 : vector<2x8x8xf32> to vector<2x8x8xbf16>
    %204 = vector.extract_strided_slice %144 {offsets = [0, 0, 24], sizes = [2, 16, 8], strides = [1, 1, 1]} : vector<2x16x64xf32> to vector<2x16x8xf32>
    %205 = arith.truncf %204 : vector<2x16x8xf32> to vector<2x16x8xbf16>
    %206 = vector.extract_strided_slice %144 {offsets = [0, 0, 56], sizes = [2, 16, 8], strides = [1, 1, 1]} : vector<2x16x64xf32> to vector<2x16x8xf32>
    %207 = arith.truncf %206 : vector<2x16x8xf32> to vector<2x16x8xbf16>
    "tpu.trace_start"() <{level = 10 : i32, message = "bqd,bkd->bqk"}> : () -> ()
    %cst_61 = arith.constant dense<0.000000e+00> : vector<2x8x16xf32>
    %208 = tpu.matmul %203, %205, %cst_61 {dimension_numbers = #tpu.dot_dimension_numbers<[2], [2], [1], [1], [0, 0, 0, 1, 1, 1], [0], [0]>} : vector<2x8x8xbf16>, vector<2x16x8xbf16>, vector<2x8x16xf32> -> vector<2x8x16xf32>
    "tpu.trace_stop"() : () -> ()
    %cst_62 = arith.constant dense<0xFF800000> : vector<2x8xf32>
    %209 = vector.multi_reduction <maximumf>, %208, %cst_62 [2] : vector<2x8x16xf32> to vector<2x8xf32>
    %210 = vector.shape_cast %209 : vector<2x8xf32> to vector<2x8x1xf32>
    %211 = vector.broadcast %210 : vector<2x8x1xf32> to vector<2x8x16xf32>
    %212 = arith.subf %208, %211 : vector<2x8x16xf32>
    %213 = math.exp %212 : vector<2x8x16xf32>
    %cst_63 = arith.constant dense<0.000000e+00> : vector<2x8xf32>
    %214 = vector.multi_reduction <add>, %213, %cst_63 [2] : vector<2x8x16xf32> to vector<2x8xf32>
    %215 = vector.shape_cast %214 : vector<2x8xf32> to vector<2x8x1xf32>
    %216 = tpu.reciprocal %215 {approx = true} : vector<2x8x1xf32> -> vector<2x8x1xf32>
    %217 = vector.broadcast %216 : vector<2x8x1xf32> to vector<2x8x16xf32>
    %218 = arith.mulf %213, %217 : vector<2x8x16xf32>
    %219 = arith.truncf %218 : vector<2x8x16xf32> to vector<2x8x16xbf16>
    "tpu.trace_start"() <{level = 10 : i32, message = "bqk,bkd->bqd"}> : () -> ()
    %cst_64 = arith.constant dense<0.000000e+00> : vector<2x8x8xf32>
    %220 = tpu.matmul %219, %207, %cst_64 {dimension_numbers = #tpu.dot_dimension_numbers<[2], [1], [1], [2], [0, 0, 0, 1, 1, 2], [0], [0]>} : vector<2x8x16xbf16>, vector<2x16x8xbf16>, vector<2x8x8xf32> -> vector<2x8x8xf32>
    "tpu.trace_stop"() : () -> ()
    %221 = tpu.concatenate %163, %182, %201, %220 in 2 : vector<2x8x8xf32>, vector<2x8x8xf32>, vector<2x8x8xf32>, vector<2x8x8xf32> -> vector<2x8x32xf32>
    %222 = vector.shape_cast %221 : vector<2x8x32xf32> to vector<16x32xf32>
    %c96 = arith.constant 96 : index
    %c0_65 = arith.constant 0 : index
    %223 = vector.load %arg3[%c96, %c0_65] : memref<320x32xbf16, #tpu.memory_space<vmem>>, vector<32x32xbf16>
    %224 = arith.truncf %222 : vector<16x32xf32> to vector<16x32xbf16>
    %cst_66 = arith.constant dense<0.000000e+00> : vector<16x32xf32>
    %225 = tpu.matmul %224, %223, %cst_66 {dimension_numbers = #tpu.dot_dimension_numbers<[1], [0], [0], [1], [0, 0, 1, 1], [], []>} : vector<16x32xbf16>, vector<32x32xbf16>, vector<16x32xf32> -> vector<16x32xf32>
    %c40 = arith.constant 40 : index
    %c0_67 = arith.constant 0 : index
    %226 = vector.load %arg5[%c40, %c0_67] : memref<144x32xf32, #tpu.memory_space<vmem>>, vector<1x32xf32>
    %227 = vector.broadcast %226 : vector<1x32xf32> to vector<16x32xf32>
    %228 = arith.addf %225, %227 : vector<16x32xf32>
    %229 = arith.addf %228, %129 : vector<16x32xf32>
    %c48 = arith.constant 48 : index
    %c0_68 = arith.constant 0 : index
    %230 = vector.load %arg5[%c48, %c0_68] : memref<144x32xf32, #tpu.memory_space<vmem>>, vector<1x32xf32>
    %c56 = arith.constant 56 : index
    %c0_69 = arith.constant 0 : index
    %231 = vector.load %arg5[%c56, %c0_69] : memref<144x32xf32, #tpu.memory_space<vmem>>, vector<1x32xf32>
    %cst_70 = arith.constant dense<0.000000e+00> : vector<16xf32>
    %232 = vector.multi_reduction <add>, %229, %cst_70 [1] : vector<16x32xf32> to vector<16xf32>
    %233 = vector.shape_cast %232 : vector<16xf32> to vector<16x1xf32>
    %cst_71 = arith.constant 3.200000e+01 : f32
    %234 = vector.broadcast %cst_71 : f32 to vector<16x1xf32>
    %235 = arith.divf %233, %234 : vector<16x1xf32>
    %236 = vector.broadcast %235 : vector<16x1xf32> to vector<16x32xf32>
    %237 = arith.subf %229, %236 : vector<16x32xf32>
    %238 = arith.mulf %237, %237 : vector<16x32xf32>
    %cst_72 = arith.constant dense<0.000000e+00> : vector<16xf32>
    %239 = vector.multi_reduction <add>, %238, %cst_72 [1] : vector<16x32xf32> to vector<16xf32>
    %240 = vector.shape_cast %239 : vector<16xf32> to vector<16x1xf32>
    %cst_73 = arith.constant 3.200000e+01 : f32
    %241 = vector.broadcast %cst_73 : f32 to vector<16x1xf32>
    %242 = arith.divf %240, %241 : vector<16x1xf32>
    %243 = vector.broadcast %235 : vector<16x1xf32> to vector<16x32xf32>
    %244 = arith.subf %229, %243 : vector<16x32xf32>
    %cst_74 = arith.constant 9.99999996E-13 : f32
    %245 = vector.broadcast %cst_74 : f32 to vector<16x1xf32>
    %246 = arith.addf %242, %245 : vector<16x1xf32>
    %247 = math.rsqrt %246 : vector<16x1xf32>
    %248 = vector.broadcast %247 : vector<16x1xf32> to vector<16x32xf32>
    %249 = arith.mulf %244, %248 : vector<16x32xf32>
    %250 = vector.broadcast %230 : vector<1x32xf32> to vector<16x32xf32>
    %251 = arith.mulf %249, %250 : vector<16x32xf32>
    %252 = vector.broadcast %231 : vector<1x32xf32> to vector<16x32xf32>
    %253 = arith.addf %251, %252 : vector<16x32xf32>
    %254 = vector.shape_cast %253 : vector<16x32xf32> to vector<2x8x32xf32>
    %c0_75 = arith.constant 0 : index
    %c0_76 = arith.constant 0 : index
    %c0_77 = arith.constant 0 : index
    %255 = vector.load %arg2[%c0_75, %c0_76, %c0_77] : memref<2x8x24xf32, #tpu.memory_space<vmem>>, vector<2x8x24xf32>
    %256 = vector.shape_cast %254 : vector<2x8x32xf32> to vector<16x32xf32>
    %257 = vector.shape_cast %255 : vector<2x8x24xf32> to vector<16x24xf32>
    %258 = arith.truncf %257 : vector<16x24xf32> to vector<16x24xbf16>
    %c128 = arith.constant 128 : index
    %c0_78 = arith.constant 0 : index
    %259 = vector.load %arg3[%c128, %c0_78] : memref<320x32xbf16, #tpu.memory_space<vmem>>, vector<32x32xbf16>
    %260 = arith.truncf %256 : vector<16x32xf32> to vector<16x32xbf16>
    %cst_79 = arith.constant dense<0.000000e+00> : vector<16x32xf32>
    %261 = tpu.matmul %260, %259, %cst_79 {dimension_numbers = #tpu.dot_dimension_numbers<[1], [0], [0], [1], [0, 0, 1, 1], [], []>} : vector<16x32xbf16>, vector<32x32xbf16>, vector<16x32xf32> -> vector<16x32xf32>
    %c64_80 = arith.constant 64 : index
    %c0_81 = arith.constant 0 : index
    %262 = vector.load %arg5[%c64_80, %c0_81] : memref<144x32xf32, #tpu.memory_space<vmem>>, vector<1x32xf32>
    %263 = vector.broadcast %262 : vector<1x32xf32> to vector<16x32xf32>
    %264 = arith.addf %261, %263 : vector<16x32xf32>
    %c80 = arith.constant 80 : index
    %c0_82 = arith.constant 0 : index
    %265 = vector.load %arg4[%c80, %c0_82] : memref<176x64xbf16, #tpu.memory_space<vmem>>, vector<24x64xbf16>
    %cst_83 = arith.constant dense<0.000000e+00> : vector<16x64xf32>
    %266 = tpu.matmul %258, %265, %cst_83 {dimension_numbers = #tpu.dot_dimension_numbers<[1], [0], [0], [1], [0, 0, 1, 1], [], []>} : vector<16x24xbf16>, vector<24x64xbf16>, vector<16x64xf32> -> vector<16x64xf32>
    %c16_84 = arith.constant 16 : index
    %c0_85 = arith.constant 0 : index
    %267 = vector.load %arg6[%c16_84, %c0_85] : memref<40x64xf32, #tpu.memory_space<vmem>>, vector<1x64xf32>
    %268 = vector.broadcast %267 : vector<1x64xf32> to vector<16x64xf32>
    %269 = arith.addf %266, %268 : vector<16x64xf32>
    %270 = vector.shape_cast %264 : vector<16x32xf32> to vector<2x8x32xf32>
    %271 = vector.shape_cast %269 : vector<16x64xf32> to vector<2x8x64xf32>
    %272 = vector.extract_strided_slice %270 {offsets = [0, 0, 0], sizes = [2, 8, 8], strides = [1, 1, 1]} : vector<2x8x32xf32> to vector<2x8x8xf32>
    %273 = arith.truncf %272 : vector<2x8x8xf32> to vector<2x8x8xbf16>
    %274 = vector.extract_strided_slice %271 {offsets = [0, 0, 0], sizes = [2, 8, 8], strides = [1, 1, 1]} : vector<2x8x64xf32> to vector<2x8x8xf32>
    %275 = arith.truncf %274 : vector<2x8x8xf32> to vector<2x8x8xbf16>
    %276 = vector.extract_strided_slice %271 {offsets = [0, 0, 32], sizes = [2, 8, 8], strides = [1, 1, 1]} : vector<2x8x64xf32> to vector<2x8x8xf32>
    %277 = arith.truncf %276 : vector<2x8x8xf32> to vector<2x8x8xbf16>
    "tpu.trace_start"() <{level = 10 : i32, message = "bqd,bkd->bqk"}> : () -> ()
    %cst_86 = arith.constant dense<0.000000e+00> : vector<2x8x8xf32>
    %278 = tpu.matmul %273, %275, %cst_86 {dimension_numbers = #tpu.dot_dimension_numbers<[2], [2], [1], [1], [0, 0, 0, 1, 1, 1], [0], [0]>} : vector<2x8x8xbf16>, vector<2x8x8xbf16>, vector<2x8x8xf32> -> vector<2x8x8xf32>
    "tpu.trace_stop"() : () -> ()
    %cst_87 = arith.constant dense<0xFF800000> : vector<2x8xf32>
    %279 = vector.multi_reduction <maximumf>, %278, %cst_87 [2] : vector<2x8x8xf32> to vector<2x8xf32>
    %280 = vector.shape_cast %279 : vector<2x8xf32> to vector<2x8x1xf32>
    %281 = vector.broadcast %280 : vector<2x8x1xf32> to vector<2x8x8xf32>
    %282 = arith.subf %278, %281 : vector<2x8x8xf32>
    %283 = math.exp %282 : vector<2x8x8xf32>
    %cst_88 = arith.constant dense<0.000000e+00> : vector<2x8xf32>
    %284 = vector.multi_reduction <add>, %283, %cst_88 [2] : vector<2x8x8xf32> to vector<2x8xf32>
    %285 = vector.shape_cast %284 : vector<2x8xf32> to vector<2x8x1xf32>
    %286 = tpu.reciprocal %285 {approx = true} : vector<2x8x1xf32> -> vector<2x8x1xf32>
    %287 = vector.broadcast %286 : vector<2x8x1xf32> to vector<2x8x8xf32>
    %288 = arith.mulf %283, %287 : vector<2x8x8xf32>
    %289 = arith.truncf %288 : vector<2x8x8xf32> to vector<2x8x8xbf16>
    "tpu.trace_start"() <{level = 10 : i32, message = "bqk,bkd->bqd"}> : () -> ()
    %cst_89 = arith.constant dense<0.000000e+00> : vector<2x8x8xf32>
    %290 = tpu.matmul %289, %277, %cst_89 {dimension_numbers = #tpu.dot_dimension_numbers<[2], [1], [1], [2], [0, 0, 0, 1, 1, 2], [0], [0]>} : vector<2x8x8xbf16>, vector<2x8x8xbf16>, vector<2x8x8xf32> -> vector<2x8x8xf32>
    "tpu.trace_stop"() : () -> ()
    %291 = vector.extract_strided_slice %270 {offsets = [0, 0, 8], sizes = [2, 8, 8], strides = [1, 1, 1]} : vector<2x8x32xf32> to vector<2x8x8xf32>
    %292 = arith.truncf %291 : vector<2x8x8xf32> to vector<2x8x8xbf16>
    %293 = vector.extract_strided_slice %271 {offsets = [0, 0, 8], sizes = [2, 8, 8], strides = [1, 1, 1]} : vector<2x8x64xf32> to vector<2x8x8xf32>
    %294 = arith.truncf %293 : vector<2x8x8xf32> to vector<2x8x8xbf16>
    %295 = vector.extract_strided_slice %271 {offsets = [0, 0, 40], sizes = [2, 8, 8], strides = [1, 1, 1]} : vector<2x8x64xf32> to vector<2x8x8xf32>
    %296 = arith.truncf %295 : vector<2x8x8xf32> to vector<2x8x8xbf16>
    "tpu.trace_start"() <{level = 10 : i32, message = "bqd,bkd->bqk"}> : () -> ()
    %cst_90 = arith.constant dense<0.000000e+00> : vector<2x8x8xf32>
    %297 = tpu.matmul %292, %294, %cst_90 {dimension_numbers = #tpu.dot_dimension_numbers<[2], [2], [1], [1], [0, 0, 0, 1, 1, 1], [0], [0]>} : vector<2x8x8xbf16>, vector<2x8x8xbf16>, vector<2x8x8xf32> -> vector<2x8x8xf32>
    "tpu.trace_stop"() : () -> ()
    %cst_91 = arith.constant dense<0xFF800000> : vector<2x8xf32>
    %298 = vector.multi_reduction <maximumf>, %297, %cst_91 [2] : vector<2x8x8xf32> to vector<2x8xf32>
    %299 = vector.shape_cast %298 : vector<2x8xf32> to vector<2x8x1xf32>
    %300 = vector.broadcast %299 : vector<2x8x1xf32> to vector<2x8x8xf32>
    %301 = arith.subf %297, %300 : vector<2x8x8xf32>
    %302 = math.exp %301 : vector<2x8x8xf32>
    %cst_92 = arith.constant dense<0.000000e+00> : vector<2x8xf32>
    %303 = vector.multi_reduction <add>, %302, %cst_92 [2] : vector<2x8x8xf32> to vector<2x8xf32>
    %304 = vector.shape_cast %303 : vector<2x8xf32> to vector<2x8x1xf32>
    %305 = tpu.reciprocal %304 {approx = true} : vector<2x8x1xf32> -> vector<2x8x1xf32>
    %306 = vector.broadcast %305 : vector<2x8x1xf32> to vector<2x8x8xf32>
    %307 = arith.mulf %302, %306 : vector<2x8x8xf32>
    %308 = arith.truncf %307 : vector<2x8x8xf32> to vector<2x8x8xbf16>
    "tpu.trace_start"() <{level = 10 : i32, message = "bqk,bkd->bqd"}> : () -> ()
    %cst_93 = arith.constant dense<0.000000e+00> : vector<2x8x8xf32>
    %309 = tpu.matmul %308, %296, %cst_93 {dimension_numbers = #tpu.dot_dimension_numbers<[2], [1], [1], [2], [0, 0, 0, 1, 1, 2], [0], [0]>} : vector<2x8x8xbf16>, vector<2x8x8xbf16>, vector<2x8x8xf32> -> vector<2x8x8xf32>
    "tpu.trace_stop"() : () -> ()
    %310 = vector.extract_strided_slice %270 {offsets = [0, 0, 16], sizes = [2, 8, 8], strides = [1, 1, 1]} : vector<2x8x32xf32> to vector<2x8x8xf32>
    %311 = arith.truncf %310 : vector<2x8x8xf32> to vector<2x8x8xbf16>
    %312 = vector.extract_strided_slice %271 {offsets = [0, 0, 16], sizes = [2, 8, 8], strides = [1, 1, 1]} : vector<2x8x64xf32> to vector<2x8x8xf32>
    %313 = arith.truncf %312 : vector<2x8x8xf32> to vector<2x8x8xbf16>
    %314 = vector.extract_strided_slice %271 {offsets = [0, 0, 48], sizes = [2, 8, 8], strides = [1, 1, 1]} : vector<2x8x64xf32> to vector<2x8x8xf32>
    %315 = arith.truncf %314 : vector<2x8x8xf32> to vector<2x8x8xbf16>
    "tpu.trace_start"() <{level = 10 : i32, message = "bqd,bkd->bqk"}> : () -> ()
    %cst_94 = arith.constant dense<0.000000e+00> : vector<2x8x8xf32>
    %316 = tpu.matmul %311, %313, %cst_94 {dimension_numbers = #tpu.dot_dimension_numbers<[2], [2], [1], [1], [0, 0, 0, 1, 1, 1], [0], [0]>} : vector<2x8x8xbf16>, vector<2x8x8xbf16>, vector<2x8x8xf32> -> vector<2x8x8xf32>
    "tpu.trace_stop"() : () -> ()
    %cst_95 = arith.constant dense<0xFF800000> : vector<2x8xf32>
    %317 = vector.multi_reduction <maximumf>, %316, %cst_95 [2] : vector<2x8x8xf32> to vector<2x8xf32>
    %318 = vector.shape_cast %317 : vector<2x8xf32> to vector<2x8x1xf32>
    %319 = vector.broadcast %318 : vector<2x8x1xf32> to vector<2x8x8xf32>
    %320 = arith.subf %316, %319 : vector<2x8x8xf32>
    %321 = math.exp %320 : vector<2x8x8xf32>
    %cst_96 = arith.constant dense<0.000000e+00> : vector<2x8xf32>
    %322 = vector.multi_reduction <add>, %321, %cst_96 [2] : vector<2x8x8xf32> to vector<2x8xf32>
    %323 = vector.shape_cast %322 : vector<2x8xf32> to vector<2x8x1xf32>
    %324 = tpu.reciprocal %323 {approx = true} : vector<2x8x1xf32> -> vector<2x8x1xf32>
    %325 = vector.broadcast %324 : vector<2x8x1xf32> to vector<2x8x8xf32>
    %326 = arith.mulf %321, %325 : vector<2x8x8xf32>
    %327 = arith.truncf %326 : vector<2x8x8xf32> to vector<2x8x8xbf16>
    "tpu.trace_start"() <{level = 10 : i32, message = "bqk,bkd->bqd"}> : () -> ()
    %cst_97 = arith.constant dense<0.000000e+00> : vector<2x8x8xf32>
    %328 = tpu.matmul %327, %315, %cst_97 {dimension_numbers = #tpu.dot_dimension_numbers<[2], [1], [1], [2], [0, 0, 0, 1, 1, 2], [0], [0]>} : vector<2x8x8xbf16>, vector<2x8x8xbf16>, vector<2x8x8xf32> -> vector<2x8x8xf32>
    "tpu.trace_stop"() : () -> ()
    %329 = vector.extract_strided_slice %270 {offsets = [0, 0, 24], sizes = [2, 8, 8], strides = [1, 1, 1]} : vector<2x8x32xf32> to vector<2x8x8xf32>
    %330 = arith.truncf %329 : vector<2x8x8xf32> to vector<2x8x8xbf16>
    %331 = vector.extract_strided_slice %271 {offsets = [0, 0, 24], sizes = [2, 8, 8], strides = [1, 1, 1]} : vector<2x8x64xf32> to vector<2x8x8xf32>
    %332 = arith.truncf %331 : vector<2x8x8xf32> to vector<2x8x8xbf16>
    %333 = vector.extract_strided_slice %271 {offsets = [0, 0, 56], sizes = [2, 8, 8], strides = [1, 1, 1]} : vector<2x8x64xf32> to vector<2x8x8xf32>
    %334 = arith.truncf %333 : vector<2x8x8xf32> to vector<2x8x8xbf16>
    "tpu.trace_start"() <{level = 10 : i32, message = "bqd,bkd->bqk"}> : () -> ()
    %cst_98 = arith.constant dense<0.000000e+00> : vector<2x8x8xf32>
    %335 = tpu.matmul %330, %332, %cst_98 {dimension_numbers = #tpu.dot_dimension_numbers<[2], [2], [1], [1], [0, 0, 0, 1, 1, 1], [0], [0]>} : vector<2x8x8xbf16>, vector<2x8x8xbf16>, vector<2x8x8xf32> -> vector<2x8x8xf32>
    "tpu.trace_stop"() : () -> ()
    %cst_99 = arith.constant dense<0xFF800000> : vector<2x8xf32>
    %336 = vector.multi_reduction <maximumf>, %335, %cst_99 [2] : vector<2x8x8xf32> to vector<2x8xf32>
    %337 = vector.shape_cast %336 : vector<2x8xf32> to vector<2x8x1xf32>
    %338 = vector.broadcast %337 : vector<2x8x1xf32> to vector<2x8x8xf32>
    %339 = arith.subf %335, %338 : vector<2x8x8xf32>
    %340 = math.exp %339 : vector<2x8x8xf32>
    %cst_100 = arith.constant dense<0.000000e+00> : vector<2x8xf32>
    %341 = vector.multi_reduction <add>, %340, %cst_100 [2] : vector<2x8x8xf32> to vector<2x8xf32>
    %342 = vector.shape_cast %341 : vector<2x8xf32> to vector<2x8x1xf32>
    %343 = tpu.reciprocal %342 {approx = true} : vector<2x8x1xf32> -> vector<2x8x1xf32>
    %344 = vector.broadcast %343 : vector<2x8x1xf32> to vector<2x8x8xf32>
    %345 = arith.mulf %340, %344 : vector<2x8x8xf32>
    %346 = arith.truncf %345 : vector<2x8x8xf32> to vector<2x8x8xbf16>
    "tpu.trace_start"() <{level = 10 : i32, message = "bqk,bkd->bqd"}> : () -> ()
    %cst_101 = arith.constant dense<0.000000e+00> : vector<2x8x8xf32>
    %347 = tpu.matmul %346, %334, %cst_101 {dimension_numbers = #tpu.dot_dimension_numbers<[2], [1], [1], [2], [0, 0, 0, 1, 1, 2], [0], [0]>} : vector<2x8x8xbf16>, vector<2x8x8xbf16>, vector<2x8x8xf32> -> vector<2x8x8xf32>
    "tpu.trace_stop"() : () -> ()
    %348 = tpu.concatenate %290, %309, %328, %347 in 2 : vector<2x8x8xf32>, vector<2x8x8xf32>, vector<2x8x8xf32>, vector<2x8x8xf32> -> vector<2x8x32xf32>
    %349 = vector.shape_cast %348 : vector<2x8x32xf32> to vector<16x32xf32>
    %c160 = arith.constant 160 : index
    %c0_102 = arith.constant 0 : index
    %350 = vector.load %arg3[%c160, %c0_102] : memref<320x32xbf16, #tpu.memory_space<vmem>>, vector<32x32xbf16>
    %351 = arith.truncf %349 : vector<16x32xf32> to vector<16x32xbf16>
    %cst_103 = arith.constant dense<0.000000e+00> : vector<16x32xf32>
    %352 = tpu.matmul %351, %350, %cst_103 {dimension_numbers = #tpu.dot_dimension_numbers<[1], [0], [0], [1], [0, 0, 1, 1], [], []>} : vector<16x32xbf16>, vector<32x32xbf16>, vector<16x32xf32> -> vector<16x32xf32>
    %c72 = arith.constant 72 : index
    %c0_104 = arith.constant 0 : index
    %353 = vector.load %arg5[%c72, %c0_104] : memref<144x32xf32, #tpu.memory_space<vmem>>, vector<1x32xf32>
    %354 = vector.broadcast %353 : vector<1x32xf32> to vector<16x32xf32>
    %355 = arith.addf %352, %354 : vector<16x32xf32>
    %356 = arith.addf %355, %256 : vector<16x32xf32>
    %c80_105 = arith.constant 80 : index
    %c0_106 = arith.constant 0 : index
    %357 = vector.load %arg5[%c80_105, %c0_106] : memref<144x32xf32, #tpu.memory_space<vmem>>, vector<1x32xf32>
    %c88 = arith.constant 88 : index
    %c0_107 = arith.constant 0 : index
    %358 = vector.load %arg5[%c88, %c0_107] : memref<144x32xf32, #tpu.memory_space<vmem>>, vector<1x32xf32>
    %cst_108 = arith.constant dense<0.000000e+00> : vector<16xf32>
    %359 = vector.multi_reduction <add>, %356, %cst_108 [1] : vector<16x32xf32> to vector<16xf32>
    %360 = vector.shape_cast %359 : vector<16xf32> to vector<16x1xf32>
    %cst_109 = arith.constant 3.200000e+01 : f32
    %361 = vector.broadcast %cst_109 : f32 to vector<16x1xf32>
    %362 = arith.divf %360, %361 : vector<16x1xf32>
    %363 = vector.broadcast %362 : vector<16x1xf32> to vector<16x32xf32>
    %364 = arith.subf %356, %363 : vector<16x32xf32>
    %365 = arith.mulf %364, %364 : vector<16x32xf32>
    %cst_110 = arith.constant dense<0.000000e+00> : vector<16xf32>
    %366 = vector.multi_reduction <add>, %365, %cst_110 [1] : vector<16x32xf32> to vector<16xf32>
    %367 = vector.shape_cast %366 : vector<16xf32> to vector<16x1xf32>
    %cst_111 = arith.constant 3.200000e+01 : f32
    %368 = vector.broadcast %cst_111 : f32 to vector<16x1xf32>
    %369 = arith.divf %367, %368 : vector<16x1xf32>
    %370 = vector.broadcast %362 : vector<16x1xf32> to vector<16x32xf32>
    %371 = arith.subf %356, %370 : vector<16x32xf32>
    %cst_112 = arith.constant 9.99999996E-13 : f32
    %372 = vector.broadcast %cst_112 : f32 to vector<16x1xf32>
    %373 = arith.addf %369, %372 : vector<16x1xf32>
    %374 = math.rsqrt %373 : vector<16x1xf32>
    %375 = vector.broadcast %374 : vector<16x1xf32> to vector<16x32xf32>
    %376 = arith.mulf %371, %375 : vector<16x32xf32>
    %377 = vector.broadcast %357 : vector<1x32xf32> to vector<16x32xf32>
    %378 = arith.mulf %376, %377 : vector<16x32xf32>
    %379 = vector.broadcast %358 : vector<1x32xf32> to vector<16x32xf32>
    %380 = arith.addf %378, %379 : vector<16x32xf32>
    %381 = vector.shape_cast %380 : vector<16x32xf32> to vector<2x8x32xf32>
    %382 = vector.shape_cast %381 : vector<2x8x32xf32> to vector<16x32xf32>
    %c112 = arith.constant 112 : index
    %c0_113 = arith.constant 0 : index
    %383 = vector.load %arg4[%c112, %c0_113] : memref<176x64xbf16, #tpu.memory_space<vmem>>, vector<32x64xbf16>
    %384 = arith.truncf %382 : vector<16x32xf32> to vector<16x32xbf16>
    %cst_114 = arith.constant dense<0.000000e+00> : vector<16x64xf32>
    %385 = tpu.matmul %384, %383, %cst_114 {dimension_numbers = #tpu.dot_dimension_numbers<[1], [0], [0], [1], [0, 0, 1, 1], [], []>} : vector<16x32xbf16>, vector<32x64xbf16>, vector<16x64xf32> -> vector<16x64xf32>
    %c24_115 = arith.constant 24 : index
    %c0_116 = arith.constant 0 : index
    %386 = vector.load %arg6[%c24_115, %c0_116] : memref<40x64xf32, #tpu.memory_space<vmem>>, vector<1x64xf32>
    %387 = vector.broadcast %386 : vector<1x64xf32> to vector<16x64xf32>
    %388 = arith.addf %385, %387 : vector<16x64xf32>
    %cst_117 = arith.constant 5.000000e-01 : f32
    %389 = vector.broadcast %cst_117 : f32 to vector<16x64xf32>
    %390 = arith.mulf %389, %388 : vector<16x64xf32>
    %cst_118 = arith.constant 0.707106769 : f32
    %391 = vector.broadcast %cst_118 : f32 to vector<16x64xf32>
    %392 = arith.mulf %388, %391 : vector<16x64xf32>
    %cst_119 = arith.constant 0.000000e+00 : f32
    %393 = vector.broadcast %cst_119 : f32 to vector<16x64xf32>
    %394 = arith.cmpf oge, %392, %393 : vector<16x64xf32>
    %cst_120 = arith.constant 1.000000e+00 : f32
    %cst_121 = arith.constant -1.000000e+00 : f32
    %395 = vector.broadcast %cst_120 : f32 to vector<16x64xf32>
    %396 = vector.broadcast %cst_121 : f32 to vector<16x64xf32>
    %397 = arith.select %394, %395, %396 : vector<16x64xi1>, vector<16x64xf32>
    %398 = math.absf %392 : vector<16x64xf32>
    %cst_122 = arith.constant 0.327591091 : f32
    %399 = vector.broadcast %cst_122 : f32 to vector<16x64xf32>
    %400 = arith.mulf %399, %398 : vector<16x64xf32>
    %cst_123 = arith.constant 1.000000e+00 : f32
    %401 = vector.broadcast %cst_123 : f32 to vector<16x64xf32>
    %402 = arith.addf %401, %400 : vector<16x64xf32>
    %cst_124 = arith.constant 1.000000e+00 : f32
    %403 = vector.broadcast %cst_124 : f32 to vector<16x64xf32>
    %404 = arith.divf %403, %402 : vector<16x64xf32>
    %cst_125 = arith.constant 1.06140542 : f32
    %405 = vector.broadcast %cst_125 : f32 to vector<16x64xf32>
    %406 = arith.mulf %405, %404 : vector<16x64xf32>
    %cst_126 = arith.constant -1.45315206 : f32
    %407 = vector.broadcast %cst_126 : f32 to vector<16x64xf32>
    %408 = arith.addf %406, %407 : vector<16x64xf32>
    %409 = arith.mulf %408, %404 : vector<16x64xf32>
    %cst_127 = arith.constant 1.42141378 : f32
    %410 = vector.broadcast %cst_127 : f32 to vector<16x64xf32>
    %411 = arith.addf %409, %410 : vector<16x64xf32>
    %412 = arith.mulf %411, %404 : vector<16x64xf32>
    %cst_128 = arith.constant -0.284496725 : f32
    %413 = vector.broadcast %cst_128 : f32 to vector<16x64xf32>
    %414 = arith.addf %412, %413 : vector<16x64xf32>
    %415 = arith.mulf %414, %404 : vector<16x64xf32>
    %cst_129 = arith.constant 0.254829586 : f32
    %416 = vector.broadcast %cst_129 : f32 to vector<16x64xf32>
    %417 = arith.addf %415, %416 : vector<16x64xf32>
    %418 = arith.mulf %417, %404 : vector<16x64xf32>
    %cst_130 = arith.constant 0.000000e+00 : f32
    %419 = vector.broadcast %cst_130 : f32 to vector<16x64xf32>
    %420 = arith.subf %419, %398 : vector<16x64xf32>
    %421 = arith.mulf %420, %398 : vector<16x64xf32>
    %422 = math.exp %421 : vector<16x64xf32>
    %423 = arith.mulf %418, %422 : vector<16x64xf32>
    %cst_131 = arith.constant 1.000000e+00 : f32
    %424 = vector.broadcast %cst_131 : f32 to vector<16x64xf32>
    %425 = arith.subf %424, %423 : vector<16x64xf32>
    %426 = arith.mulf %397, %425 : vector<16x64xf32>
    %cst_132 = arith.constant 1.000000e+00 : f32
    %427 = vector.broadcast %cst_132 : f32 to vector<16x64xf32>
    %428 = arith.addf %427, %426 : vector<16x64xf32>
    %429 = arith.mulf %390, %428 : vector<16x64xf32>
    %c192 = arith.constant 192 : index
    %c0_133 = arith.constant 0 : index
    %430 = vector.load %arg3[%c192, %c0_133] : memref<320x32xbf16, #tpu.memory_space<vmem>>, vector<64x32xbf16>
    %431 = arith.truncf %429 : vector<16x64xf32> to vector<16x64xbf16>
    %cst_134 = arith.constant dense<0.000000e+00> : vector<16x32xf32>
    %432 = tpu.matmul %431, %430, %cst_134 {dimension_numbers = #tpu.dot_dimension_numbers<[1], [0], [0], [1], [0, 0, 1, 1], [], []>} : vector<16x64xbf16>, vector<64x32xbf16>, vector<16x32xf32> -> vector<16x32xf32>
    %c96_135 = arith.constant 96 : index
    %c0_136 = arith.constant 0 : index
    %433 = vector.load %arg5[%c96_135, %c0_136] : memref<144x32xf32, #tpu.memory_space<vmem>>, vector<1x32xf32>
    %434 = vector.broadcast %433 : vector<1x32xf32> to vector<16x32xf32>
    %435 = arith.addf %432, %434 : vector<16x32xf32>
    %436 = arith.addf %435, %382 : vector<16x32xf32>
    %c104 = arith.constant 104 : index
    %c0_137 = arith.constant 0 : index
    %437 = vector.load %arg5[%c104, %c0_137] : memref<144x32xf32, #tpu.memory_space<vmem>>, vector<1x32xf32>
    %c112_138 = arith.constant 112 : index
    %c0_139 = arith.constant 0 : index
    %438 = vector.load %arg5[%c112_138, %c0_139] : memref<144x32xf32, #tpu.memory_space<vmem>>, vector<1x32xf32>
    %cst_140 = arith.constant dense<0.000000e+00> : vector<16xf32>
    %439 = vector.multi_reduction <add>, %436, %cst_140 [1] : vector<16x32xf32> to vector<16xf32>
    %440 = vector.shape_cast %439 : vector<16xf32> to vector<16x1xf32>
    %cst_141 = arith.constant 3.200000e+01 : f32
    %441 = vector.broadcast %cst_141 : f32 to vector<16x1xf32>
    %442 = arith.divf %440, %441 : vector<16x1xf32>
    %443 = vector.broadcast %442 : vector<16x1xf32> to vector<16x32xf32>
    %444 = arith.subf %436, %443 : vector<16x32xf32>
    %445 = arith.mulf %444, %444 : vector<16x32xf32>
    %cst_142 = arith.constant dense<0.000000e+00> : vector<16xf32>
    %446 = vector.multi_reduction <add>, %445, %cst_142 [1] : vector<16x32xf32> to vector<16xf32>
    %447 = vector.shape_cast %446 : vector<16xf32> to vector<16x1xf32>
    %cst_143 = arith.constant 3.200000e+01 : f32
    %448 = vector.broadcast %cst_143 : f32 to vector<16x1xf32>
    %449 = arith.divf %447, %448 : vector<16x1xf32>
    %450 = vector.broadcast %442 : vector<16x1xf32> to vector<16x32xf32>
    %451 = arith.subf %436, %450 : vector<16x32xf32>
    %cst_144 = arith.constant 9.99999996E-13 : f32
    %452 = vector.broadcast %cst_144 : f32 to vector<16x1xf32>
    %453 = arith.addf %449, %452 : vector<16x1xf32>
    %454 = math.rsqrt %453 : vector<16x1xf32>
    %455 = vector.broadcast %454 : vector<16x1xf32> to vector<16x32xf32>
    %456 = arith.mulf %451, %455 : vector<16x32xf32>
    %457 = vector.broadcast %437 : vector<1x32xf32> to vector<16x32xf32>
    %458 = arith.mulf %456, %457 : vector<16x32xf32>
    %459 = vector.broadcast %438 : vector<1x32xf32> to vector<16x32xf32>
    %460 = arith.addf %458, %459 : vector<16x32xf32>
    %461 = vector.shape_cast %460 : vector<16x32xf32> to vector<2x8x32xf32>
    %462 = vector.extract_strided_slice %126 {offsets = [0, 8, 0], sizes = [2, 8, 32], strides = [1, 1, 1]} : vector<2x16x32xf32> to vector<2x8x32xf32>
    %463 = vector.shape_cast %462 : vector<2x8x32xf32> to vector<16x32xf32>
    %c144 = arith.constant 144 : index
    %c0_145 = arith.constant 0 : index
    %464 = vector.load %arg4[%c144, %c0_145] : memref<176x64xbf16, #tpu.memory_space<vmem>>, vector<32x64xbf16>
    %465 = arith.truncf %463 : vector<16x32xf32> to vector<16x32xbf16>
    %cst_146 = arith.constant dense<0.000000e+00> : vector<16x64xf32>
    %466 = tpu.matmul %465, %464, %cst_146 {dimension_numbers = #tpu.dot_dimension_numbers<[1], [0], [0], [1], [0, 0, 1, 1], [], []>} : vector<16x32xbf16>, vector<32x64xbf16>, vector<16x64xf32> -> vector<16x64xf32>
    %c32_147 = arith.constant 32 : index
    %c0_148 = arith.constant 0 : index
    %467 = vector.load %arg6[%c32_147, %c0_148] : memref<40x64xf32, #tpu.memory_space<vmem>>, vector<1x64xf32>
    %468 = vector.broadcast %467 : vector<1x64xf32> to vector<16x64xf32>
    %469 = arith.addf %466, %468 : vector<16x64xf32>
    %cst_149 = arith.constant 5.000000e-01 : f32
    %470 = vector.broadcast %cst_149 : f32 to vector<16x64xf32>
    %471 = arith.mulf %470, %469 : vector<16x64xf32>
    %cst_150 = arith.constant 0.707106769 : f32
    %472 = vector.broadcast %cst_150 : f32 to vector<16x64xf32>
    %473 = arith.mulf %469, %472 : vector<16x64xf32>
    %cst_151 = arith.constant 0.000000e+00 : f32
    %474 = vector.broadcast %cst_151 : f32 to vector<16x64xf32>
    %475 = arith.cmpf oge, %473, %474 : vector<16x64xf32>
    %cst_152 = arith.constant 1.000000e+00 : f32
    %cst_153 = arith.constant -1.000000e+00 : f32
    %476 = vector.broadcast %cst_152 : f32 to vector<16x64xf32>
    %477 = vector.broadcast %cst_153 : f32 to vector<16x64xf32>
    %478 = arith.select %475, %476, %477 : vector<16x64xi1>, vector<16x64xf32>
    %479 = math.absf %473 : vector<16x64xf32>
    %cst_154 = arith.constant 0.327591091 : f32
    %480 = vector.broadcast %cst_154 : f32 to vector<16x64xf32>
    %481 = arith.mulf %480, %479 : vector<16x64xf32>
    %cst_155 = arith.constant 1.000000e+00 : f32
    %482 = vector.broadcast %cst_155 : f32 to vector<16x64xf32>
    %483 = arith.addf %482, %481 : vector<16x64xf32>
    %cst_156 = arith.constant 1.000000e+00 : f32
    %484 = vector.broadcast %cst_156 : f32 to vector<16x64xf32>
    %485 = arith.divf %484, %483 : vector<16x64xf32>
    %cst_157 = arith.constant 1.06140542 : f32
    %486 = vector.broadcast %cst_157 : f32 to vector<16x64xf32>
    %487 = arith.mulf %486, %485 : vector<16x64xf32>
    %cst_158 = arith.constant -1.45315206 : f32
    %488 = vector.broadcast %cst_158 : f32 to vector<16x64xf32>
    %489 = arith.addf %487, %488 : vector<16x64xf32>
    %490 = arith.mulf %489, %485 : vector<16x64xf32>
    %cst_159 = arith.constant 1.42141378 : f32
    %491 = vector.broadcast %cst_159 : f32 to vector<16x64xf32>
    %492 = arith.addf %490, %491 : vector<16x64xf32>
    %493 = arith.mulf %492, %485 : vector<16x64xf32>
    %cst_160 = arith.constant -0.284496725 : f32
    %494 = vector.broadcast %cst_160 : f32 to vector<16x64xf32>
    %495 = arith.addf %493, %494 : vector<16x64xf32>
    %496 = arith.mulf %495, %485 : vector<16x64xf32>
    %cst_161 = arith.constant 0.254829586 : f32
    %497 = vector.broadcast %cst_161 : f32 to vector<16x64xf32>
    %498 = arith.addf %496, %497 : vector<16x64xf32>
    %499 = arith.mulf %498, %485 : vector<16x64xf32>
    %cst_162 = arith.constant 0.000000e+00 : f32
    %500 = vector.broadcast %cst_162 : f32 to vector<16x64xf32>
    %501 = arith.subf %500, %479 : vector<16x64xf32>
    %502 = arith.mulf %501, %479 : vector<16x64xf32>
    %503 = math.exp %502 : vector<16x64xf32>
    %504 = arith.mulf %499, %503 : vector<16x64xf32>
    %cst_163 = arith.constant 1.000000e+00 : f32
    %505 = vector.broadcast %cst_163 : f32 to vector<16x64xf32>
    %506 = arith.subf %505, %504 : vector<16x64xf32>
    %507 = arith.mulf %478, %506 : vector<16x64xf32>
    %cst_164 = arith.constant 1.000000e+00 : f32
    %508 = vector.broadcast %cst_164 : f32 to vector<16x64xf32>
    %509 = arith.addf %508, %507 : vector<16x64xf32>
    %510 = arith.mulf %471, %509 : vector<16x64xf32>
    %c256 = arith.constant 256 : index
    %c0_165 = arith.constant 0 : index
    %511 = vector.load %arg3[%c256, %c0_165] : memref<320x32xbf16, #tpu.memory_space<vmem>>, vector<64x32xbf16>
    %512 = arith.truncf %510 : vector<16x64xf32> to vector<16x64xbf16>
    %cst_166 = arith.constant dense<0.000000e+00> : vector<16x32xf32>
    %513 = tpu.matmul %512, %511, %cst_166 {dimension_numbers = #tpu.dot_dimension_numbers<[1], [0], [0], [1], [0, 0, 1, 1], [], []>} : vector<16x64xbf16>, vector<64x32xbf16>, vector<16x32xf32> -> vector<16x32xf32>
    %c120 = arith.constant 120 : index
    %c0_167 = arith.constant 0 : index
    %514 = vector.load %arg5[%c120, %c0_167] : memref<144x32xf32, #tpu.memory_space<vmem>>, vector<1x32xf32>
    %515 = vector.broadcast %514 : vector<1x32xf32> to vector<16x32xf32>
    %516 = arith.addf %513, %515 : vector<16x32xf32>
    %517 = arith.addf %516, %463 : vector<16x32xf32>
    %c128_168 = arith.constant 128 : index
    %c0_169 = arith.constant 0 : index
    %518 = vector.load %arg5[%c128_168, %c0_169] : memref<144x32xf32, #tpu.memory_space<vmem>>, vector<1x32xf32>
    %c136 = arith.constant 136 : index
    %c0_170 = arith.constant 0 : index
    %519 = vector.load %arg5[%c136, %c0_170] : memref<144x32xf32, #tpu.memory_space<vmem>>, vector<1x32xf32>
    %cst_171 = arith.constant dense<0.000000e+00> : vector<16xf32>
    %520 = vector.multi_reduction <add>, %517, %cst_171 [1] : vector<16x32xf32> to vector<16xf32>
    %521 = vector.shape_cast %520 : vector<16xf32> to vector<16x1xf32>
    %cst_172 = arith.constant 3.200000e+01 : f32
    %522 = vector.broadcast %cst_172 : f32 to vector<16x1xf32>
    %523 = arith.divf %521, %522 : vector<16x1xf32>
    %524 = vector.broadcast %523 : vector<16x1xf32> to vector<16x32xf32>
    %525 = arith.subf %517, %524 : vector<16x32xf32>
    %526 = arith.mulf %525, %525 : vector<16x32xf32>
    %cst_173 = arith.constant dense<0.000000e+00> : vector<16xf32>
    %527 = vector.multi_reduction <add>, %526, %cst_173 [1] : vector<16x32xf32> to vector<16xf32>
    %528 = vector.shape_cast %527 : vector<16xf32> to vector<16x1xf32>
    %cst_174 = arith.constant 3.200000e+01 : f32
    %529 = vector.broadcast %cst_174 : f32 to vector<16x1xf32>
    %530 = arith.divf %528, %529 : vector<16x1xf32>
    %531 = vector.broadcast %523 : vector<16x1xf32> to vector<16x32xf32>
    %532 = arith.subf %517, %531 : vector<16x32xf32>
    %cst_175 = arith.constant 9.99999996E-13 : f32
    %533 = vector.broadcast %cst_175 : f32 to vector<16x1xf32>
    %534 = arith.addf %530, %533 : vector<16x1xf32>
    %535 = math.rsqrt %534 : vector<16x1xf32>
    %536 = vector.broadcast %535 : vector<16x1xf32> to vector<16x32xf32>
    %537 = arith.mulf %532, %536 : vector<16x32xf32>
    %538 = vector.broadcast %518 : vector<1x32xf32> to vector<16x32xf32>
    %539 = arith.mulf %537, %538 : vector<16x32xf32>
    %540 = vector.broadcast %519 : vector<1x32xf32> to vector<16x32xf32>
    %541 = arith.addf %539, %540 : vector<16x32xf32>
    %542 = vector.shape_cast %541 : vector<16x32xf32> to vector<2x8x32xf32>
    %543 = tpu.concatenate %461, %542 in 1 : vector<2x8x32xf32>, vector<2x8x32xf32> -> vector<2x16x32xf32>
    %c0_176 = arith.constant 0 : index
    %c0_177 = arith.constant 0 : index
    %c0_178 = arith.constant 0 : index
    %544 = vector.load %arg7[%c0_176, %c0_177, %c0_178] : memref<2x16x32xf32, #tpu.memory_space<vmem>>, vector<2x16x32xf32>
    tpu.vector_store %arg7[%c0_176, %c0_177, %c0_178], %543 {strides = array<i32>} : memref<2x16x32xf32, #tpu.memory_space<vmem>>, vector<2x16x32xf32>,
    return
  }
}

</mosaic_0001>

<llo_original>
// kernel: tpu_custom_call.1
$region0: #{tpu_custom_call.1}
  #allocation0 [shape = 'u32[]', space=smem, size = 0x4, offset = 0x4, fixed_abs, tag = 'smem constant byte address 0x4 - core index']
  #allocation1 [shape = 'u32[144,128]{1,0:T(1,128)}', space=vmem, size = 0x12000, scoped, tag = 'internal scratch']
  %s0 = inlined_call_operand.vmem [shape: f32[2,16,32], index: 0, kind: input, shape index: {}]
  %s1 = inlined_call_operand.vmem [shape: f32[2,16,48], index: 1, kind: input, shape index: {}]
  %s2 = inlined_call_operand.vmem [shape: f32[2,8,24], index: 2, kind: input, shape index: {}]
  %s3 = inlined_call_operand.vmem [shape: bf16[320,32], index: 3, kind: input, shape index: {}]
  %s4 = inlined_call_operand.vmem [shape: bf16[176,64], index: 4, kind: input, shape index: {}]
  %s5 = inlined_call_operand.vmem [shape: f32[144,32], index: 5, kind: input, shape index: {}]
  %s6 = inlined_call_operand.vmem [shape: f32[40,64], index: 6, kind: input, shape index: {}]
  %s7 = inlined_call_operand.hbm [shape: f32[2,16,32], index: 7, kind: output, shape index: {}]
  %s8 = sld [smem:[#allocation0]]
  $region38: #{tpu_custom_call.1} parent=0
    _
  %s10 = ssub.s32 1, %s8
  %s11 = scalar_select 0, %s10, %s8
  $region1: #{tpu_custom_call.1} parent=0
    #allocation2 [shape = 'u8[16384]{0}', space=vmem, size = 0x4000, scoped, tag = 'output window, operand 0, single buffered']
    #allocation3 [shape = 's32[1]{0}', space=sflag, size = 0x4, scoped, tag = 'scoped memory for tpu_custom_call.1']
    %12 = vsyncpa [#allocation3], 0
    // Predicated region
    $region2: #{tpu_custom_call.1} parent=1 // pred_check
      _
    $region3: #{tpu_custom_call.1} parent=1 // pred_check_branch
      %14 = sbr.rel (0) target = $region5
    $region4: #{tpu_custom_call.1} parent=1 // pred_region
      _
    $region5: #{tpu_custom_call.1} parent=1 // pred_fallthru
      _
    // Predicated region
    $region6: #{tpu_custom_call.1} parent=1 // pred_check
      _
    $region7: #{tpu_custom_call.1} parent=1 // pred_check_branch
      %16 = sbr.rel (0) target = $region9
    $region8: #{tpu_custom_call.1} parent=1 // pred_region
      _
    $region9: #{tpu_custom_call.1} parent=1 // pred_fallthru
      _
    // Predicated region
    $region10: #{tpu_custom_call.1} parent=1 // pred_check
      _
    $region11: #{tpu_custom_call.1} parent=1 // pred_check_branch
      %18 = sbr.rel (0) target = $region13
    $region12: #{tpu_custom_call.1} parent=1 // pred_region
      _
    $region13: #{tpu_custom_call.1} parent=1 // pred_fallthru
      _
    // Predicated region
    $region14: #{tpu_custom_call.1} parent=1 // pred_check
      _
    $region15: #{tpu_custom_call.1} parent=1 // pred_check_branch
      %20 = sbr.rel (0) target = $region17
    $region16: #{tpu_custom_call.1} parent=1 // pred_region
      _
    $region17: #{tpu_custom_call.1} parent=1 // pred_fallthru
      _
    // Predicated region
    $region18: #{tpu_custom_call.1} parent=1 // pred_check
      _
    $region19: #{tpu_custom_call.1} parent=1 // pred_check_branch
      %22 = sbr.rel (0) target = $region21
    $region20: #{tpu_custom_call.1} parent=1 // pred_region
      _
    $region21: #{tpu_custom_call.1} parent=1 // pred_fallthru
      _
    // Predicated region
    $region22: #{tpu_custom_call.1} parent=1 // pred_check
      _
    $region23: #{tpu_custom_call.1} parent=1 // pred_check_branch
      %24 = sbr.rel (0) target = $region25
    $region24: #{tpu_custom_call.1} parent=1 // pred_region
      _
    $region25: #{tpu_custom_call.1} parent=1 // pred_fallthru
      _
    // Predicated region
    $region26: #{tpu_custom_call.1} parent=1 // pred_check
      _
    $region27: #{tpu_custom_call.1} parent=1 // pred_check_branch
      %26 = sbr.rel (0) target = $region29
    $region28: #{tpu_custom_call.1} parent=1 // pred_region
      _
    $region29: #{tpu_custom_call.1} parent=1 // pred_fallthru
      _
    %v28 = vld [vmem:[%s0] sm:$0xff]
    %v29 = vld [vmem:[%s0 + $0x8] sm:$0xff]
    %v30 = vld [vmem:[%s0 + $0x10] sm:$0xff]
    %v31 = vld [vmem:[%s0 + $0x18] sm:$0xff]
    %v32 = vpack.c.bf16 %v29, %v28
    %v33 = vpack.c.bf16 %v31, %v30
    %v34 = vld [vmem:[%s3] sm:$0xf]
    %v35 = vld [vmem:[%s3 + $0x4] sm:$0xf]
    %v36 = vld [vmem:[%s3 + $0x8] sm:$0xf]
    %v37 = vld [vmem:[%s3 + $0xc] sm:$0xf]
    %v38 = vld [vmem:[%s5] sm:$0x1]
    %v39 = vlaneseq
    %v40 = vshrl.u32 %v39, 7
    %v41 = vsub.s32 0, %v40
    %v42 = vrot.slane %v38, %v41
    %v47 = vunpack.c.l.b16 %v34
    %v48 = vunpack.c.l.b16 %v35
    %v49 = vunpack.c.l.b16 %v36
    %v50 = vunpack.c.l.b16 %v37
    %v51 = vpack.c.b16 %v48, %v47
    %v52 = vpack.c.b16 %v50, %v49
    %vm55 = vcmask 261120
    %v57 = vsel %vm55, %v32, 0
    %v60 = vsel %vm55, %v33, 0
    %62 = vmatprep.subr.bf16.mxu0 0
    %63 = vmatpush1.bf16.msra.mxu0 0
    %64 = vmatprep.subr.bf16.mxu0 0
    %65 = vmatpush1.bf16.msra.mxu0 0
    %66 = vmatprep.subr.bf16.mxu0 0
    %67 = vmatpush1.bf16.msra.mxu0 0
    %68 = vmatprep.subr.bf16.mxu0 0
    %69 = vmatpush1.bf16.msra.mxu0 0
    %70 = vmatprep.subr.bf16.mxu0 0
    %71 = vmatpush1.bf16.msra.mxu0 0
    %72 = vmatprep.subr.bf16.mxu0 0
    %73 = vmatpush1.bf16.msra.mxu0 0
    %74 = vmatprep.subr.bf16.mxu0 0
    %75 = vmatpush1.bf16.msra.mxu0 %v52
    %76 = vmatprep.subr.bf16.mxu0 0
    %77 = vmatpush1.bf16.msra.mxu0 %v51
    %78 = vmatprep.subr.bf16.mxu0 0
    %79 = vmatpush2.bf16.msra.mxu0 0
    %80 = vmatprep.subr.bf16.mxu0 0
    %81 = vmatpush2.bf16.msra.mxu0 0
    %82 = vmatprep.subr.bf16.mxu0 0
    %83 = vmatpush2.bf16.msra.mxu0 0
    %84 = vmatprep.subr.bf16.mxu0 0
    %85 = vmatpush2.bf16.msra.mxu0 0
    %86 = vmatprep.subr.bf16.mxu0 0
    %87 = vmatpush2.bf16.msra.mxu0 0
    %88 = vmatprep.subr.bf16.mxu0 0
    %89 = vmatpush2.bf16.msra.mxu0 0
    %90 = vmatprep.subr.bf16.mxu0 0
    %91 = vmatpush2.bf16.msra.mxu0 0
    %92 = vmatprep.subr.bf16.mxu0 0
    %93 = vmatpush2.bf16.msra.mxu0 0
    %94 = vmatprep.mubr.bf16.mxu0 0
    %95 = vmatmul.mubr.bf16.gmra.mxu0 %v57
    %v96 = vpop.f32.mrf.mxu0
    %v97 = vadd.f32 %v42, %v96
    %v98 = vpop.f32.mrf.mxu0
    %v99 = vpop.f32.mrf.mxu0
    %v100 = vadd.f32 %v42, %v99
    %v101 = vpop.f32.mrf.mxu0
    %102 = vmatprep.mubr.bf16.mxu0 0
    %103 = vmatmul.mubr.bf16.gmra.mxu0 %v60
    %v104 = vpop.f32.mrf.mxu0
    %v105 = vadd.f32 %v42, %v104
    %v106 = vpop.f32.mrf.mxu0
    %v107 = vpop.f32.mrf.mxu0
    %v108 = vadd.f32 %v42, %v107
    %v109 = vpop.f32.mrf.mxu0
    %110 = vdwg.mxu0
    %v111 = vld [vmem:[%s4] sm:$0xf]
    %v112 = vld [vmem:[%s4 + $0x4] sm:$0xf]
    %v113 = vld [vmem:[%s4 + $0x8] sm:$0xf]
    %v114 = vld [vmem:[%s4 + $0xc] sm:$0xf]
    %v115 = vld [vmem:[%s6] sm:$0x1]
    %v116 = vlaneseq
    %v117 = vshrl.u32 %v116, 7
    %v118 = vsub.s32 0, %v117
    %v119 = vrot.slane %v115, %v118
    %v124 = vunpack.c.l.b16 %v111
    %v125 = vunpack.c.l.b16 %v112
    %v126 = vunpack.c.l.b16 %v113
    %v127 = vunpack.c.l.b16 %v114
    %v128 = vpack.c.b16 %v125, %v124
    %v129 = vpack.c.b16 %v127, %v126
    %132 = vmatprep.subr.bf16.mxu0 0
    %133 = vmatpush1.bf16.msra.mxu0 0
    %134 = vmatprep.subr.bf16.mxu0 0
    %135 = vmatpush1.bf16.msra.mxu0 0
    %136 = vmatprep.subr.bf16.mxu0 0
    %137 = vmatpush1.bf16.msra.mxu0 0
    %138 = vmatprep.subr.bf16.mxu0 0
    %139 = vmatpush1.bf16.msra.mxu0 0
    %140 = vmatprep.subr.bf16.mxu0 0
    %141 = vmatpush1.bf16.msra.mxu0 0
    %142 = vmatprep.subr.bf16.mxu0 0
    %143 = vmatpush1.bf16.msra.mxu0 0
    %144 = vmatprep.subr.bf16.mxu0 0
    %145 = vmatpush1.bf16.msra.mxu0 %v129
    %146 = vmatprep.subr.bf16.mxu0 0
    %147 = vmatpush1.bf16.msra.mxu0 %v128
    %148 = vmatprep.subr.bf16.mxu0 0
    %149 = vmatpush2.bf16.msra.mxu0 0
    %150 = vmatprep.subr.bf16.mxu0 0
    %151 = vmatpush2.bf16.msra.mxu0 0
    %152 = vmatprep.subr.bf16.mxu0 0
    %153 = vmatpush2.bf16.msra.mxu0 0
    %154 = vmatprep.subr.bf16.mxu0 0
    %155 = vmatpush2.bf16.msra.mxu0 0
    %156 = vmatprep.subr.bf16.mxu0 0
    %157 = vmatpush2.bf16.msra.mxu0 0
    %158 = vmatprep.subr.bf16.mxu0 0
    %159 = vmatpush2.bf16.msra.mxu0 0
    %160 = vmatprep.subr.bf16.mxu0 0
    %161 = vmatpush2.bf16.msra.mxu0 0
    %162 = vmatprep.subr.bf16.mxu0 0
    %163 = vmatpush2.bf16.msra.mxu0 0
    %164 = vmatprep.mubr.bf16.mxu0 0
    %165 = vmatmul.mubr.bf16.gmra.mxu0 %v57
    %v166 = vpop.f32.mrf.mxu0
    %v167 = vadd.f32 %v119, %v166
    %v168 = vpop.f32.mrf.mxu0
    %v169 = vpop.f32.mrf.mxu0
    %v170 = vadd.f32 %v119, %v169
    %v171 = vpop.f32.mrf.mxu0
    %172 = vmatprep.mubr.bf16.mxu0 0
    %173 = vmatmul.mubr.bf16.gmra.mxu0 %v60
    %v174 = vpop.f32.mrf.mxu0
    %v175 = vadd.f32 %v119, %v174
    %v176 = vpop.f32.mrf.mxu0
    %v177 = vpop.f32.mrf.mxu0
    %v178 = vadd.f32 %v119, %v177
    %v179 = vpop.f32.mrf.mxu0
    %180 = vdwg.mxu0
    %v181 = vpack.c.bf16 %v100, %v97
    %v182 = vpack.c.bf16 %v108, %v105
    %v183 = vpack.c.bf16 %v170, %v167
    %v184 = vpack.c.bf16 %v178, %v175
    %vm185 = vcmask 64512
    %v187 = vsel %vm185, %v181, 0
    %v190 = vsel %vm185, %v183, 0
    %192 = vmatprep.subr.bf16.mxu0 0
    %193 = vmatpush1.bf16.xpose.msra.mxu0 0
    %194 = vmatprep.subr.bf16.mxu0 0
    %195 = vmatpush1.bf16.xpose.msra.mxu0 0
    %196 = vmatprep.subr.bf16.mxu0 0
    %197 = vmatpush1.bf16.xpose.msra.mxu0 0
    %198 = vmatprep.subr.bf16.mxu0 0
    %199 = vmatpush1.bf16.xpose.msra.mxu0 0
    %200 = vmatprep.subr.bf16.mxu0 0
    %201 = vmatpush1.bf16.xpose.msra.mxu0 0
    %202 = vmatprep.subr.bf16.mxu0 0
    %203 = vmatpush1.bf16.xpose.msra.mxu0 0
    %204 = vmatprep.subr.bf16.mxu0 0
    %205 = vmatpush1.bf16.xpose.msra.mxu0 0
    %206 = vmatprep.subr.bf16.mxu0 0
    %207 = vmatpush1.bf16.xpose.msra.mxu0 %v190
    %208 = vmatprep.subr.bf16.mxu0 0
    %209 = vmatpush2.bf16.xpose.msra.mxu0 0
    %210 = vmatprep.subr.bf16.mxu0 0
    %211 = vmatpush2.bf16.xpose.msra.mxu0 0
    %212 = vmatprep.subr.bf16.mxu0 0
    %213 = vmatpush2.bf16.xpose.msra.mxu0 0
    %214 = vmatprep.subr.bf16.mxu0 0
    %215 = vmatpush2.bf16.xpose.msra.mxu0 0
    %216 = vmatprep.subr.bf16.mxu0 0
    %217 = vmatpush2.bf16.xpose.msra.mxu0 0
    %218 = vmatprep.subr.bf16.mxu0 0
    %219 = vmatpush2.bf16.xpose.msra.mxu0 0
    %220 = vmatprep.subr.bf16.mxu0 0
    %221 = vmatpush2.bf16.xpose.msra.mxu0 0
    %222 = vmatprep.subr.bf16.mxu0 0
    %223 = vmatpush2.bf16.xpose.msra.mxu0 0
    %224 = vmatprep.mubr.bf16.mxu0 0
    %225 = vmatmul.mubr.bf16.gmra.mxu0 %v187
    %v226 = vpop.f32.mrf.mxu0
    %v227 = vadd.f32 0.0, %v226
    %v228 = vpop.f32.mrf.mxu0
    %v229 = vpop.f32.mrf.mxu0
    %v230 = vadd.f32 0.0, %v229
    %v231 = vpop.f32.mrf.mxu0
    %232 = vdwg.mxu0
    %v234 = vsel %vm185, %v182, 0
    %v237 = vsel %vm185, %v184, 0
    %239 = vmatprep.subr.bf16.mxu0 0
    %240 = vmatpush1.bf16.xpose.msra.mxu0 0
    %241 = vmatprep.subr.bf16.mxu0 0
    %242 = vmatpush1.bf16.xpose.msra.mxu0 0
    %243 = vmatprep.subr.bf16.mxu0 0
    %244 = vmatpush1.bf16.xpose.msra.mxu0 0
    %245 = vmatprep.subr.bf16.mxu0 0
    %246 = vmatpush1.bf16.xpose.msra.mxu0 0
    %247 = vmatprep.subr.bf16.mxu0 0
    %248 = vmatpush1.bf16.xpose.msra.mxu0 0
    %249 = vmatprep.subr.bf16.mxu0 0
    %250 = vmatpush1.bf16.xpose.msra.mxu0 0
    %251 = vmatprep.subr.bf16.mxu0 0
    %252 = vmatpush1.bf16.xpose.msra.mxu0 0
    %253 = vmatprep.subr.bf16.mxu0 0
    %254 = vmatpush1.bf16.xpose.msra.mxu0 %v237
    %255 = vmatprep.subr.bf16.mxu0 0
    %256 = vmatpush2.bf16.xpose.msra.mxu0 0
    %257 = vmatprep.subr.bf16.mxu0 0
    %258 = vmatpush2.bf16.xpose.msra.mxu0 0
    %259 = vmatprep.subr.bf16.mxu0 0
    %260 = vmatpush2.bf16.xpose.msra.mxu0 0
    %261 = vmatprep.subr.bf16.mxu0 0
    %262 = vmatpush2.bf16.xpose.msra.mxu0 0
    %263 = vmatprep.subr.bf16.mxu0 0
    %264 = vmatpush2.bf16.xpose.msra.mxu0 0
    %265 = vmatprep.subr.bf16.mxu0 0
    %266 = vmatpush2.bf16.xpose.msra.mxu0 0
    %267 = vmatprep.subr.bf16.mxu0 0
    %268 = vmatpush2.bf16.xpose.msra.mxu0 0
    %269 = vmatprep.subr.bf16.mxu0 0
    %270 = vmatpush2.bf16.xpose.msra.mxu0 0
    %271 = vmatprep.mubr.bf16.mxu0 0
    %272 = vmatmul.mubr.bf16.gmra.mxu0 %v234
    %v273 = vpop.f32.mrf.mxu0
    %v274 = vadd.f32 0.0, %v273
    %v275 = vpop.f32.mrf.mxu0
    %v276 = vpop.f32.mrf.mxu0
    %v277 = vadd.f32 0.0, %v276
    %v278 = vpop.f32.mrf.mxu0
    %279 = vdwg.mxu0
    %vm280 = vcmask 130048
    %v281 = vsel %vm280, %v227, -inf
    %282 = vmax.xlane.f32.xlu0 %v281
    %v283 = vpop.xlane.xlu0 %282
    %v284 = vsel %vm280, %v230, -inf
    %285 = vmax.xlane.f32.xlu0 %v284
    %v286 = vpop.xlane.xlu0 %285
    %v287 = vsel %vm280, %v274, -inf
    %288 = vmax.xlane.f32.xlu0 %v287
    %v289 = vpop.xlane.xlu0 %288
    %v290 = vsel %vm280, %v277, -inf
    %291 = vmax.xlane.f32.xlu0 %v290
    %v292 = vpop.xlane.xlu0 %291
    %v293 = vsub.f32 %v227, %v283
    %v294 = vsub.f32 %v230, %v286
    %v295 = vsub.f32 %v274, %v289
    %v296 = vsub.f32 %v277, %v292
    %v297 = vmul.f32 %v293, 1.442695
    %v298 = vpow.pop %v297
    %v299 = vmul.f32 %v294, 1.442695
    %v300 = vpow.pop %v299
    %v301 = vmul.f32 %v295, 1.442695
    %v302 = vpow.pop %v301
    %v303 = vmul.f32 %v296, 1.442695
    %v304 = vpow.pop %v303
    %v305 = vsel %vm280, %v298, 0.0
    %306 = vadd.xlane.f32.xlu0 %v305
    %v307 = vpop.xlane.xlu0 %306
    %v308 = vsel %vm280, %v300, 0.0
    %309 = vadd.xlane.f32.xlu0 %v308
    %v310 = vpop.xlane.xlu0 %309
    %v311 = vsel %vm280, %v302, 0.0
    %312 = vadd.xlane.f32.xlu0 %v311
    %v313 = vpop.xlane.xlu0 %312
    %v314 = vsel %vm280, %v304, 0.0
    %315 = vadd.xlane.f32.xlu0 %v314
    %v316 = vpop.xlane.xlu0 %315
    %v317 = vrcp.pop %v307
    %v318 = vrcp.pop %v310
    %v319 = vrcp.pop %v313
    %v320 = vrcp.pop %v316
    %v321 = vmul.f32 %v298, %v317
    %v322 = vmul.f32 %v300, %v318
    %v323 = vmul.f32 %v302, %v319
    %v324 = vmul.f32 %v304, %v320
    %v325 = vpack.c.bf16 %v322, %v321
    %v326 = vpack.c.bf16 %v324, %v323
    %328 = vrot.lane.b32.xlu0 %v183, 96
    %v329 = vpop.permute.xlu0 %328
    %v332 = vsel %vm280, %v325, 0
    %334 = vmatprep.subr.bf16.mxu0 0
    %335 = vmatpush1.bf16.msra.mxu0 0
    %336 = vmatprep.subr.bf16.mxu0 0
    %337 = vmatpush1.bf16.msra.mxu0 0
    %338 = vmatprep.subr.bf16.mxu0 0
    %339 = vmatpush1.bf16.msra.mxu0 0
    %340 = vmatprep.subr.bf16.mxu0 0
    %341 = vmatpush1.bf16.msra.mxu0 0
    %342 = vmatprep.subr.bf16.mxu0 0
    %343 = vmatpush1.bf16.msra.mxu0 0
    %344 = vmatprep.subr.bf16.mxu0 0
    %345 = vmatpush1.bf16.msra.mxu0 0
    %346 = vmatprep.subr.bf16.mxu0 0
    %347 = vmatpush1.bf16.msra.mxu0 0
    %348 = vmatprep.subr.bf16.mxu0 0
    %349 = vmatpush1.bf16.msra.mxu0 %v329
    %350 = vmatprep.subr.bf16.mxu0 0
    %351 = vmatpush2.bf16.msra.mxu0 0
    %352 = vmatprep.subr.bf16.mxu0 0
    %353 = vmatpush2.bf16.msra.mxu0 0
    %354 = vmatprep.subr.bf16.mxu0 0
    %355 = vmatpush2.bf16.msra.mxu0 0
    %356 = vmatprep.subr.bf16.mxu0 0
    %357 = vmatpush2.bf16.msra.mxu0 0
    %358 = vmatprep.subr.bf16.mxu0 0
    %359 = vmatpush2.bf16.msra.mxu0 0
    %360 = vmatprep.subr.bf16.mxu0 0
    %361 = vmatpush2.bf16.msra.mxu0 0
    %362 = vmatprep.subr.bf16.mxu0 0
    %363 = vmatpush2.bf16.msra.mxu0 0
    %364 = vmatprep.subr.bf16.mxu0 0
    %365 = vmatpush2.bf16.msra.mxu0 0
    %366 = vmatprep.mubr.bf16.mxu0 0
    %367 = vmatmul.mubr.bf16.gmra.mxu0 %v332
    %v368 = vpop.f32.mrf.mxu0
    %v369 = vadd.f32 0.0, %v368
    %v370 = vpop.f32.mrf.mxu0
    %v371 = vpop.f32.mrf.mxu0
    %v372 = vadd.f32 0.0, %v371
    %v373 = vpop.f32.mrf.mxu0
    %374 = vdwg.mxu0
    %376 = vrot.lane.b32.xlu0 %v184, 96
    %v377 = vpop.permute.xlu0 %376
    %v380 = vsel %vm280, %v326, 0
    %382 = vmatprep.subr.bf16.mxu0 0
    %383 = vmatpush1.bf16.msra.mxu0 0
    %384 = vmatprep.subr.bf16.mxu0 0
    %385 = vmatpush1.bf16.msra.mxu0 0
    %386 = vmatprep.subr.bf16.mxu0 0
    %387 = vmatpush1.bf16.msra.mxu0 0
    %388 = vmatprep.subr.bf16.mxu0 0
    %389 = vmatpush1.bf16.msra.mxu0 0
    %390 = vmatprep.subr.bf16.mxu0 0
    %391 = vmatpush1.bf16.msra.mxu0 0
    %392 = vmatprep.subr.bf16.mxu0 0
    %393 = vmatpush1.bf16.msra.mxu0 0
    %394 = vmatprep.subr.bf16.mxu0 0
    %395 = vmatpush1.bf16.msra.mxu0 0
    %396 = vmatprep.subr.bf16.mxu0 0
    %397 = vmatpush1.bf16.msra.mxu0 %v377
    %398 = vmatprep.subr.bf16.mxu0 0
    %399 = vmatpush2.bf16.msra.mxu0 0
    %400 = vmatprep.subr.bf16.mxu0 0
    %401 = vmatpush2.bf16.msra.mxu0 0
    %402 = vmatprep.subr.bf16.mxu0 0
    %403 = vmatpush2.bf16.msra.mxu0 0
    %404 = vmatprep.subr.bf16.mxu0 0
    %405 = vmatpush2.bf16.msra.mxu0 0
    %406 = vmatprep.subr.bf16.mxu0 0
    %407 = vmatpush2.bf16.msra.mxu0 0
    %408 = vmatprep.subr.bf16.mxu0 0
    %409 = vmatpush2.bf16.msra.mxu0 0
    %410 = vmatprep.subr.bf16.mxu0 0
    %411 = vmatpush2.bf16.msra.mxu0 0
    %412 = vmatprep.subr.bf16.mxu0 0
    %413 = vmatpush2.bf16.msra.mxu0 0
    %414 = vmatprep.mubr.bf16.mxu0 0
    %415 = vmatmul.mubr.bf16.gmra.mxu0 %v380
    %v416 = vpop.f32.mrf.mxu0
    %v417 = vadd.f32 0.0, %v416
    %v418 = vpop.f32.mrf.mxu0
    %v419 = vpop.f32.mrf.mxu0
    %v420 = vadd.f32 0.0, %v419
    %v421 = vpop.f32.mrf.mxu0
    %422 = vdwg.mxu0
    %424 = vrot.lane.b32.xlu0 %v181, 120
    %v425 = vpop.permute.xlu0 %424
    %426 = vrot.lane.b32.xlu0 %v183, 120
    %v427 = vpop.permute.xlu0 %426
    %v429 = vsel %vm185, %v425, 0
    %v432 = vsel %vm185, %v427, 0
    %434 = vmatprep.subr.bf16.mxu0 0
    %435 = vmatpush1.bf16.xpose.msra.mxu0 0
    %436 = vmatprep.subr.bf16.mxu0 0
    %437 = vmatpush1.bf16.xpose.msra.mxu0 0
    %438 = vmatprep.subr.bf16.mxu0 0
    %439 = vmatpush1.bf16.xpose.msra.mxu0 0
    %440 = vmatprep.subr.bf16.mxu0 0
    %441 = vmatpush1.bf16.xpose.msra.mxu0 0
    %442 = vmatprep.subr.bf16.mxu0 0
    %443 = vmatpush1.bf16.xpose.msra.mxu0 0
    %444 = vmatprep.subr.bf16.mxu0 0
    %445 = vmatpush1.bf16.xpose.msra.mxu0 0
    %446 = vmatprep.subr.bf16.mxu0 0
    %447 = vmatpush1.bf16.xpose.msra.mxu0 0
    %448 = vmatprep.subr.bf16.mxu0 0
    %449 = vmatpush1.bf16.xpose.msra.mxu0 %v432
    %450 = vmatprep.subr.bf16.mxu0 0
    %451 = vmatpush2.bf16.xpose.msra.mxu0 0
    %452 = vmatprep.subr.bf16.mxu0 0
    %453 = vmatpush2.bf16.xpose.msra.mxu0 0
    %454 = vmatprep.subr.bf16.mxu0 0
    %455 = vmatpush2.bf16.xpose.msra.mxu0 0
    %456 = vmatprep.subr.bf16.mxu0 0
    %457 = vmatpush2.bf16.xpose.msra.mxu0 0
    %458 = vmatprep.subr.bf16.mxu0 0
    %459 = vmatpush2.bf16.xpose.msra.mxu0 0
    %460 = vmatprep.subr.bf16.mxu0 0
    %461 = vmatpush2.bf16.xpose.msra.mxu0 0
    %462 = vmatprep.subr.bf16.mxu0 0
    %463 = vmatpush2.bf16.xpose.msra.mxu0 0
    %464 = vmatprep.subr.bf16.mxu0 0
    %465 = vmatpush2.bf16.xpose.msra.mxu0 0
    %466 = vmatprep.mubr.bf16.mxu0 0
    %467 = vmatmul.mubr.bf16.gmra.mxu0 %v429
    %v468 = vpop.f32.mrf.mxu0
    %v469 = vadd.f32 0.0, %v468
    %v470 = vpop.f32.mrf.mxu0
    %v471 = vpop.f32.mrf.mxu0
    %v472 = vadd.f32 0.0, %v471
    %v473 = vpop.f32.mrf.mxu0
    %474 = vdwg.mxu0
    %476 = vrot.lane.b32.xlu0 %v182, 120
    %v477 = vpop.permute.xlu0 %476
    %478 = vrot.lane.b32.xlu0 %v184, 120
    %v479 = vpop.permute.xlu0 %478
    %v481 = vsel %vm185, %v477, 0
    %v484 = vsel %vm185, %v479, 0
    %486 = vmatprep.subr.bf16.mxu0 0
    %487 = vmatpush1.bf16.xpose.msra.mxu0 0
    %488 = vmatprep.subr.bf16.mxu0 0
    %489 = vmatpush1.bf16.xpose.msra.mxu0 0
    %490 = vmatprep.subr.bf16.mxu0 0
    %491 = vmatpush1.bf16.xpose.msra.mxu0 0
    %492 = vmatprep.subr.bf16.mxu0 0
    %493 = vmatpush1.bf16.xpose.msra.mxu0 0
    %494 = vmatprep.subr.bf16.mxu0 0
    %495 = vmatpush1.bf16.xpose.msra.mxu0 0
    %496 = vmatprep.subr.bf16.mxu0 0
    %497 = vmatpush1.bf16.xpose.msra.mxu0 0
    %498 = vmatprep.subr.bf16.mxu0 0
    %499 = vmatpush1.bf16.xpose.msra.mxu0 0
    %500 = vmatprep.subr.bf16.mxu0 0
    %501 = vmatpush1.bf16.xpose.msra.mxu0 %v484
    %502 = vmatprep.subr.bf16.mxu0 0
    %503 = vmatpush2.bf16.xpose.msra.mxu0 0
    %504 = vmatprep.subr.bf16.mxu0 0
    %505 = vmatpush2.bf16.xpose.msra.mxu0 0
    %506 = vmatprep.subr.bf16.mxu0 0
    %507 = vmatpush2.bf16.xpose.msra.mxu0 0
    %508 = vmatprep.subr.bf16.mxu0 0
    %509 = vmatpush2.bf16.xpose.msra.mxu0 0
    %510 = vmatprep.subr.bf16.mxu0 0
    %511 = vmatpush2.bf16.xpose.msra.mxu0 0
    %512 = vmatprep.subr.bf16.mxu0 0
    %513 = vmatpush2.bf16.xpose.msra.mxu0 0
    %514 = vmatprep.subr.bf16.mxu0 0
    %515 = vmatpush2.bf16.xpose.msra.mxu0 0
    %516 = vmatprep.subr.bf16.mxu0 0
    %517 = vmatpush2.bf16.xpose.msra.mxu0 0
    %518 = vmatprep.mubr.bf16.mxu0 0
    %519 = vmatmul.mubr.bf16.gmra.mxu0 %v481
    %v520 = vpop.f32.mrf.mxu0
    %v521 = vadd.f32 0.0, %v520
    %v522 = vpop.f32.mrf.mxu0
    %v523 = vpop.f32.mrf.mxu0
    %v524 = vadd.f32 0.0, %v523
    %v525 = vpop.f32.mrf.mxu0
    %526 = vdwg.mxu0
    %v527 = vsel %vm280, %v469, -inf
    %528 = vmax.xlane.f32.xlu0 %v527
    %v529 = vpop.xlane.xlu0 %528
    %v530 = vsel %vm280, %v472, -inf
    %531 = vmax.xlane.f32.xlu0 %v530
    %v532 = vpop.xlane.xlu0 %531
    %v533 = vsel %vm280, %v521, -inf
    %534 = vmax.xlane.f32.xlu0 %v533
    %v535 = vpop.xlane.xlu0 %534
    %v536 = vsel %vm280, %v524, -inf
    %537 = vmax.xlane.f32.xlu0 %v536
    %v538 = vpop.xlane.xlu0 %537
    %v539 = vsub.f32 %v469, %v529
    %v540 = vsub.f32 %v472, %v532
    %v541 = vsub.f32 %v521, %v535
    %v542 = vsub.f32 %v524, %v538
    %v543 = vmul.f32 %v539, 1.442695
    %v544 = vpow.pop %v543
    %v545 = vmul.f32 %v540, 1.442695
    %v546 = vpow.pop %v545
    %v547 = vmul.f32 %v541, 1.442695
    %v548 = vpow.pop %v547
    %v549 = vmul.f32 %v542, 1.442695
    %v550 = vpow.pop %v549
    %v551 = vsel %vm280, %v544, 0.0
    %552 = vadd.xlane.f32.xlu0 %v551
    %v553 = vpop.xlane.xlu0 %552
    %v554 = vsel %vm280, %v546, 0.0
    %555 = vadd.xlane.f32.xlu0 %v554
    %v556 = vpop.xlane.xlu0 %555
    %v557 = vsel %vm280, %v548, 0.0
    %558 = vadd.xlane.f32.xlu0 %v557
    %v559 = vpop.xlane.xlu0 %558
    %v560 = vsel %vm280, %v550, 0.0
    %561 = vadd.xlane.f32.xlu0 %v560
    %v562 = vpop.xlane.xlu0 %561
    %v563 = vrcp.pop %v553
    %v564 = vrcp.pop %v556
    %v565 = vrcp.pop %v559
    %v566 = vrcp.pop %v562
    %v567 = vmul.f32 %v544, %v563
    %v568 = vmul.f32 %v546, %v564
    %v569 = vmul.f32 %v548, %v565
    %v570 = vmul.f32 %v550, %v566
    %v571 = vpack.c.bf16 %v568, %v567
    %v572 = vpack.c.bf16 %v570, %v569
    %573 = vrot.lane.b32.xlu0 %v183, 88
    %v574 = vpop.permute.xlu0 %573
    %v577 = vsel %vm280, %v571, 0
    %579 = vmatprep.subr.bf16.mxu0 0
    %580 = vmatpush1.bf16.msra.mxu0 0
    %581 = vmatprep.subr.bf16.mxu0 0
    %582 = vmatpush1.bf16.msra.mxu0 0
    %583 = vmatprep.subr.bf16.mxu0 0
    %584 = vmatpush1.bf16.msra.mxu0 0
    %585 = vmatprep.subr.bf16.mxu0 0
    %586 = vmatpush1.bf16.msra.mxu0 0
    %587 = vmatprep.subr.bf16.mxu0 0
    %588 = vmatpush1.bf16.msra.mxu0 0
    %589 = vmatprep.subr.bf16.mxu0 0
    %590 = vmatpush1.bf16.msra.mxu0 0
    %591 = vmatprep.subr.bf16.mxu0 0
    %592 = vmatpush1.bf16.msra.mxu0 0
    %593 = vmatprep.subr.bf16.mxu0 0
    %594 = vmatpush1.bf16.msra.mxu0 %v574
    %595 = vmatprep.subr.bf16.mxu0 0
    %596 = vmatpush2.bf16.msra.mxu0 0
    %597 = vmatprep.subr.bf16.mxu0 0
    %598 = vmatpush2.bf16.msra.mxu0 0
    %599 = vmatprep.subr.bf16.mxu0 0
    %600 = vmatpush2.bf16.msra.mxu0 0
    %601 = vmatprep.subr.bf16.mxu0 0
    %602 = vmatpush2.bf16.msra.mxu0 0
    %603 = vmatprep.subr.bf16.mxu0 0
    %604 = vmatpush2.bf16.msra.mxu0 0
    %605 = vmatprep.subr.bf16.mxu0 0
    %606 = vmatpush2.bf16.msra.mxu0 0
    %607 = vmatprep.subr.bf16.mxu0 0
    %608 = vmatpush2.bf16.msra.mxu0 0
    %609 = vmatprep.subr.bf16.mxu0 0
    %610 = vmatpush2.bf16.msra.mxu0 0
    %611 = vmatprep.mubr.bf16.mxu0 0
    %612 = vmatmul.mubr.bf16.gmra.mxu0 %v577
    %v613 = vpop.f32.mrf.mxu0
    %v614 = vadd.f32 0.0, %v613
    %v615 = vpop.f32.mrf.mxu0
    %v616 = vpop.f32.mrf.mxu0
    %v617 = vadd.f32 0.0, %v616
    %v618 = vpop.f32.mrf.mxu0
    %619 = vdwg.mxu0
    %620 = vrot.lane.b32.xlu0 %v184, 88
    %v621 = vpop.permute.xlu0 %620
    %v624 = vsel %vm280, %v572, 0
    %626 = vmatprep.subr.bf16.mxu0 0
    %627 = vmatpush1.bf16.msra.mxu0 0
    %628 = vmatprep.subr.bf16.mxu0 0
    %629 = vmatpush1.bf16.msra.mxu0 0
    %630 = vmatprep.subr.bf16.mxu0 0
    %631 = vmatpush1.bf16.msra.mxu0 0
    %632 = vmatprep.subr.bf16.mxu0 0
    %633 = vmatpush1.bf16.msra.mxu0 0
    %634 = vmatprep.subr.bf16.mxu0 0
    %635 = vmatpush1.bf16.msra.mxu0 0
    %636 = vmatprep.subr.bf16.mxu0 0
    %637 = vmatpush1.bf16.msra.mxu0 0
    %638 = vmatprep.subr.bf16.mxu0 0
    %639 = vmatpush1.bf16.msra.mxu0 0
    %640 = vmatprep.subr.bf16.mxu0 0
    %641 = vmatpush1.bf16.msra.mxu0 %v621
    %642 = vmatprep.subr.bf16.mxu0 0
    %643 = vmatpush2.bf16.msra.mxu0 0
    %644 = vmatprep.subr.bf16.mxu0 0
    %645 = vmatpush2.bf16.msra.mxu0 0
    %646 = vmatprep.subr.bf16.mxu0 0
    %647 = vmatpush2.bf16.msra.mxu0 0
    %648 = vmatprep.subr.bf16.mxu0 0
    %649 = vmatpush2.bf16.msra.mxu0 0
    %650 = vmatprep.subr.bf16.mxu0 0
    %651 = vmatpush2.bf16.msra.mxu0 0
    %652 = vmatprep.subr.bf16.mxu0 0
    %653 = vmatpush2.bf16.msra.mxu0 0
    %654 = vmatprep.subr.bf16.mxu0 0
    %655 = vmatpush2.bf16.msra.mxu0 0
    %656 = vmatprep.subr.bf16.mxu0 0
    %657 = vmatpush2.bf16.msra.mxu0 0
    %658 = vmatprep.mubr.bf16.mxu0 0
    %659 = vmatmul.mubr.bf16.gmra.mxu0 %v624
    %v660 = vpop.f32.mrf.mxu0
    %v661 = vadd.f32 0.0, %v660
    %v662 = vpop.f32.mrf.mxu0
    %v663 = vpop.f32.mrf.mxu0
    %v664 = vadd.f32 0.0, %v663
    %v665 = vpop.f32.mrf.mxu0
    %666 = vdwg.mxu0
    %667 = vrot.lane.b32.xlu0 %v181, 112
    %v668 = vpop.permute.xlu0 %667
    %669 = vrot.lane.b32.xlu0 %v183, 112
    %v670 = vpop.permute.xlu0 %669
    %v672 = vsel %vm185, %v668, 0
    %v675 = vsel %vm185, %v670, 0
    %677 = vmatprep.subr.bf16.mxu0 0
    %678 = vmatpush1.bf16.xpose.msra.mxu0 0
    %679 = vmatprep.subr.bf16.mxu0 0
    %680 = vmatpush1.bf16.xpose.msra.mxu0 0
    %681 = vmatprep.subr.bf16.mxu0 0
    %682 = vmatpush1.bf16.xpose.msra.mxu0 0
    %683 = vmatprep.subr.bf16.mxu0 0
    %684 = vmatpush1.bf16.xpose.msra.mxu0 0
    %685 = vmatprep.subr.bf16.mxu0 0
    %686 = vmatpush1.bf16.xpose.msra.mxu0 0
    %687 = vmatprep.subr.bf16.mxu0 0
    %688 = vmatpush1.bf16.xpose.msra.mxu0 0
    %689 = vmatprep.subr.bf16.mxu0 0
    %690 = vmatpush1.bf16.xpose.msra.mxu0 0
    %691 = vmatprep.subr.bf16.mxu0 0
    %692 = vmatpush1.bf16.xpose.msra.mxu0 %v675
    %693 = vmatprep.subr.bf16.mxu0 0
    %694 = vmatpush2.bf16.xpose.msra.mxu0 0
    %695 = vmatprep.subr.bf16.mxu0 0
    %696 = vmatpush2.bf16.xpose.msra.mxu0 0
    %697 = vmatprep.subr.bf16.mxu0 0
    %698 = vmatpush2.bf16.xpose.msra.mxu0 0
    %699 = vmatprep.subr.bf16.mxu0 0
    %700 = vmatpush2.bf16.xpose.msra.mxu0 0
    %701 = vmatprep.subr.bf16.mxu0 0
    %702 = vmatpush2.bf16.xpose.msra.mxu0 0
    %703 = vmatprep.subr.bf16.mxu0 0
    %704 = vmatpush2.bf16.xpose.msra.mxu0 0
    %705 = vmatprep.subr.bf16.mxu0 0
    %706 = vmatpush2.bf16.xpose.msra.mxu0 0
    %707 = vmatprep.subr.bf16.mxu0 0
    %708 = vmatpush2.bf16.xpose.msra.mxu0 0
    %709 = vmatprep.mubr.bf16.mxu0 0
    %710 = vmatmul.mubr.bf16.gmra.mxu0 %v672
    %v711 = vpop.f32.mrf.mxu0
    %v712 = vadd.f32 0.0, %v711
    %v713 = vpop.f32.mrf.mxu0
    %v714 = vpop.f32.mrf.mxu0
    %v715 = vadd.f32 0.0, %v714
    %v716 = vpop.f32.mrf.mxu0
    %717 = vdwg.mxu0
    %718 = vrot.lane.b32.xlu0 %v182, 112
    %v719 = vpop.permute.xlu0 %718
    %720 = vrot.lane.b32.xlu0 %v184, 112
    %v721 = vpop.permute.xlu0 %720
    %v723 = vsel %vm185, %v719, 0
    %v726 = vsel %vm185, %v721, 0
    %728 = vmatprep.subr.bf16.mxu0 0
    %729 = vmatpush1.bf16.xpose.msra.mxu0 0
    %730 = vmatprep.subr.bf16.mxu0 0
    %731 = vmatpush1.bf16.xpose.msra.mxu0 0
    %732 = vmatprep.subr.bf16.mxu0 0
    %733 = vmatpush1.bf16.xpose.msra.mxu0 0
    %734 = vmatprep.subr.bf16.mxu0 0
    %735 = vmatpush1.bf16.xpose.msra.mxu0 0
    %736 = vmatprep.subr.bf16.mxu0 0
    %737 = vmatpush1.bf16.xpose.msra.mxu0 0
    %738 = vmatprep.subr.bf16.mxu0 0
    %739 = vmatpush1.bf16.xpose.msra.mxu0 0
    %740 = vmatprep.subr.bf16.mxu0 0
    %741 = vmatpush1.bf16.xpose.msra.mxu0 0
    %742 = vmatprep.subr.bf16.mxu0 0
    %743 = vmatpush1.bf16.xpose.msra.mxu0 %v726
    %744 = vmatprep.subr.bf16.mxu0 0
    %745 = vmatpush2.bf16.xpose.msra.mxu0 0
    %746 = vmatprep.subr.bf16.mxu0 0
    %747 = vmatpush2.bf16.xpose.msra.mxu0 0
    %748 = vmatprep.subr.bf16.mxu0 0
    %749 = vmatpush2.bf16.xpose.msra.mxu0 0
    %750 = vmatprep.subr.bf16.mxu0 0
    %751 = vmatpush2.bf16.xpose.msra.mxu0 0
    %752 = vmatprep.subr.bf16.mxu0 0
    %753 = vmatpush2.bf16.xpose.msra.mxu0 0
    %754 = vmatprep.subr.bf16.mxu0 0
    %755 = vmatpush2.bf16.xpose.msra.mxu0 0
    %756 = vmatprep.subr.bf16.mxu0 0
    %757 = vmatpush2.bf16.xpose.msra.mxu0 0
    %758 = vmatprep.subr.bf16.mxu0 0
    %759 = vmatpush2.bf16.xpose.msra.mxu0 0
    %760 = vmatprep.mubr.bf16.mxu0 0
    %761 = vmatmul.mubr.bf16.gmra.mxu0 %v723
    %v762 = vpop.f32.mrf.mxu0
    %v763 = vadd.f32 0.0, %v762
    %v764 = vpop.f32.mrf.mxu0
    %v765 = vpop.f32.mrf.mxu0
    %v766 = vadd.f32 0.0, %v765
    %v767 = vpop.f32.mrf.mxu0
    %768 = vdwg.mxu0
    %v769 = vsel %vm280, %v712, -inf
    %770 = vmax.xlane.f32.xlu0 %v769
    %v771 = vpop.xlane.xlu0 %770
    %v772 = vsel %vm280, %v715, -inf
    %773 = vmax.xlane.f32.xlu0 %v772
    %v774 = vpop.xlane.xlu0 %773
    %v775 = vsel %vm280, %v763, -inf
    %776 = vmax.xlane.f32.xlu0 %v775
    %v777 = vpop.xlane.xlu0 %776
    %v778 = vsel %vm280, %v766, -inf
    %779 = vmax.xlane.f32.xlu0 %v778
    %v780 = vpop.xlane.xlu0 %779
    %v781 = vsub.f32 %v712, %v771
    %v782 = vsub.f32 %v715, %v774
    %v783 = vsub.f32 %v763, %v777
    %v784 = vsub.f32 %v766, %v780
    %v785 = vmul.f32 %v781, 1.442695
    %v786 = vpow.pop %v785
    %v787 = vmul.f32 %v782, 1.442695
    %v788 = vpow.pop %v787
    %v789 = vmul.f32 %v783, 1.442695
    %v790 = vpow.pop %v789
    %v791 = vmul.f32 %v784, 1.442695
    %v792 = vpow.pop %v791
    %v793 = vsel %vm280, %v786, 0.0
    %794 = vadd.xlane.f32.xlu0 %v793
    %v795 = vpop.xlane.xlu0 %794
    %v796 = vsel %vm280, %v788, 0.0
    %797 = vadd.xlane.f32.xlu0 %v796
    %v798 = vpop.xlane.xlu0 %797
    %v799 = vsel %vm280, %v790, 0.0
    %800 = vadd.xlane.f32.xlu0 %v799
    %v801 = vpop.xlane.xlu0 %800
    %v802 = vsel %vm280, %v792, 0.0
    %803 = vadd.xlane.f32.xlu0 %v802
    %v804 = vpop.xlane.xlu0 %803
    %v805 = vrcp.pop %v795
    %v806 = vrcp.pop %v798
    %v807 = vrcp.pop %v801
    %v808 = vrcp.pop %v804
    %v809 = vmul.f32 %v786, %v805
    %v810 = vmul.f32 %v788, %v806
    %v811 = vmul.f32 %v790, %v807
    %v812 = vmul.f32 %v792, %v808
    %v813 = vpack.c.bf16 %v810, %v809
    %v814 = vpack.c.bf16 %v812, %v811
    %815 = vrot.lane.b32.xlu0 %v183, 80
    %v816 = vpop.permute.xlu0 %815
    %v819 = vsel %vm280, %v813, 0
    %821 = vmatprep.subr.bf16.mxu0 0
    %822 = vmatpush1.bf16.msra.mxu0 0
    %823 = vmatprep.subr.bf16.mxu0 0
    %824 = vmatpush1.bf16.msra.mxu0 0
    %825 = vmatprep.subr.bf16.mxu0 0
    %826 = vmatpush1.bf16.msra.mxu0 0
    %827 = vmatprep.subr.bf16.mxu0 0
    %828 = vmatpush1.bf16.msra.mxu0 0
    %829 = vmatprep.subr.bf16.mxu0 0
    %830 = vmatpush1.bf16.msra.mxu0 0
    %831 = vmatprep.subr.bf16.mxu0 0
    %832 = vmatpush1.bf16.msra.mxu0 0
    %833 = vmatprep.subr.bf16.mxu0 0
    %834 = vmatpush1.bf16.msra.mxu0 0
    %835 = vmatprep.subr.bf16.mxu0 0
    %836 = vmatpush1.bf16.msra.mxu0 %v816
    %837 = vmatprep.subr.bf16.mxu0 0
    %838 = vmatpush2.bf16.msra.mxu0 0
    %839 = vmatprep.subr.bf16.mxu0 0
    %840 = vmatpush2.bf16.msra.mxu0 0
    %841 = vmatprep.subr.bf16.mxu0 0
    %842 = vmatpush2.bf16.msra.mxu0 0
    %843 = vmatprep.subr.bf16.mxu0 0
    %844 = vmatpush2.bf16.msra.mxu0 0
    %845 = vmatprep.subr.bf16.mxu0 0
    %846 = vmatpush2.bf16.msra.mxu0 0
    %847 = vmatprep.subr.bf16.mxu0 0
    %848 = vmatpush2.bf16.msra.mxu0 0
    %849 = vmatprep.subr.bf16.mxu0 0
    %850 = vmatpush2.bf16.msra.mxu0 0
    %851 = vmatprep.subr.bf16.mxu0 0
    %852 = vmatpush2.bf16.msra.mxu0 0
    %853 = vmatprep.mubr.bf16.mxu0 0
    %854 = vmatmul.mubr.bf16.gmra.mxu0 %v819
    %v855 = vpop.f32.mrf.mxu0
    %v856 = vadd.f32 0.0, %v855
    %v857 = vpop.f32.mrf.mxu0
    %v858 = vpop.f32.mrf.mxu0
    %v859 = vadd.f32 0.0, %v858
    %v860 = vpop.f32.mrf.mxu0
    %861 = vdwg.mxu0
    %862 = vrot.lane.b32.xlu0 %v184, 80
    %v863 = vpop.permute.xlu0 %862
    %v866 = vsel %vm280, %v814, 0
    %868 = vmatprep.subr.bf16.mxu0 0
    %869 = vmatpush1.bf16.msra.mxu0 0
    %870 = vmatprep.subr.bf16.mxu0 0
    %871 = vmatpush1.bf16.msra.mxu0 0
    %872 = vmatprep.subr.bf16.mxu0 0
    %873 = vmatpush1.bf16.msra.mxu0 0
    %874 = vmatprep.subr.bf16.mxu0 0
    %875 = vmatpush1.bf16.msra.mxu0 0
    %876 = vmatprep.subr.bf16.mxu0 0
    %877 = vmatpush1.bf16.msra.mxu0 0
    %878 = vmatprep.subr.bf16.mxu0 0
    %879 = vmatpush1.bf16.msra.mxu0 0
    %880 = vmatprep.subr.bf16.mxu0 0
    %881 = vmatpush1.bf16.msra.mxu0 0
    %882 = vmatprep.subr.bf16.mxu0 0
    %883 = vmatpush1.bf16.msra.mxu0 %v863
    %884 = vmatprep.subr.bf16.mxu0 0
    %885 = vmatpush2.bf16.msra.mxu0 0
    %886 = vmatprep.subr.bf16.mxu0 0
    %887 = vmatpush2.bf16.msra.mxu0 0
    %888 = vmatprep.subr.bf16.mxu0 0
    %889 = vmatpush2.bf16.msra.mxu0 0
    %890 = vmatprep.subr.bf16.mxu0 0
    %891 = vmatpush2.bf16.msra.mxu0 0
    %892 = vmatprep.subr.bf16.mxu0 0
    %893 = vmatpush2.bf16.msra.mxu0 0
    %894 = vmatprep.subr.bf16.mxu0 0
    %895 = vmatpush2.bf16.msra.mxu0 0
    %896 = vmatprep.subr.bf16.mxu0 0
    %897 = vmatpush2.bf16.msra.mxu0 0
    %898 = vmatprep.subr.bf16.mxu0 0
    %899 = vmatpush2.bf16.msra.mxu0 0
    %900 = vmatprep.mubr.bf16.mxu0 0
    %901 = vmatmul.mubr.bf16.gmra.mxu0 %v866
    %v902 = vpop.f32.mrf.mxu0
    %v903 = vadd.f32 0.0, %v902
    %v904 = vpop.f32.mrf.mxu0
    %v905 = vpop.f32.mrf.mxu0
    %v906 = vadd.f32 0.0, %v905
    %v907 = vpop.f32.mrf.mxu0
    %908 = vdwg.mxu0
    %909 = vrot.lane.b32.xlu0 %v181, 104
    %v910 = vpop.permute.xlu0 %909
    %911 = vrot.lane.b32.xlu0 %v183, 104
    %v912 = vpop.permute.xlu0 %911
    %v914 = vsel %vm185, %v910, 0
    %v917 = vsel %vm185, %v912, 0
    %919 = vmatprep.subr.bf16.mxu0 0
    %920 = vmatpush1.bf16.xpose.msra.mxu0 0
    %921 = vmatprep.subr.bf16.mxu0 0
    %922 = vmatpush1.bf16.xpose.msra.mxu0 0
    %923 = vmatprep.subr.bf16.mxu0 0
    %924 = vmatpush1.bf16.xpose.msra.mxu0 0
    %925 = vmatprep.subr.bf16.mxu0 0
    %926 = vmatpush1.bf16.xpose.msra.mxu0 0
    %927 = vmatprep.subr.bf16.mxu0 0
    %928 = vmatpush1.bf16.xpose.msra.mxu0 0
    %929 = vmatprep.subr.bf16.mxu0 0
    %930 = vmatpush1.bf16.xpose.msra.mxu0 0
    %931 = vmatprep.subr.bf16.mxu0 0
    %932 = vmatpush1.bf16.xpose.msra.mxu0 0
    %933 = vmatprep.subr.bf16.mxu0 0
    %934 = vmatpush1.bf16.xpose.msra.mxu0 %v917
    %935 = vmatprep.subr.bf16.mxu0 0
    %936 = vmatpush2.bf16.xpose.msra.mxu0 0
    %937 = vmatprep.subr.bf16.mxu0 0
    %938 = vmatpush2.bf16.xpose.msra.mxu0 0
    %939 = vmatprep.subr.bf16.mxu0 0
    %940 = vmatpush2.bf16.xpose.msra.mxu0 0
    %941 = vmatprep.subr.bf16.mxu0 0
    %942 = vmatpush2.bf16.xpose.msra.mxu0 0
    %943 = vmatprep.subr.bf16.mxu0 0
    %944 = vmatpush2.bf16.xpose.msra.mxu0 0
    %945 = vmatprep.subr.bf16.mxu0 0
    %946 = vmatpush2.bf16.xpose.msra.mxu0 0
    %947 = vmatprep.subr.bf16.mxu0 0
    %948 = vmatpush2.bf16.xpose.msra.mxu0 0
    %949 = vmatprep.subr.bf16.mxu0 0
    %950 = vmatpush2.bf16.xpose.msra.mxu0 0
    %951 = vmatprep.mubr.bf16.mxu0 0
    %952 = vmatmul.mubr.bf16.gmra.mxu0 %v914
    %v953 = vpop.f32.mrf.mxu0
    %v954 = vadd.f32 0.0, %v953
    %v955 = vpop.f32.mrf.mxu0
    %v956 = vpop.f32.mrf.mxu0
    %v957 = vadd.f32 0.0, %v956
    %v958 = vpop.f32.mrf.mxu0
    %959 = vdwg.mxu0
    %960 = vrot.lane.b32.xlu0 %v182, 104
    %v961 = vpop.permute.xlu0 %960
    %962 = vrot.lane.b32.xlu0 %v184, 104
    %v963 = vpop.permute.xlu0 %962
    %v965 = vsel %vm185, %v961, 0
    %v968 = vsel %vm185, %v963, 0
    %970 = vmatprep.subr.bf16.mxu0 0
    %971 = vmatpush1.bf16.xpose.msra.mxu0 0
    %972 = vmatprep.subr.bf16.mxu0 0
    %973 = vmatpush1.bf16.xpose.msra.mxu0 0
    %974 = vmatprep.subr.bf16.mxu0 0
    %975 = vmatpush1.bf16.xpose.msra.mxu0 0
    %976 = vmatprep.subr.bf16.mxu0 0
    %977 = vmatpush1.bf16.xpose.msra.mxu0 0
    %978 = vmatprep.subr.bf16.mxu0 0
    %979 = vmatpush1.bf16.xpose.msra.mxu0 0
    %980 = vmatprep.subr.bf16.mxu0 0
    %981 = vmatpush1.bf16.xpose.msra.mxu0 0
    %982 = vmatprep.subr.bf16.mxu0 0
    %983 = vmatpush1.bf16.xpose.msra.mxu0 0
    %984 = vmatprep.subr.bf16.mxu0 0
    %985 = vmatpush1.bf16.xpose.msra.mxu0 %v968
    %986 = vmatprep.subr.bf16.mxu0 0
    %987 = vmatpush2.bf16.xpose.msra.mxu0 0
    %988 = vmatprep.subr.bf16.mxu0 0
    %989 = vmatpush2.bf16.xpose.msra.mxu0 0
    %990 = vmatprep.subr.bf16.mxu0 0
    %991 = vmatpush2.bf16.xpose.msra.mxu0 0
    %992 = vmatprep.subr.bf16.mxu0 0
    %993 = vmatpush2.bf16.xpose.msra.mxu0 0
    %994 = vmatprep.subr.bf16.mxu0 0
    %995 = vmatpush2.bf16.xpose.msra.mxu0 0
    %996 = vmatprep.subr.bf16.mxu0 0
    %997 = vmatpush2.bf16.xpose.msra.mxu0 0
    %998 = vmatprep.subr.bf16.mxu0 0
    %999 = vmatpush2.bf16.xpose.msra.mxu0 0
    %1000 = vmatprep.subr.bf16.mxu0 0
    %1001 = vmatpush2.bf16.xpose.msra.mxu0 0
    %1002 = vmatprep.mubr.bf16.mxu0 0
    %1003 = vmatmul.mubr.bf16.gmra.mxu0 %v965
    %v1004 = vpop.f32.mrf.mxu0
    %v1005 = vadd.f32 0.0, %v1004
    %v1006 = vpop.f32.mrf.mxu0
    %v1007 = vpop.f32.mrf.mxu0
    %v1008 = vadd.f32 0.0, %v1007
    %v1009 = vpop.f32.mrf.mxu0
    %1010 = vdwg.mxu0
    %v1011 = vsel %vm280, %v954, -inf
    %1012 = vmax.xlane.f32.xlu0 %v1011
    %v1013 = vpop.xlane.xlu0 %1012
    %v1014 = vsel %vm280, %v957, -inf
    %1015 = vmax.xlane.f32.xlu0 %v1014
    %v1016 = vpop.xlane.xlu0 %1015
    %v1017 = vsel %vm280, %v1005, -inf
    %1018 = vmax.xlane.f32.xlu0 %v1017
    %v1019 = vpop.xlane.xlu0 %1018
    %v1020 = vsel %vm280, %v1008, -inf
    %1021 = vmax.xlane.f32.xlu0 %v1020
    %v1022 = vpop.xlane.xlu0 %1021
    %v1023 = vsub.f32 %v954, %v1013
    %v1024 = vsub.f32 %v957, %v1016
    %v1025 = vsub.f32 %v1005, %v1019
    %v1026 = vsub.f32 %v1008, %v1022
    %v1027 = vmul.f32 %v1023, 1.442695
    %v1028 = vpow.pop %v1027
    %v1029 = vmul.f32 %v1024, 1.442695
    %v1030 = vpow.pop %v1029
    %v1031 = vmul.f32 %v1025, 1.442695
    %v1032 = vpow.pop %v1031
    %v1033 = vmul.f32 %v1026, 1.442695
    %v1034 = vpow.pop %v1033
    %v1035 = vsel %vm280, %v1028, 0.0
    %1036 = vadd.xlane.f32.xlu0 %v1035
    %v1037 = vpop.xlane.xlu0 %1036
    %v1038 = vsel %vm280, %v1030, 0.0
    %1039 = vadd.xlane.f32.xlu0 %v1038
    %v1040 = vpop.xlane.xlu0 %1039
    %v1041 = vsel %vm280, %v1032, 0.0
    %1042 = vadd.xlane.f32.xlu0 %v1041
    %v1043 = vpop.xlane.xlu0 %1042
    %v1044 = vsel %vm280, %v1034, 0.0
    %1045 = vadd.xlane.f32.xlu0 %v1044
    %v1046 = vpop.xlane.xlu0 %1045
    %v1047 = vrcp.pop %v1037
    %v1048 = vrcp.pop %v1040
    %v1049 = vrcp.pop %v1043
    %v1050 = vrcp.pop %v1046
    %v1051 = vmul.f32 %v1028, %v1047
    %v1052 = vmul.f32 %v1030, %v1048
    %v1053 = vmul.f32 %v1032, %v1049
    %v1054 = vmul.f32 %v1034, %v1050
    %v1055 = vpack.c.bf16 %v1052, %v1051
    %v1056 = vpack.c.bf16 %v1054, %v1053
    %1057 = vrot.lane.b32.xlu0 %v183, 72
    %v1058 = vpop.permute.xlu0 %1057
    %v1061 = vsel %vm280, %v1055, 0
    %1063 = vmatprep.subr.bf16.mxu0 0
    %1064 = vmatpush1.bf16.msra.mxu0 0
    %1065 = vmatprep.subr.bf16.mxu0 0
    %1066 = vmatpush1.bf16.msra.mxu0 0
    %1067 = vmatprep.subr.bf16.mxu0 0
    %1068 = vmatpush1.bf16.msra.mxu0 0
    %1069 = vmatprep.subr.bf16.mxu0 0
    %1070 = vmatpush1.bf16.msra.mxu0 0
    %1071 = vmatprep.subr.bf16.mxu0 0
    %1072 = vmatpush1.bf16.msra.mxu0 0
    %1073 = vmatprep.subr.bf16.mxu0 0
    %1074 = vmatpush1.bf16.msra.mxu0 0
    %1075 = vmatprep.subr.bf16.mxu0 0
    %1076 = vmatpush1.bf16.msra.mxu0 0
    %1077 = vmatprep.subr.bf16.mxu0 0
    %1078 = vmatpush1.bf16.msra.mxu0 %v1058
    %1079 = vmatprep.subr.bf16.mxu0 0
    %1080 = vmatpush2.bf16.msra.mxu0 0
    %1081 = vmatprep.subr.bf16.mxu0 0
    %1082 = vmatpush2.bf16.msra.mxu0 0
    %1083 = vmatprep.subr.bf16.mxu0 0
    %1084 = vmatpush2.bf16.msra.mxu0 0
    %1085 = vmatprep.subr.bf16.mxu0 0
    %1086 = vmatpush2.bf16.msra.mxu0 0
    %1087 = vmatprep.subr.bf16.mxu0 0
    %1088 = vmatpush2.bf16.msra.mxu0 0
    %1089 = vmatprep.subr.bf16.mxu0 0
    %1090 = vmatpush2.bf16.msra.mxu0 0
    %1091 = vmatprep.subr.bf16.mxu0 0
    %1092 = vmatpush2.bf16.msra.mxu0 0
    %1093 = vmatprep.subr.bf16.mxu0 0
    %1094 = vmatpush2.bf16.msra.mxu0 0
    %1095 = vmatprep.mubr.bf16.mxu0 0
    %1096 = vmatmul.mubr.bf16.gmra.mxu0 %v1061
    %v1097 = vpop.f32.mrf.mxu0
    %v1098 = vadd.f32 0.0, %v1097
    %v1099 = vpop.f32.mrf.mxu0
    %v1100 = vpop.f32.mrf.mxu0
    %v1101 = vadd.f32 0.0, %v1100
    %v1102 = vpop.f32.mrf.mxu0
    %1103 = vdwg.mxu0
    %1104 = vrot.lane.b32.xlu0 %v184, 72
    %v1105 = vpop.permute.xlu0 %1104
    %v1108 = vsel %vm280, %v1056, 0
    %1110 = vmatprep.subr.bf16.mxu0 0
    %1111 = vmatpush1.bf16.msra.mxu0 0
    %1112 = vmatprep.subr.bf16.mxu0 0
    %1113 = vmatpush1.bf16.msra.mxu0 0
    %1114 = vmatprep.subr.bf16.mxu0 0
    %1115 = vmatpush1.bf16.msra.mxu0 0
    %1116 = vmatprep.subr.bf16.mxu0 0
    %1117 = vmatpush1.bf16.msra.mxu0 0
    %1118 = vmatprep.subr.bf16.mxu0 0
    %1119 = vmatpush1.bf16.msra.mxu0 0
    %1120 = vmatprep.subr.bf16.mxu0 0
    %1121 = vmatpush1.bf16.msra.mxu0 0
    %1122 = vmatprep.subr.bf16.mxu0 0
    %1123 = vmatpush1.bf16.msra.mxu0 0
    %1124 = vmatprep.subr.bf16.mxu0 0
    %1125 = vmatpush1.bf16.msra.mxu0 %v1105
    %1126 = vmatprep.subr.bf16.mxu0 0
    %1127 = vmatpush2.bf16.msra.mxu0 0
    %1128 = vmatprep.subr.bf16.mxu0 0
    %1129 = vmatpush2.bf16.msra.mxu0 0
    %1130 = vmatprep.subr.bf16.mxu0 0
    %1131 = vmatpush2.bf16.msra.mxu0 0
    %1132 = vmatprep.subr.bf16.mxu0 0
    %1133 = vmatpush2.bf16.msra.mxu0 0
    %1134 = vmatprep.subr.bf16.mxu0 0
    %1135 = vmatpush2.bf16.msra.mxu0 0
    %1136 = vmatprep.subr.bf16.mxu0 0
    %1137 = vmatpush2.bf16.msra.mxu0 0
    %1138 = vmatprep.subr.bf16.mxu0 0
    %1139 = vmatpush2.bf16.msra.mxu0 0
    %1140 = vmatprep.subr.bf16.mxu0 0
    %1141 = vmatpush2.bf16.msra.mxu0 0
    %1142 = vmatprep.mubr.bf16.mxu0 0
    %1143 = vmatmul.mubr.bf16.gmra.mxu0 %v1108
    %v1144 = vpop.f32.mrf.mxu0
    %v1145 = vadd.f32 0.0, %v1144
    %v1146 = vpop.f32.mrf.mxu0
    %v1147 = vpop.f32.mrf.mxu0
    %v1148 = vadd.f32 0.0, %v1147
    %v1149 = vpop.f32.mrf.mxu0
    %1150 = vdwg.mxu0
    %1155 = vrot.lane.b32.xlu0 %v614, 8
    %v1156 = vpop.permute.xlu0 %1155
    %1157 = vrot.lane.b32.xlu0 %v617, 8
    %v1158 = vpop.permute.xlu0 %1157
    %1159 = vrot.lane.b32.xlu0 %v661, 8
    %v1160 = vpop.permute.xlu0 %1159
    %1161 = vrot.lane.b32.xlu0 %v664, 8
    %v1162 = vpop.permute.xlu0 %1161
    %1171 = vrot.lane.b32.xlu0 %v856, 16
    %v1172 = vpop.permute.xlu0 %1171
    %1173 = vrot.lane.b32.xlu0 %v859, 16
    %v1174 = vpop.permute.xlu0 %1173
    %1175 = vrot.lane.b32.xlu0 %v903, 16
    %v1176 = vpop.permute.xlu0 %1175
    %1177 = vrot.lane.b32.xlu0 %v906, 16
    %v1178 = vpop.permute.xlu0 %1177
    %1187 = vrot.lane.b32.xlu0 %v1098, 24
    %v1188 = vpop.permute.xlu0 %1187
    %1189 = vrot.lane.b32.xlu0 %v1101, 24
    %v1190 = vpop.permute.xlu0 %1189
    %1191 = vrot.lane.b32.xlu0 %v1145, 24
    %v1192 = vpop.permute.xlu0 %1191
    %1193 = vrot.lane.b32.xlu0 %v1148, 24
    %v1194 = vpop.permute.xlu0 %1193
    %v1199 = vsel %vm185, %v369, %v1156
    %v1200 = vsel %vm185, %v372, %v1158
    %v1201 = vsel %vm185, %v417, %v1160
    %v1202 = vsel %vm185, %v420, %v1162
    %v1203 = vsel %vm280, %v1199, %v1172
    %v1204 = vsel %vm280, %v1200, %v1174
    %v1205 = vsel %vm280, %v1201, %v1176
    %v1206 = vsel %vm280, %v1202, %v1178
    %vm1207 = vcmask 195584
    %v1208 = vsel %vm1207, %v1203, %v1188
    %v1209 = vsel %vm1207, %v1204, %v1190
    %v1210 = vsel %vm1207, %v1205, %v1192
    %v1211 = vsel %vm1207, %v1206, %v1194
    %v1212 = vld [vmem:[%s3 + $0x10] sm:$0xf]
    %v1213 = vld [vmem:[%s3 + $0x14] sm:$0xf]
    %v1214 = vld [vmem:[%s3 + $0x18] sm:$0xf]
    %v1215 = vld [vmem:[%s3 + $0x1c] sm:$0xf]
    %v1216 = vpack.c.bf16 %v1209, %v1208
    %v1217 = vpack.c.bf16 %v1211, %v1210
    %v1218 = vld [vmem:[%s5 + $0x8] sm:$0x1]
    %v1219 = vlaneseq
    %v1220 = vshrl.u32 %v1219, 7
    %v1221 = vsub.s32 0, %v1220
    %v1222 = vrot.slane %v1218, %v1221
    %v1227 = vunpack.c.l.b16 %v1212
    %v1228 = vunpack.c.l.b16 %v1213
    %v1229 = vunpack.c.l.b16 %v1214
    %v1230 = vunpack.c.l.b16 %v1215
    %v1231 = vpack.c.b16 %v1228, %v1227
    %v1232 = vpack.c.b16 %v1230, %v1229
    %v1236 = vsel %vm55, %v1216, 0
    %v1239 = vsel %vm55, %v1217, 0
    %1241 = vmatprep.subr.bf16.mxu0 0
    %1242 = vmatpush1.bf16.msra.mxu0 0
    %1243 = vmatprep.subr.bf16.mxu0 0
    %1244 = vmatpush1.bf16.msra.mxu0 0
    %1245 = vmatprep.subr.bf16.mxu0 0
    %1246 = vmatpush1.bf16.msra.mxu0 0
    %1247 = vmatprep.subr.bf16.mxu0 0
    %1248 = vmatpush1.bf16.msra.mxu0 0
    %1249 = vmatprep.subr.bf16.mxu0 0
    %1250 = vmatpush1.bf16.msra.mxu0 0
    %1251 = vmatprep.subr.bf16.mxu0 0
    %1252 = vmatpush1.bf16.msra.mxu0 0
    %1253 = vmatprep.subr.bf16.mxu0 0
    %1254 = vmatpush1.bf16.msra.mxu0 %v1232
    %1255 = vmatprep.subr.bf16.mxu0 0
    %1256 = vmatpush1.bf16.msra.mxu0 %v1231
    %1257 = vmatprep.subr.bf16.mxu0 0
    %1258 = vmatpush2.bf16.msra.mxu0 0
    %1259 = vmatprep.subr.bf16.mxu0 0
    %1260 = vmatpush2.bf16.msra.mxu0 0
    %1261 = vmatprep.subr.bf16.mxu0 0
    %1262 = vmatpush2.bf16.msra.mxu0 0
    %1263 = vmatprep.subr.bf16.mxu0 0
    %1264 = vmatpush2.bf16.msra.mxu0 0
    %1265 = vmatprep.subr.bf16.mxu0 0
    %1266 = vmatpush2.bf16.msra.mxu0 0
    %1267 = vmatprep.subr.bf16.mxu0 0
    %1268 = vmatpush2.bf16.msra.mxu0 0
    %1269 = vmatprep.subr.bf16.mxu0 0
    %1270 = vmatpush2.bf16.msra.mxu0 0
    %1271 = vmatprep.subr.bf16.mxu0 0
    %1272 = vmatpush2.bf16.msra.mxu0 0
    %1273 = vmatprep.mubr.bf16.mxu0 0
    %1274 = vmatmul.mubr.bf16.gmra.mxu0 %v1236
    %v1275 = vpop.f32.mrf.mxu0
    %v1276 = vadd.f32 %v1222, %v1275
    %v1277 = vpop.f32.mrf.mxu0
    %v1278 = vpop.f32.mrf.mxu0
    %v1279 = vadd.f32 %v1222, %v1278
    %v1280 = vpop.f32.mrf.mxu0
    %1281 = vmatprep.mubr.bf16.mxu0 0
    %1282 = vmatmul.mubr.bf16.gmra.mxu0 %v1239
    %v1283 = vpop.f32.mrf.mxu0
    %v1284 = vadd.f32 %v1222, %v1283
    %v1285 = vpop.f32.mrf.mxu0
    %v1286 = vpop.f32.mrf.mxu0
    %v1287 = vadd.f32 %v1222, %v1286
    %v1288 = vpop.f32.mrf.mxu0
    %1289 = vdwg.mxu0
    %v1290 = vadd.f32 %v1276, %v28
    %v1291 = vadd.f32 %v1279, %v29
    %v1292 = vadd.f32 %v1284, %v30
    %v1293 = vadd.f32 %v1287, %v31
    %v1294 = vld [vmem:[%s5 + $0x10] sm:$0x1]
    %v1295 = vld [vmem:[%s5 + $0x18] sm:$0x1]
    %v1296 = vsel %vm55, %v1290, 0.0
    %1297 = vadd.xlane.f32.xlu0 %v1296
    %v1298 = vpop.xlane.xlu0 %1297
    %v1299 = vsel %vm55, %v1291, 0.0
    %1300 = vadd.xlane.f32.xlu0 %v1299
    %v1301 = vpop.xlane.xlu0 %1300
    %v1302 = vsel %vm55, %v1292, 0.0
    %1303 = vadd.xlane.f32.xlu0 %v1302
    %v1304 = vpop.xlane.xlu0 %1303
    %v1305 = vsel %vm55, %v1293, 0.0
    %1306 = vadd.xlane.f32.xlu0 %v1305
    %v1307 = vpop.xlane.xlu0 %1306
    %v1308 = vrcp.pop 32.0
    %v1309 = vmul.f32 %v1298, %v1308
    %v1310 = vmul.f32 %v1301, %v1308
    %v1311 = vmul.f32 %v1304, %v1308
    %v1312 = vmul.f32 %v1307, %v1308
    %v1313 = vsub.f32 %v1290, %v1309
    %v1314 = vsub.f32 %v1291, %v1310
    %v1315 = vsub.f32 %v1292, %v1311
    %v1316 = vsub.f32 %v1293, %v1312
    %v1317 = vmul.f32 %v1313, %v1313
    %v1318 = vmul.f32 %v1314, %v1314
    %v1319 = vmul.f32 %v1315, %v1315
    %v1320 = vmul.f32 %v1316, %v1316
    %v1321 = vsel %vm55, %v1317, 0.0
    %1322 = vadd.xlane.f32.xlu0 %v1321
    %v1323 = vpop.xlane.xlu0 %1322
    %v1324 = vsel %vm55, %v1318, 0.0
    %1325 = vadd.xlane.f32.xlu0 %v1324
    %v1326 = vpop.xlane.xlu0 %1325
    %v1327 = vsel %vm55, %v1319, 0.0
    %1328 = vadd.xlane.f32.xlu0 %v1327
    %v1329 = vpop.xlane.xlu0 %1328
    %v1330 = vsel %vm55, %v1320, 0.0
    %1331 = vadd.xlane.f32.xlu0 %v1330
    %v1332 = vpop.xlane.xlu0 %1331
    %v1333 = vmul.f32 %v1323, %v1308
    %v1334 = vmul.f32 %v1326, %v1308
    %v1335 = vmul.f32 %v1329, %v1308
    %v1336 = vmul.f32 %v1332, %v1308
    %v1337 = vadd.f32 %v1333, 1e-12
    %v1338 = vadd.f32 %v1334, 1e-12
    %v1339 = vadd.f32 %v1335, 1e-12
    %v1340 = vadd.f32 %v1336, 1e-12
    %v1341 = vrsqrt.pop %v1337
    %v1342 = vrsqrt.pop %v1338
    %v1343 = vrsqrt.pop %v1339
    %v1344 = vrsqrt.pop %v1340
    %v1345 = vmul.f32 %v1313, %v1341
    %v1346 = vmul.f32 %v1314, %v1342
    %v1347 = vmul.f32 %v1315, %v1343
    %v1348 = vmul.f32 %v1316, %v1344
    %v1349 = vlaneseq
    %v1350 = vshrl.u32 %v1349, 7
    %v1351 = vsub.s32 0, %v1350
    %v1352 = vrot.slane %v1294, %v1351
    %v1353 = vmul.f32 %v1345, %v1352
    %v1354 = vmul.f32 %v1346, %v1352
    %v1355 = vmul.f32 %v1347, %v1352
    %v1356 = vmul.f32 %v1348, %v1352
    %v1357 = vlaneseq
    %v1358 = vshrl.u32 %v1357, 7
    %v1359 = vsub.s32 0, %v1358
    %v1360 = vrot.slane %v1295, %v1359
    %v1361 = vadd.f32 %v1353, %v1360
    %v1362 = vadd.f32 %v1354, %v1360
    %v1363 = vadd.f32 %v1355, %v1360
    %v1364 = vadd.f32 %v1356, %v1360
    %v1365 = vld [vmem:[%s1] sm:$0xff]
    %v1366 = vld [vmem:[%s1 + $0x8] sm:$0xff]
    %v1367 = vld [vmem:[%s1 + $0x10] sm:$0xff]
    %v1368 = vld [vmem:[%s1 + $0x18] sm:$0xff]
    %v1369 = vpack.c.bf16 %v1366, %v1365
    %v1370 = vpack.c.bf16 %v1368, %v1367
    %v1371 = vld [vmem:[%s3 + $0x20] sm:$0xf]
    %v1372 = vld [vmem:[%s3 + $0x24] sm:$0xf]
    %v1373 = vld [vmem:[%s3 + $0x28] sm:$0xf]
    %v1374 = vld [vmem:[%s3 + $0x2c] sm:$0xf]
    %v1375 = vpack.c.bf16 %v1363, %v1361
    %v1376 = vld [vmem:[%s5 + $0x20] sm:$0x1]
    %v1377 = vlaneseq
    %v1378 = vshrl.u32 %v1377, 7
    %v1379 = vsub.s32 0, %v1378
    %v1380 = vrot.slane %v1376, %v1379
    %v1385 = vunpack.c.l.b16 %v1371
    %v1386 = vunpack.c.l.b16 %v1372
    %v1387 = vunpack.c.l.b16 %v1373
    %v1388 = vunpack.c.l.b16 %v1374
    %v1389 = vpack.c.b16 %v1386, %v1385
    %v1390 = vpack.c.b16 %v1388, %v1387
    %v1394 = vsel %vm55, %v1375, 0
    %1396 = vmatprep.subr.bf16.mxu0 0
    %1397 = vmatpush1.bf16.msra.mxu0 0
    %1398 = vmatprep.subr.bf16.mxu0 0
    %1399 = vmatpush1.bf16.msra.mxu0 0
    %1400 = vmatprep.subr.bf16.mxu0 0
    %1401 = vmatpush1.bf16.msra.mxu0 0
    %1402 = vmatprep.subr.bf16.mxu0 0
    %1403 = vmatpush1.bf16.msra.mxu0 0
    %1404 = vmatprep.subr.bf16.mxu0 0
    %1405 = vmatpush1.bf16.msra.mxu0 0
    %1406 = vmatprep.subr.bf16.mxu0 0
    %1407 = vmatpush1.bf16.msra.mxu0 0
    %1408 = vmatprep.subr.bf16.mxu0 0
    %1409 = vmatpush1.bf16.msra.mxu0 %v1390
    %1410 = vmatprep.subr.bf16.mxu0 0
    %1411 = vmatpush1.bf16.msra.mxu0 %v1389
    %1412 = vmatprep.subr.bf16.mxu0 0
    %1413 = vmatpush2.bf16.msra.mxu0 0
    %1414 = vmatprep.subr.bf16.mxu0 0
    %1415 = vmatpush2.bf16.msra.mxu0 0
    %1416 = vmatprep.subr.bf16.mxu0 0
    %1417 = vmatpush2.bf16.msra.mxu0 0
    %1418 = vmatprep.subr.bf16.mxu0 0
    %1419 = vmatpush2.bf16.msra.mxu0 0
    %1420 = vmatprep.subr.bf16.mxu0 0
    %1421 = vmatpush2.bf16.msra.mxu0 0
    %1422 = vmatprep.subr.bf16.mxu0 0
    %1423 = vmatpush2.bf16.msra.mxu0 0
    %1424 = vmatprep.subr.bf16.mxu0 0
    %1425 = vmatpush2.bf16.msra.mxu0 0
    %1426 = vmatprep.subr.bf16.mxu0 0
    %1427 = vmatpush2.bf16.msra.mxu0 0
    %1428 = vmatprep.mubr.bf16.mxu0 0
    %1429 = vmatmul.mubr.bf16.gmra.mxu0 %v1394
    %v1430 = vpop.f32.mrf.mxu0
    %v1431 = vadd.f32 %v1380, %v1430
    %v1432 = vpop.f32.mrf.mxu0
    %v1433 = vpop.f32.mrf.mxu0
    %v1434 = vadd.f32 %v1380, %v1433
    %v1435 = vpop.f32.mrf.mxu0
    %1436 = vdwg.mxu0
    %v1437 = vld [vmem:[%s4 + $0x10] sm:$0xf]
    %v1438 = vld [vmem:[%s4 + $0x14] sm:$0xf]
    %v1439 = vld [vmem:[%s4 + $0x18] sm:$0xf]
    %v1440 = vld [vmem:[%s4 + $0x1c] sm:$0xf]
    %v1441 = vld [vmem:[%s4 + $0x20] sm:$0xf]
    %v1442 = vld [vmem:[%s4 + $0x24] sm:$0xf]
    %v1443 = vld [vmem:[%s6 + $0x8] sm:$0x1]
    %v1444 = vlaneseq
    %v1445 = vshrl.u32 %v1444, 7
    %v1446 = vsub.s32 0, %v1445
    %v1447 = vrot.slane %v1443, %v1446
    %v1454 = vunpack.c.l.b16 %v1437
    %v1455 = vunpack.c.l.b16 %v1438
    %v1456 = vunpack.c.l.b16 %v1439
    %v1457 = vunpack.c.l.b16 %v1440
    %v1458 = vunpack.c.l.b16 %v1441
    %v1459 = vunpack.c.l.b16 %v1442
    %v1460 = vpack.c.b16 %v1455, %v1454
    %v1461 = vpack.c.b16 %v1457, %v1456
    %v1462 = vpack.c.b16 %v1459, %v1458
    %vm1466 = vcmask 392192
    %v1468 = vsel %vm1466, %v1369, 0
    %v1471 = vsel %vm1466, %v1370, 0
    %1473 = vmatprep.subr.bf16.mxu0 0
    %1474 = vmatpush1.bf16.msra.mxu0 0
    %1475 = vmatprep.subr.bf16.mxu0 0
    %1476 = vmatpush1.bf16.msra.mxu0 0
    %1477 = vmatprep.subr.bf16.mxu0 0
    %1478 = vmatpush1.bf16.msra.mxu0 0
    %1479 = vmatprep.subr.bf16.mxu0 0
    %1480 = vmatpush1.bf16.msra.mxu0 0
    %1481 = vmatprep.subr.bf16.mxu0 0
    %1482 = vmatpush1.bf16.msra.mxu0 0
    %1483 = vmatprep.subr.bf16.mxu0 0
    %1484 = vmatpush1.bf16.msra.mxu0 %v1462
    %1485 = vmatprep.subr.bf16.mxu0 0
    %1486 = vmatpush1.bf16.msra.mxu0 %v1461
    %1487 = vmatprep.subr.bf16.mxu0 0
    %1488 = vmatpush1.bf16.msra.mxu0 %v1460
    %1489 = vmatprep.subr.bf16.mxu0 0
    %1490 = vmatpush2.bf16.msra.mxu0 0
    %1491 = vmatprep.subr.bf16.mxu0 0
    %1492 = vmatpush2.bf16.msra.mxu0 0
    %1493 = vmatprep.subr.bf16.mxu0 0
    %1494 = vmatpush2.bf16.msra.mxu0 0
    %1495 = vmatprep.subr.bf16.mxu0 0
    %1496 = vmatpush2.bf16.msra.mxu0 0
    %1497 = vmatprep.subr.bf16.mxu0 0
    %1498 = vmatpush2.bf16.msra.mxu0 0
    %1499 = vmatprep.subr.bf16.mxu0 0
    %1500 = vmatpush2.bf16.msra.mxu0 0
    %1501 = vmatprep.subr.bf16.mxu0 0
    %1502 = vmatpush2.bf16.msra.mxu0 0
    %1503 = vmatprep.subr.bf16.mxu0 0
    %1504 = vmatpush2.bf16.msra.mxu0 0
    %1505 = vmatprep.mubr.bf16.mxu0 0
    %1506 = vmatmul.mubr.bf16.gmra.mxu0 %v1468
    %v1507 = vpop.f32.mrf.mxu0
    %v1508 = vadd.f32 %v1447, %v1507
    %v1509 = vpop.f32.mrf.mxu0
    %v1510 = vpop.f32.mrf.mxu0
    %v1511 = vadd.f32 %v1447, %v1510
    %v1512 = vpop.f32.mrf.mxu0
    %1513 = vmatprep.mubr.bf16.mxu0 0
    %1514 = vmatmul.mubr.bf16.gmra.mxu0 %v1471
    %v1515 = vpop.f32.mrf.mxu0
    %v1516 = vadd.f32 %v1447, %v1515
    %v1517 = vpop.f32.mrf.mxu0
    %v1518 = vpop.f32.mrf.mxu0
    %v1519 = vadd.f32 %v1447, %v1518
    %v1520 = vpop.f32.mrf.mxu0
    %1521 = vdwg.mxu0
    %v1522 = vpack.c.bf16 %v1431, %v1431
    %v1523 = vpack.c.bf16 %v1434, %v1434
    %v1524 = vpack.c.bf16 %v1511, %v1508
    %v1525 = vpack.c.bf16 %v1519, %v1516
    %v1527 = vsel %vm185, %v1522, 0
    %v1530 = vsel %vm185, %v1524, 0
    %1532 = vmatprep.subr.bf16.mxu0 0
    %1533 = vmatpush1.bf16.xpose.msra.mxu0 0
    %1534 = vmatprep.subr.bf16.mxu0 0
    %1535 = vmatpush1.bf16.xpose.msra.mxu0 0
    %1536 = vmatprep.subr.bf16.mxu0 0
    %1537 = vmatpush1.bf16.xpose.msra.mxu0 0
    %1538 = vmatprep.subr.bf16.mxu0 0
    %1539 = vmatpush1.bf16.xpose.msra.mxu0 0
    %1540 = vmatprep.subr.bf16.mxu0 0
    %1541 = vmatpush1.bf16.xpose.msra.mxu0 0
    %1542 = vmatprep.subr.bf16.mxu0 0
    %1543 = vmatpush1.bf16.xpose.msra.mxu0 0
    %1544 = vmatprep.subr.bf16.mxu0 0
    %1545 = vmatpush1.bf16.xpose.msra.mxu0 0
    %1546 = vmatprep.subr.bf16.mxu0 0
    %1547 = vmatpush1.bf16.xpose.msra.mxu0 %v1530
    %1548 = vmatprep.subr.bf16.mxu0 0
    %1549 = vmatpush2.bf16.xpose.msra.mxu0 0
    %1550 = vmatprep.subr.bf16.mxu0 0
    %1551 = vmatpush2.bf16.xpose.msra.mxu0 0
    %1552 = vmatprep.subr.bf16.mxu0 0
    %1553 = vmatpush2.bf16.xpose.msra.mxu0 0
    %1554 = vmatprep.subr.bf16.mxu0 0
    %1555 = vmatpush2.bf16.xpose.msra.mxu0 0
    %1556 = vmatprep.subr.bf16.mxu0 0
    %1557 = vmatpush2.bf16.xpose.msra.mxu0 0
    %1558 = vmatprep.subr.bf16.mxu0 0
    %1559 = vmatpush2.bf16.xpose.msra.mxu0 0
    %1560 = vmatprep.subr.bf16.mxu0 0
    %1561 = vmatpush2.bf16.xpose.msra.mxu0 0
    %1562 = vmatprep.subr.bf16.mxu0 0
    %1563 = vmatpush2.bf16.xpose.msra.mxu0 0
    %1564 = vmatprep.mubr.bf16.mxu0 0
    %1565 = vmatmul.mubr.bf16.gmra.mxu0 %v1527
    %v1566 = vpop.f32.mrf.mxu0
    %v1567 = vadd.f32 0.0, %v1566
    %v1568 = vpop.f32.mrf.mxu0
    %v1569 = vpop.f32.mrf.mxu0
    %v1570 = vpop.f32.mrf.mxu0
    %1571 = vdwg.mxu0
    %v1573 = vsel %vm185, %v1523, 0
    %v1576 = vsel %vm185, %v1525, 0
    %1578 = vmatprep.subr.bf16.mxu0 0
    %1579 = vmatpush1.bf16.xpose.msra.mxu0 0
    %1580 = vmatprep.subr.bf16.mxu0 0
    %1581 = vmatpush1.bf16.xpose.msra.mxu0 0
    %1582 = vmatprep.subr.bf16.mxu0 0
    %1583 = vmatpush1.bf16.xpose.msra.mxu0 0
    %1584 = vmatprep.subr.bf16.mxu0 0
    %1585 = vmatpush1.bf16.xpose.msra.mxu0 0
    %1586 = vmatprep.subr.bf16.mxu0 0
    %1587 = vmatpush1.bf16.xpose.msra.mxu0 0
    %1588 = vmatprep.subr.bf16.mxu0 0
    %1589 = vmatpush1.bf16.xpose.msra.mxu0 0
    %1590 = vmatprep.subr.bf16.mxu0 0
    %1591 = vmatpush1.bf16.xpose.msra.mxu0 0
    %1592 = vmatprep.subr.bf16.mxu0 0
    %1593 = vmatpush1.bf16.xpose.msra.mxu0 %v1576
    %1594 = vmatprep.subr.bf16.mxu0 0
    %1595 = vmatpush2.bf16.xpose.msra.mxu0 0
    %1596 = vmatprep.subr.bf16.mxu0 0
    %1597 = vmatpush2.bf16.xpose.msra.mxu0 0
    %1598 = vmatprep.subr.bf16.mxu0 0
    %1599 = vmatpush2.bf16.xpose.msra.mxu0 0
    %1600 = vmatprep.subr.bf16.mxu0 0
    %1601 = vmatpush2.bf16.xpose.msra.mxu0 0
    %1602 = vmatprep.subr.bf16.mxu0 0
    %1603 = vmatpush2.bf16.xpose.msra.mxu0 0
    %1604 = vmatprep.subr.bf16.mxu0 0
    %1605 = vmatpush2.bf16.xpose.msra.mxu0 0
    %1606 = vmatprep.subr.bf16.mxu0 0
    %1607 = vmatpush2.bf16.xpose.msra.mxu0 0
    %1608 = vmatprep.subr.bf16.mxu0 0
    %1609 = vmatpush2.bf16.xpose.msra.mxu0 0
    %1610 = vmatprep.mubr.bf16.mxu0 0
    %1611 = vmatmul.mubr.bf16.gmra.mxu0 %v1573
    %v1612 = vpop.f32.mrf.mxu0
    %v1613 = vadd.f32 0.0, %v1612
    %v1614 = vpop.f32.mrf.mxu0
    %v1615 = vpop.f32.mrf.mxu0
    %v1616 = vpop.f32.mrf.mxu0
    %1617 = vdwg.mxu0
    %v1618 = vsel %vm280, %v1567, -inf
    %1619 = vmax.xlane.f32.xlu0 %v1618
    %v1620 = vpop.xlane.xlu0 %1619
    %v1621 = vsel %vm280, %v1613, -inf
    %1622 = vmax.xlane.f32.xlu0 %v1621
    %v1623 = vpop.xlane.xlu0 %1622
    %v1624 = vsub.f32 %v1567, %v1620
    %v1625 = vsub.f32 %v1613, %v1623
    %v1626 = vmul.f32 %v1624, 1.442695
    %v1627 = vpow.pop %v1626
    %v1628 = vmul.f32 %v1625, 1.442695
    %v1629 = vpow.pop %v1628
    %v1630 = vsel %vm280, %v1627, 0.0
    %1631 = vadd.xlane.f32.xlu0 %v1630
    %v1632 = vpop.xlane.xlu0 %1631
    %v1633 = vsel %vm280, %v1629, 0.0
    %1634 = vadd.xlane.f32.xlu0 %v1633
    %v1635 = vpop.xlane.xlu0 %1634
    %v1636 = vrcp.pop %v1632
    %v1637 = vrcp.pop %v1635
    %v1638 = vmul.f32 %v1627, %v1636
    %v1639 = vmul.f32 %v1629, %v1637
    %v1640 = vpack.c.bf16 %v1638, %v1638
    %v1641 = vpack.c.bf16 %v1639, %v1639
    %1643 = vrot.lane.b32.xlu0 %v1524, 96
    %v1644 = vpop.permute.xlu0 %1643
    %v1647 = vsel %vm280, %v1640, 0
    %1649 = vmatprep.subr.bf16.mxu0 0
    %1650 = vmatpush1.bf16.msra.mxu0 0
    %1651 = vmatprep.subr.bf16.mxu0 0
    %1652 = vmatpush1.bf16.msra.mxu0 0
    %1653 = vmatprep.subr.bf16.mxu0 0
    %1654 = vmatpush1.bf16.msra.mxu0 0
    %1655 = vmatprep.subr.bf16.mxu0 0
    %1656 = vmatpush1.bf16.msra.mxu0 0
    %1657 = vmatprep.subr.bf16.mxu0 0
    %1658 = vmatpush1.bf16.msra.mxu0 0
    %1659 = vmatprep.subr.bf16.mxu0 0
    %1660 = vmatpush1.bf16.msra.mxu0 0
    %1661 = vmatprep.subr.bf16.mxu0 0
    %1662 = vmatpush1.bf16.msra.mxu0 0
    %1663 = vmatprep.subr.bf16.mxu0 0
    %1664 = vmatpush1.bf16.msra.mxu0 %v1644
    %1665 = vmatprep.subr.bf16.mxu0 0
    %1666 = vmatpush2.bf16.msra.mxu0 0
    %1667 = vmatprep.subr.bf16.mxu0 0
    %1668 = vmatpush2.bf16.msra.mxu0 0
    %1669 = vmatprep.subr.bf16.mxu0 0
    %1670 = vmatpush2.bf16.msra.mxu0 0
    %1671 = vmatprep.subr.bf16.mxu0 0
    %1672 = vmatpush2.bf16.msra.mxu0 0
    %1673 = vmatprep.subr.bf16.mxu0 0
    %1674 = vmatpush2.bf16.msra.mxu0 0
    %1675 = vmatprep.subr.bf16.mxu0 0
    %1676 = vmatpush2.bf16.msra.mxu0 0
    %1677 = vmatprep.subr.bf16.mxu0 0
    %1678 = vmatpush2.bf16.msra.mxu0 0
    %1679 = vmatprep.subr.bf16.mxu0 0
    %1680 = vmatpush2.bf16.msra.mxu0 0
    %1681 = vmatprep.mubr.bf16.mxu0 0
    %1682 = vmatmul.mubr.bf16.gmra.mxu0 %v1647
    %v1683 = vpop.f32.mrf.mxu0
    %v1684 = vadd.f32 0.0, %v1683
    %v1685 = vpop.f32.mrf.mxu0
    %v1686 = vpop.f32.mrf.mxu0
    %v1687 = vpop.f32.mrf.mxu0
    %1688 = vdwg.mxu0
    %1690 = vrot.lane.b32.xlu0 %v1525, 96
    %v1691 = vpop.permute.xlu0 %1690
    %v1694 = vsel %vm280, %v1641, 0
    %1696 = vmatprep.subr.bf16.mxu0 0
    %1697 = vmatpush1.bf16.msra.mxu0 0
    %1698 = vmatprep.subr.bf16.mxu0 0
    %1699 = vmatpush1.bf16.msra.mxu0 0
    %1700 = vmatprep.subr.bf16.mxu0 0
    %1701 = vmatpush1.bf16.msra.mxu0 0
    %1702 = vmatprep.subr.bf16.mxu0 0
    %1703 = vmatpush1.bf16.msra.mxu0 0
    %1704 = vmatprep.subr.bf16.mxu0 0
    %1705 = vmatpush1.bf16.msra.mxu0 0
    %1706 = vmatprep.subr.bf16.mxu0 0
    %1707 = vmatpush1.bf16.msra.mxu0 0
    %1708 = vmatprep.subr.bf16.mxu0 0
    %1709 = vmatpush1.bf16.msra.mxu0 0
    %1710 = vmatprep.subr.bf16.mxu0 0
    %1711 = vmatpush1.bf16.msra.mxu0 %v1691
    %1712 = vmatprep.subr.bf16.mxu0 0
    %1713 = vmatpush2.bf16.msra.mxu0 0
    %1714 = vmatprep.subr.bf16.mxu0 0
    %1715 = vmatpush2.bf16.msra.mxu0 0
    %1716 = vmatprep.subr.bf16.mxu0 0
    %1717 = vmatpush2.bf16.msra.mxu0 0
    %1718 = vmatprep.subr.bf16.mxu0 0
    %1719 = vmatpush2.bf16.msra.mxu0 0
    %1720 = vmatprep.subr.bf16.mxu0 0
    %1721 = vmatpush2.bf16.msra.mxu0 0
    %1722 = vmatprep.subr.bf16.mxu0 0
    %1723 = vmatpush2.bf16.msra.mxu0 0
    %1724 = vmatprep.subr.bf16.mxu0 0
    %1725 = vmatpush2.bf16.msra.mxu0 0
    %1726 = vmatprep.subr.bf16.mxu0 0
    %1727 = vmatpush2.bf16.msra.mxu0 0
    %1728 = vmatprep.mubr.bf16.mxu0 0
    %1729 = vmatmul.mubr.bf16.gmra.mxu0 %v1694
    %v1730 = vpop.f32.mrf.mxu0
    %v1731 = vadd.f32 0.0, %v1730
    %v1732 = vpop.f32.mrf.mxu0
    %v1733 = vpop.f32.mrf.mxu0
    %v1734 = vpop.f32.mrf.mxu0
    %1735 = vdwg.mxu0
    %1737 = vrot.lane.b32.xlu0 %v1522, 120
    %v1738 = vpop.permute.xlu0 %1737
    %1739 = vrot.lane.b32.xlu0 %v1524, 120
    %v1740 = vpop.permute.xlu0 %1739
    %v1742 = vsel %vm185, %v1738, 0
    %v1745 = vsel %vm185, %v1740, 0
    %1747 = vmatprep.subr.bf16.mxu0 0
    %1748 = vmatpush1.bf16.xpose.msra.mxu0 0
    %1749 = vmatprep.subr.bf16.mxu0 0
    %1750 = vmatpush1.bf16.xpose.msra.mxu0 0
    %1751 = vmatprep.subr.bf16.mxu0 0
    %1752 = vmatpush1.bf16.xpose.msra.mxu0 0
    %1753 = vmatprep.subr.bf16.mxu0 0
    %1754 = vmatpush1.bf16.xpose.msra.mxu0 0
    %1755 = vmatprep.subr.bf16.mxu0 0
    %1756 = vmatpush1.bf16.xpose.msra.mxu0 0
    %1757 = vmatprep.subr.bf16.mxu0 0
    %1758 = vmatpush1.bf16.xpose.msra.mxu0 0
    %1759 = vmatprep.subr.bf16.mxu0 0
    %1760 = vmatpush1.bf16.xpose.msra.mxu0 0
    %1761 = vmatprep.subr.bf16.mxu0 0
    %1762 = vmatpush1.bf16.xpose.msra.mxu0 %v1745
    %1763 = vmatprep.subr.bf16.mxu0 0
    %1764 = vmatpush2.bf16.xpose.msra.mxu0 0
    %1765 = vmatprep.subr.bf16.mxu0 0
    %1766 = vmatpush2.bf16.xpose.msra.mxu0 0
    %1767 = vmatprep.subr.bf16.mxu0 0
    %1768 = vmatpush2.bf16.xpose.msra.mxu0 0
    %1769 = vmatprep.subr.bf16.mxu0 0
    %1770 = vmatpush2.bf16.xpose.msra.mxu0 0
    %1771 = vmatprep.subr.bf16.mxu0 0
    %1772 = vmatpush2.bf16.xpose.msra.mxu0 0
    %1773 = vmatprep.subr.bf16.mxu0 0
    %1774 = vmatpush2.bf16.xpose.msra.mxu0 0
    %1775 = vmatprep.subr.bf16.mxu0 0
    %1776 = vmatpush2.bf16.xpose.msra.mxu0 0
    %1777 = vmatprep.subr.bf16.mxu0 0
    %1778 = vmatpush2.bf16.xpose.msra.mxu0 0
    %1779 = vmatprep.mubr.bf16.mxu0 0
    %1780 = vmatmul.mubr.bf16.gmra.mxu0 %v1742
    %v1781 = vpop.f32.mrf.mxu0
    %v1782 = vadd.f32 0.0, %v1781
    %v1783 = vpop.f32.mrf.mxu0
    %v1784 = vpop.f32.mrf.mxu0
    %v1785 = vpop.f32.mrf.mxu0
    %1786 = vdwg.mxu0
    %1788 = vrot.lane.b32.xlu0 %v1523, 120
    %v1789 = vpop.permute.xlu0 %1788
    %1790 = vrot.lane.b32.xlu0 %v1525, 120
    %v1791 = vpop.permute.xlu0 %1790
    %v1793 = vsel %vm185, %v1789, 0
    %v1796 = vsel %vm185, %v1791, 0
    %1798 = vmatprep.subr.bf16.mxu0 0
    %1799 = vmatpush1.bf16.xpose.msra.mxu0 0
    %1800 = vmatprep.subr.bf16.mxu0 0
    %1801 = vmatpush1.bf16.xpose.msra.mxu0 0
    %1802 = vmatprep.subr.bf16.mxu0 0
    %1803 = vmatpush1.bf16.xpose.msra.mxu0 0
    %1804 = vmatprep.subr.bf16.mxu0 0
    %1805 = vmatpush1.bf16.xpose.msra.mxu0 0
    %1806 = vmatprep.subr.bf16.mxu0 0
    %1807 = vmatpush1.bf16.xpose.msra.mxu0 0
    %1808 = vmatprep.subr.bf16.mxu0 0
    %1809 = vmatpush1.bf16.xpose.msra.mxu0 0
    %1810 = vmatprep.subr.bf16.mxu0 0
    %1811 = vmatpush1.bf16.xpose.msra.mxu0 0
    %1812 = vmatprep.subr.bf16.mxu0 0
    %1813 = vmatpush1.bf16.xpose.msra.mxu0 %v1796
    %1814 = vmatprep.subr.bf16.mxu0 0
    %1815 = vmatpush2.bf16.xpose.msra.mxu0 0
    %1816 = vmatprep.subr.bf16.mxu0 0
    %1817 = vmatpush2.bf16.xpose.msra.mxu0 0
    %1818 = vmatprep.subr.bf16.mxu0 0
    %1819 = vmatpush2.bf16.xpose.msra.mxu0 0
    %1820 = vmatprep.subr.bf16.mxu0 0
    %1821 = vmatpush2.bf16.xpose.msra.mxu0 0
    %1822 = vmatprep.subr.bf16.mxu0 0
    %1823 = vmatpush2.bf16.xpose.msra.mxu0 0
    %1824 = vmatprep.subr.bf16.mxu0 0
    %1825 = vmatpush2.bf16.xpose.msra.mxu0 0
    %1826 = vmatprep.subr.bf16.mxu0 0
    %1827 = vmatpush2.bf16.xpose.msra.mxu0 0
    %1828 = vmatprep.subr.bf16.mxu0 0
    %1829 = vmatpush2.bf16.xpose.msra.mxu0 0
    %1830 = vmatprep.mubr.bf16.mxu0 0
    %1831 = vmatmul.mubr.bf16.gmra.mxu0 %v1793
    %v1832 = vpop.f32.mrf.mxu0
    %v1833 = vadd.f32 0.0, %v1832
    %v1834 = vpop.f32.mrf.mxu0
    %v1835 = vpop.f32.mrf.mxu0
    %v1836 = vpop.f32.mrf.mxu0
    %1837 = vdwg.mxu0
    %v1838 = vsel %vm280, %v1782, -inf
    %1839 = vmax.xlane.f32.xlu0 %v1838
    %v1840 = vpop.xlane.xlu0 %1839
    %v1841 = vsel %vm280, %v1833, -inf
    %1842 = vmax.xlane.f32.xlu0 %v1841
    %v1843 = vpop.xlane.xlu0 %1842
    %v1844 = vsub.f32 %v1782, %v1840
    %v1845 = vsub.f32 %v1833, %v1843
    %v1846 = vmul.f32 %v1844, 1.442695
    %v1847 = vpow.pop %v1846
    %v1848 = vmul.f32 %v1845, 1.442695
    %v1849 = vpow.pop %v1848
    %v1850 = vsel %vm280, %v1847, 0.0
    %1851 = vadd.xlane.f32.xlu0 %v1850
    %v1852 = vpop.xlane.xlu0 %1851
    %v1853 = vsel %vm280, %v1849, 0.0
    %1854 = vadd.xlane.f32.xlu0 %v1853
    %v1855 = vpop.xlane.xlu0 %1854
    %v1856 = vrcp.pop %v1852
    %v1857 = vrcp.pop %v1855
    %v1858 = vmul.f32 %v1847, %v1856
    %v1859 = vmul.f32 %v1849, %v1857
    %v1860 = vpack.c.bf16 %v1858, %v1858
    %v1861 = vpack.c.bf16 %v1859, %v1859
    %1862 = vrot.lane.b32.xlu0 %v1524, 88
    %v1863 = vpop.permute.xlu0 %1862
    %v1866 = vsel %vm280, %v1860, 0
    %1868 = vmatprep.subr.bf16.mxu0 0
    %1869 = vmatpush1.bf16.msra.mxu0 0
    %1870 = vmatprep.subr.bf16.mxu0 0
    %1871 = vmatpush1.bf16.msra.mxu0 0
    %1872 = vmatprep.subr.bf16.mxu0 0
    %1873 = vmatpush1.bf16.msra.mxu0 0
    %1874 = vmatprep.subr.bf16.mxu0 0
    %1875 = vmatpush1.bf16.msra.mxu0 0
    %1876 = vmatprep.subr.bf16.mxu0 0
    %1877 = vmatpush1.bf16.msra.mxu0 0
    %1878 = vmatprep.subr.bf16.mxu0 0
    %1879 = vmatpush1.bf16.msra.mxu0 0
    %1880 = vmatprep.subr.bf16.mxu0 0
    %1881 = vmatpush1.bf16.msra.mxu0 0
    %1882 = vmatprep.subr.bf16.mxu0 0
    %1883 = vmatpush1.bf16.msra.mxu0 %v1863
    %1884 = vmatprep.subr.bf16.mxu0 0
    %1885 = vmatpush2.bf16.msra.mxu0 0
    %1886 = vmatprep.subr.bf16.mxu0 0
    %1887 = vmatpush2.bf16.msra.mxu0 0
    %1888 = vmatprep.subr.bf16.mxu0 0
    %1889 = vmatpush2.bf16.msra.mxu0 0
    %1890 = vmatprep.subr.bf16.mxu0 0
    %1891 = vmatpush2.bf16.msra.mxu0 0
    %1892 = vmatprep.subr.bf16.mxu0 0
    %1893 = vmatpush2.bf16.msra.mxu0 0
    %1894 = vmatprep.subr.bf16.mxu0 0
    %1895 = vmatpush2.bf16.msra.mxu0 0
    %1896 = vmatprep.subr.bf16.mxu0 0
    %1897 = vmatpush2.bf16.msra.mxu0 0
    %1898 = vmatprep.subr.bf16.mxu0 0
    %1899 = vmatpush2.bf16.msra.mxu0 0
    %1900 = vmatprep.mubr.bf16.mxu0 0
    %1901 = vmatmul.mubr.bf16.gmra.mxu0 %v1866
    %v1902 = vpop.f32.mrf.mxu0
    %v1903 = vadd.f32 0.0, %v1902
    %v1904 = vpop.f32.mrf.mxu0
    %v1905 = vpop.f32.mrf.mxu0
    %v1906 = vpop.f32.mrf.mxu0
    %1907 = vdwg.mxu0
    %1908 = vrot.lane.b32.xlu0 %v1525, 88
    %v1909 = vpop.permute.xlu0 %1908
    %v1912 = vsel %vm280, %v1861, 0
    %1914 = vmatprep.subr.bf16.mxu0 0
    %1915 = vmatpush1.bf16.msra.mxu0 0
    %1916 = vmatprep.subr.bf16.mxu0 0
    %1917 = vmatpush1.bf16.msra.mxu0 0
    %1918 = vmatprep.subr.bf16.mxu0 0
    %1919 = vmatpush1.bf16.msra.mxu0 0
    %1920 = vmatprep.subr.bf16.mxu0 0
    %1921 = vmatpush1.bf16.msra.mxu0 0
    %1922 = vmatprep.subr.bf16.mxu0 0
    %1923 = vmatpush1.bf16.msra.mxu0 0
    %1924 = vmatprep.subr.bf16.mxu0 0
    %1925 = vmatpush1.bf16.msra.mxu0 0
    %1926 = vmatprep.subr.bf16.mxu0 0
    %1927 = vmatpush1.bf16.msra.mxu0 0
    %1928 = vmatprep.subr.bf16.mxu0 0
    %1929 = vmatpush1.bf16.msra.mxu0 %v1909
    %1930 = vmatprep.subr.bf16.mxu0 0
    %1931 = vmatpush2.bf16.msra.mxu0 0
    %1932 = vmatprep.subr.bf16.mxu0 0
    %1933 = vmatpush2.bf16.msra.mxu0 0
    %1934 = vmatprep.subr.bf16.mxu0 0
    %1935 = vmatpush2.bf16.msra.mxu0 0
    %1936 = vmatprep.subr.bf16.mxu0 0
    %1937 = vmatpush2.bf16.msra.mxu0 0
    %1938 = vmatprep.subr.bf16.mxu0 0
    %1939 = vmatpush2.bf16.msra.mxu0 0
    %1940 = vmatprep.subr.bf16.mxu0 0
    %1941 = vmatpush2.bf16.msra.mxu0 0
    %1942 = vmatprep.subr.bf16.mxu0 0
    %1943 = vmatpush2.bf16.msra.mxu0 0
    %1944 = vmatprep.subr.bf16.mxu0 0
    %1945 = vmatpush2.bf16.msra.mxu0 0
    %1946 = vmatprep.mubr.bf16.mxu0 0
    %1947 = vmatmul.mubr.bf16.gmra.mxu0 %v1912
    %v1948 = vpop.f32.mrf.mxu0
    %v1949 = vadd.f32 0.0, %v1948
    %v1950 = vpop.f32.mrf.mxu0
    %v1951 = vpop.f32.mrf.mxu0
    %v1952 = vpop.f32.mrf.mxu0
    %1953 = vdwg.mxu0
    %1954 = vrot.lane.b32.xlu0 %v1522, 112
    %v1955 = vpop.permute.xlu0 %1954
    %1956 = vrot.lane.b32.xlu0 %v1524, 112
    %v1957 = vpop.permute.xlu0 %1956
    %v1959 = vsel %vm185, %v1955, 0
    %v1962 = vsel %vm185, %v1957, 0
    %1964 = vmatprep.subr.bf16.mxu0 0
    %1965 = vmatpush1.bf16.xpose.msra.mxu0 0
    %1966 = vmatprep.subr.bf16.mxu0 0
    %1967 = vmatpush1.bf16.xpose.msra.mxu0 0
    %1968 = vmatprep.subr.bf16.mxu0 0
    %1969 = vmatpush1.bf16.xpose.msra.mxu0 0
    %1970 = vmatprep.subr.bf16.mxu0 0
    %1971 = vmatpush1.bf16.xpose.msra.mxu0 0
    %1972 = vmatprep.subr.bf16.mxu0 0
    %1973 = vmatpush1.bf16.xpose.msra.mxu0 0
    %1974 = vmatprep.subr.bf16.mxu0 0
    %1975 = vmatpush1.bf16.xpose.msra.mxu0 0
    %1976 = vmatprep.subr.bf16.mxu0 0
    %1977 = vmatpush1.bf16.xpose.msra.mxu0 0
    %1978 = vmatprep.subr.bf16.mxu0 0
    %1979 = vmatpush1.bf16.xpose.msra.mxu0 %v1962
    %1980 = vmatprep.subr.bf16.mxu0 0
    %1981 = vmatpush2.bf16.xpose.msra.mxu0 0
    %1982 = vmatprep.subr.bf16.mxu0 0
    %1983 = vmatpush2.bf16.xpose.msra.mxu0 0
    %1984 = vmatprep.subr.bf16.mxu0 0
    %1985 = vmatpush2.bf16.xpose.msra.mxu0 0
    %1986 = vmatprep.subr.bf16.mxu0 0
    %1987 = vmatpush2.bf16.xpose.msra.mxu0 0
    %1988 = vmatprep.subr.bf16.mxu0 0
    %1989 = vmatpush2.bf16.xpose.msra.mxu0 0
    %1990 = vmatprep.subr.bf16.mxu0 0
    %1991 = vmatpush2.bf16.xpose.msra.mxu0 0
    %1992 = vmatprep.subr.bf16.mxu0 0
    %1993 = vmatpush2.bf16.xpose.msra.mxu0 0
    %1994 = vmatprep.subr.bf16.mxu0 0
    %1995 = vmatpush2.bf16.xpose.msra.mxu0 0
    %1996 = vmatprep.mubr.bf16.mxu0 0
    %1997 = vmatmul.mubr.bf16.gmra.mxu0 %v1959
    %v1998 = vpop.f32.mrf.mxu0
    %v1999 = vadd.f32 0.0, %v1998
    %v2000 = vpop.f32.mrf.mxu0
    %v2001 = vpop.f32.mrf.mxu0
    %v2002 = vpop.f32.mrf.mxu0
    %2003 = vdwg.mxu0
    %2004 = vrot.lane.b32.xlu0 %v1523, 112
    %v2005 = vpop.permute.xlu0 %2004
    %2006 = vrot.lane.b32.xlu0 %v1525, 112
    %v2007 = vpop.permute.xlu0 %2006
    %v2009 = vsel %vm185, %v2005, 0
    %v2012 = vsel %vm185, %v2007, 0
    %2014 = vmatprep.subr.bf16.mxu0 0
    %2015 = vmatpush1.bf16.xpose.msra.mxu0 0
    %2016 = vmatprep.subr.bf16.mxu0 0
    %2017 = vmatpush1.bf16.xpose.msra.mxu0 0
    %2018 = vmatprep.subr.bf16.mxu0 0
    %2019 = vmatpush1.bf16.xpose.msra.mxu0 0
    %2020 = vmatprep.subr.bf16.mxu0 0
    %2021 = vmatpush1.bf16.xpose.msra.mxu0 0
    %2022 = vmatprep.subr.bf16.mxu0 0
    %2023 = vmatpush1.bf16.xpose.msra.mxu0 0
    %2024 = vmatprep.subr.bf16.mxu0 0
    %2025 = vmatpush1.bf16.xpose.msra.mxu0 0
    %2026 = vmatprep.subr.bf16.mxu0 0
    %2027 = vmatpush1.bf16.xpose.msra.mxu0 0
    %2028 = vmatprep.subr.bf16.mxu0 0
    %2029 = vmatpush1.bf16.xpose.msra.mxu0 %v2012
    %2030 = vmatprep.subr.bf16.mxu0 0
    %2031 = vmatpush2.bf16.xpose.msra.mxu0 0
    %2032 = vmatprep.subr.bf16.mxu0 0
    %2033 = vmatpush2.bf16.xpose.msra.mxu0 0
    %2034 = vmatprep.subr.bf16.mxu0 0
    %2035 = vmatpush2.bf16.xpose.msra.mxu0 0
    %2036 = vmatprep.subr.bf16.mxu0 0
    %2037 = vmatpush2.bf16.xpose.msra.mxu0 0
    %2038 = vmatprep.subr.bf16.mxu0 0
    %2039 = vmatpush2.bf16.xpose.msra.mxu0 0
    %2040 = vmatprep.subr.bf16.mxu0 0
    %2041 = vmatpush2.bf16.xpose.msra.mxu0 0
    %2042 = vmatprep.subr.bf16.mxu0 0
    %2043 = vmatpush2.bf16.xpose.msra.mxu0 0
    %2044 = vmatprep.subr.bf16.mxu0 0
    %2045 = vmatpush2.bf16.xpose.msra.mxu0 0
    %2046 = vmatprep.mubr.bf16.mxu0 0
    %2047 = vmatmul.mubr.bf16.gmra.mxu0 %v2009
    %v2048 = vpop.f32.mrf.mxu0
    %v2049 = vadd.f32 0.0, %v2048
    %v2050 = vpop.f32.mrf.mxu0
    %v2051 = vpop.f32.mrf.mxu0
    %v2052 = vpop.f32.mrf.mxu0
    %2053 = vdwg.mxu0
    %v2054 = vsel %vm280, %v1999, -inf
    %2055 = vmax.xlane.f32.xlu0 %v2054
    %v2056 = vpop.xlane.xlu0 %2055
    %v2057 = vsel %vm280, %v2049, -inf
    %2058 = vmax.xlane.f32.xlu0 %v2057
    %v2059 = vpop.xlane.xlu0 %2058
    %v2060 = vsub.f32 %v1999, %v2056
    %v2061 = vsub.f32 %v2049, %v2059
    %v2062 = vmul.f32 %v2060, 1.442695
    %v2063 = vpow.pop %v2062
    %v2064 = vmul.f32 %v2061, 1.442695
    %v2065 = vpow.pop %v2064
    %v2066 = vsel %vm280, %v2063, 0.0
    %2067 = vadd.xlane.f32.xlu0 %v2066
    %v2068 = vpop.xlane.xlu0 %2067
    %v2069 = vsel %vm280, %v2065, 0.0
    %2070 = vadd.xlane.f32.xlu0 %v2069
    %v2071 = vpop.xlane.xlu0 %2070
    %v2072 = vrcp.pop %v2068
    %v2073 = vrcp.pop %v2071
    %v2074 = vmul.f32 %v2063, %v2072
    %v2075 = vmul.f32 %v2065, %v2073
    %v2076 = vpack.c.bf16 %v2074, %v2074
    %v2077 = vpack.c.bf16 %v2075, %v2075
    %2078 = vrot.lane.b32.xlu0 %v1524, 80
    %v2079 = vpop.permute.xlu0 %2078
    %v2082 = vsel %vm280, %v2076, 0
    %2084 = vmatprep.subr.bf16.mxu0 0
    %2085 = vmatpush1.bf16.msra.mxu0 0
    %2086 = vmatprep.subr.bf16.mxu0 0
    %2087 = vmatpush1.bf16.msra.mxu0 0
    %2088 = vmatprep.subr.bf16.mxu0 0
    %2089 = vmatpush1.bf16.msra.mxu0 0
    %2090 = vmatprep.subr.bf16.mxu0 0
    %2091 = vmatpush1.bf16.msra.mxu0 0
    %2092 = vmatprep.subr.bf16.mxu0 0
    %2093 = vmatpush1.bf16.msra.mxu0 0
    %2094 = vmatprep.subr.bf16.mxu0 0
    %2095 = vmatpush1.bf16.msra.mxu0 0
    %2096 = vmatprep.subr.bf16.mxu0 0
    %2097 = vmatpush1.bf16.msra.mxu0 0
    %2098 = vmatprep.subr.bf16.mxu0 0
    %2099 = vmatpush1.bf16.msra.mxu0 %v2079
    %2100 = vmatprep.subr.bf16.mxu0 0
    %2101 = vmatpush2.bf16.msra.mxu0 0
    %2102 = vmatprep.subr.bf16.mxu0 0
    %2103 = vmatpush2.bf16.msra.mxu0 0
    %2104 = vmatprep.subr.bf16.mxu0 0
    %2105 = vmatpush2.bf16.msra.mxu0 0
    %2106 = vmatprep.subr.bf16.mxu0 0
    %2107 = vmatpush2.bf16.msra.mxu0 0
    %2108 = vmatprep.subr.bf16.mxu0 0
    %2109 = vmatpush2.bf16.msra.mxu0 0
    %2110 = vmatprep.subr.bf16.mxu0 0
    %2111 = vmatpush2.bf16.msra.mxu0 0
    %2112 = vmatprep.subr.bf16.mxu0 0
    %2113 = vmatpush2.bf16.msra.mxu0 0
    %2114 = vmatprep.subr.bf16.mxu0 0
    %2115 = vmatpush2.bf16.msra.mxu0 0
    %2116 = vmatprep.mubr.bf16.mxu0 0
    %2117 = vmatmul.mubr.bf16.gmra.mxu0 %v2082
    %v2118 = vpop.f32.mrf.mxu0
    %v2119 = vadd.f32 0.0, %v2118
    %v2120 = vpop.f32.mrf.mxu0
    %v2121 = vpop.f32.mrf.mxu0
    %v2122 = vpop.f32.mrf.mxu0
    %2123 = vdwg.mxu0
    %2124 = vrot.lane.b32.xlu0 %v1525, 80
    %v2125 = vpop.permute.xlu0 %2124
    %v2128 = vsel %vm280, %v2077, 0
    %2130 = vmatprep.subr.bf16.mxu0 0
    %2131 = vmatpush1.bf16.msra.mxu0 0
    %2132 = vmatprep.subr.bf16.mxu0 0
    %2133 = vmatpush1.bf16.msra.mxu0 0
    %2134 = vmatprep.subr.bf16.mxu0 0
    %2135 = vmatpush1.bf16.msra.mxu0 0
    %2136 = vmatprep.subr.bf16.mxu0 0
    %2137 = vmatpush1.bf16.msra.mxu0 0
    %2138 = vmatprep.subr.bf16.mxu0 0
    %2139 = vmatpush1.bf16.msra.mxu0 0
    %2140 = vmatprep.subr.bf16.mxu0 0
    %2141 = vmatpush1.bf16.msra.mxu0 0
    %2142 = vmatprep.subr.bf16.mxu0 0
    %2143 = vmatpush1.bf16.msra.mxu0 0
    %2144 = vmatprep.subr.bf16.mxu0 0
    %2145 = vmatpush1.bf16.msra.mxu0 %v2125
    %2146 = vmatprep.subr.bf16.mxu0 0
    %2147 = vmatpush2.bf16.msra.mxu0 0
    %2148 = vmatprep.subr.bf16.mxu0 0
    %2149 = vmatpush2.bf16.msra.mxu0 0
    %2150 = vmatprep.subr.bf16.mxu0 0
    %2151 = vmatpush2.bf16.msra.mxu0 0
    %2152 = vmatprep.subr.bf16.mxu0 0
    %2153 = vmatpush2.bf16.msra.mxu0 0
    %2154 = vmatprep.subr.bf16.mxu0 0
    %2155 = vmatpush2.bf16.msra.mxu0 0
    %2156 = vmatprep.subr.bf16.mxu0 0
    %2157 = vmatpush2.bf16.msra.mxu0 0
    %2158 = vmatprep.subr.bf16.mxu0 0
    %2159 = vmatpush2.bf16.msra.mxu0 0
    %2160 = vmatprep.subr.bf16.mxu0 0
    %2161 = vmatpush2.bf16.msra.mxu0 0
    %2162 = vmatprep.mubr.bf16.mxu0 0
    %2163 = vmatmul.mubr.bf16.gmra.mxu0 %v2128
    %v2164 = vpop.f32.mrf.mxu0
    %v2165 = vadd.f32 0.0, %v2164
    %v2166 = vpop.f32.mrf.mxu0
    %v2167 = vpop.f32.mrf.mxu0
    %v2168 = vpop.f32.mrf.mxu0
    %2169 = vdwg.mxu0
    %2170 = vrot.lane.b32.xlu0 %v1522, 104
    %v2171 = vpop.permute.xlu0 %2170
    %2172 = vrot.lane.b32.xlu0 %v1524, 104
    %v2173 = vpop.permute.xlu0 %2172
    %v2175 = vsel %vm185, %v2171, 0
    %v2178 = vsel %vm185, %v2173, 0
    %2180 = vmatprep.subr.bf16.mxu0 0
    %2181 = vmatpush1.bf16.xpose.msra.mxu0 0
    %2182 = vmatprep.subr.bf16.mxu0 0
    %2183 = vmatpush1.bf16.xpose.msra.mxu0 0
    %2184 = vmatprep.subr.bf16.mxu0 0
    %2185 = vmatpush1.bf16.xpose.msra.mxu0 0
    %2186 = vmatprep.subr.bf16.mxu0 0
    %2187 = vmatpush1.bf16.xpose.msra.mxu0 0
    %2188 = vmatprep.subr.bf16.mxu0 0
    %2189 = vmatpush1.bf16.xpose.msra.mxu0 0
    %2190 = vmatprep.subr.bf16.mxu0 0
    %2191 = vmatpush1.bf16.xpose.msra.mxu0 0
    %2192 = vmatprep.subr.bf16.mxu0 0
    %2193 = vmatpush1.bf16.xpose.msra.mxu0 0
    %2194 = vmatprep.subr.bf16.mxu0 0
    %2195 = vmatpush1.bf16.xpose.msra.mxu0 %v2178
    %2196 = vmatprep.subr.bf16.mxu0 0
    %2197 = vmatpush2.bf16.xpose.msra.mxu0 0
    %2198 = vmatprep.subr.bf16.mxu0 0
    %2199 = vmatpush2.bf16.xpose.msra.mxu0 0
    %2200 = vmatprep.subr.bf16.mxu0 0
    %2201 = vmatpush2.bf16.xpose.msra.mxu0 0
    %2202 = vmatprep.subr.bf16.mxu0 0
    %2203 = vmatpush2.bf16.xpose.msra.mxu0 0
    %2204 = vmatprep.subr.bf16.mxu0 0
    %2205 = vmatpush2.bf16.xpose.msra.mxu0 0
    %2206 = vmatprep.subr.bf16.mxu0 0
    %2207 = vmatpush2.bf16.xpose.msra.mxu0 0
    %2208 = vmatprep.subr.bf16.mxu0 0
    %2209 = vmatpush2.bf16.xpose.msra.mxu0 0
    %2210 = vmatprep.subr.bf16.mxu0 0
    %2211 = vmatpush2.bf16.xpose.msra.mxu0 0
    %2212 = vmatprep.mubr.bf16.mxu0 0
    %2213 = vmatmul.mubr.bf16.gmra.mxu0 %v2175
    %v2214 = vpop.f32.mrf.mxu0
    %v2215 = vadd.f32 0.0, %v2214
    %v2216 = vpop.f32.mrf.mxu0
    %v2217 = vpop.f32.mrf.mxu0
    %v2218 = vpop.f32.mrf.mxu0
    %2219 = vdwg.mxu0
    %2220 = vrot.lane.b32.xlu0 %v1523, 104
    %v2221 = vpop.permute.xlu0 %2220
    %2222 = vrot.lane.b32.xlu0 %v1525, 104
    %v2223 = vpop.permute.xlu0 %2222
    %v2225 = vsel %vm185, %v2221, 0
    %v2228 = vsel %vm185, %v2223, 0
    %2230 = vmatprep.subr.bf16.mxu0 0
    %2231 = vmatpush1.bf16.xpose.msra.mxu0 0
    %2232 = vmatprep.subr.bf16.mxu0 0
    %2233 = vmatpush1.bf16.xpose.msra.mxu0 0
    %2234 = vmatprep.subr.bf16.mxu0 0
    %2235 = vmatpush1.bf16.xpose.msra.mxu0 0
    %2236 = vmatprep.subr.bf16.mxu0 0
    %2237 = vmatpush1.bf16.xpose.msra.mxu0 0
    %2238 = vmatprep.subr.bf16.mxu0 0
    %2239 = vmatpush1.bf16.xpose.msra.mxu0 0
    %2240 = vmatprep.subr.bf16.mxu0 0
    %2241 = vmatpush1.bf16.xpose.msra.mxu0 0
    %2242 = vmatprep.subr.bf16.mxu0 0
    %2243 = vmatpush1.bf16.xpose.msra.mxu0 0
    %2244 = vmatprep.subr.bf16.mxu0 0
    %2245 = vmatpush1.bf16.xpose.msra.mxu0 %v2228
    %2246 = vmatprep.subr.bf16.mxu0 0
    %2247 = vmatpush2.bf16.xpose.msra.mxu0 0
    %2248 = vmatprep.subr.bf16.mxu0 0
    %2249 = vmatpush2.bf16.xpose.msra.mxu0 0
    %2250 = vmatprep.subr.bf16.mxu0 0
    %2251 = vmatpush2.bf16.xpose.msra.mxu0 0
    %2252 = vmatprep.subr.bf16.mxu0 0
    %2253 = vmatpush2.bf16.xpose.msra.mxu0 0
    %2254 = vmatprep.subr.bf16.mxu0 0
    %2255 = vmatpush2.bf16.xpose.msra.mxu0 0
    %2256 = vmatprep.subr.bf16.mxu0 0
    %2257 = vmatpush2.bf16.xpose.msra.mxu0 0
    %2258 = vmatprep.subr.bf16.mxu0 0
    %2259 = vmatpush2.bf16.xpose.msra.mxu0 0
    %2260 = vmatprep.subr.bf16.mxu0 0
    %2261 = vmatpush2.bf16.xpose.msra.mxu0 0
    %2262 = vmatprep.mubr.bf16.mxu0 0
    %2263 = vmatmul.mubr.bf16.gmra.mxu0 %v2225
    %v2264 = vpop.f32.mrf.mxu0
    %v2265 = vadd.f32 0.0, %v2264
    %v2266 = vpop.f32.mrf.mxu0
    %v2267 = vpop.f32.mrf.mxu0
    %v2268 = vpop.f32.mrf.mxu0
    %2269 = vdwg.mxu0
    %v2270 = vsel %vm280, %v2215, -inf
    %2271 = vmax.xlane.f32.xlu0 %v2270
    %v2272 = vpop.xlane.xlu0 %2271
    %v2273 = vsel %vm280, %v2265, -inf
    %2274 = vmax.xlane.f32.xlu0 %v2273
    %v2275 = vpop.xlane.xlu0 %2274
    %v2276 = vsub.f32 %v2215, %v2272
    %v2277 = vsub.f32 %v2265, %v2275
    %v2278 = vmul.f32 %v2276, 1.442695
    %v2279 = vpow.pop %v2278
    %v2280 = vmul.f32 %v2277, 1.442695
    %v2281 = vpow.pop %v2280
    %v2282 = vsel %vm280, %v2279, 0.0
    %2283 = vadd.xlane.f32.xlu0 %v2282
    %v2284 = vpop.xlane.xlu0 %2283
    %v2285 = vsel %vm280, %v2281, 0.0
    %2286 = vadd.xlane.f32.xlu0 %v2285
    %v2287 = vpop.xlane.xlu0 %2286
    %v2288 = vrcp.pop %v2284
    %v2289 = vrcp.pop %v2287
    %v2290 = vmul.f32 %v2279, %v2288
    %v2291 = vmul.f32 %v2281, %v2289
    %v2292 = vpack.c.bf16 %v2290, %v2290
    %v2293 = vpack.c.bf16 %v2291, %v2291
    %2294 = vrot.lane.b32.xlu0 %v1524, 72
    %v2295 = vpop.permute.xlu0 %2294
    %v2298 = vsel %vm280, %v2292, 0
    %2300 = vmatprep.subr.bf16.mxu0 0
    %2301 = vmatpush1.bf16.msra.mxu0 0
    %2302 = vmatprep.subr.bf16.mxu0 0
    %2303 = vmatpush1.bf16.msra.mxu0 0
    %2304 = vmatprep.subr.bf16.mxu0 0
    %2305 = vmatpush1.bf16.msra.mxu0 0
    %2306 = vmatprep.subr.bf16.mxu0 0
    %2307 = vmatpush1.bf16.msra.mxu0 0
    %2308 = vmatprep.subr.bf16.mxu0 0
    %2309 = vmatpush1.bf16.msra.mxu0 0
    %2310 = vmatprep.subr.bf16.mxu0 0
    %2311 = vmatpush1.bf16.msra.mxu0 0
    %2312 = vmatprep.subr.bf16.mxu0 0
    %2313 = vmatpush1.bf16.msra.mxu0 0
    %2314 = vmatprep.subr.bf16.mxu0 0
    %2315 = vmatpush1.bf16.msra.mxu0 %v2295
    %2316 = vmatprep.subr.bf16.mxu0 0
    %2317 = vmatpush2.bf16.msra.mxu0 0
    %2318 = vmatprep.subr.bf16.mxu0 0
    %2319 = vmatpush2.bf16.msra.mxu0 0
    %2320 = vmatprep.subr.bf16.mxu0 0
    %2321 = vmatpush2.bf16.msra.mxu0 0
    %2322 = vmatprep.subr.bf16.mxu0 0
    %2323 = vmatpush2.bf16.msra.mxu0 0
    %2324 = vmatprep.subr.bf16.mxu0 0
    %2325 = vmatpush2.bf16.msra.mxu0 0
    %2326 = vmatprep.subr.bf16.mxu0 0
    %2327 = vmatpush2.bf16.msra.mxu0 0
    %2328 = vmatprep.subr.bf16.mxu0 0
    %2329 = vmatpush2.bf16.msra.mxu0 0
    %2330 = vmatprep.subr.bf16.mxu0 0
    %2331 = vmatpush2.bf16.msra.mxu0 0
    %2332 = vmatprep.mubr.bf16.mxu0 0
    %2333 = vmatmul.mubr.bf16.gmra.mxu0 %v2298
    %v2334 = vpop.f32.mrf.mxu0
    %v2335 = vadd.f32 0.0, %v2334
    %v2336 = vpop.f32.mrf.mxu0
    %v2337 = vpop.f32.mrf.mxu0
    %v2338 = vpop.f32.mrf.mxu0
    %2339 = vdwg.mxu0
    %2340 = vrot.lane.b32.xlu0 %v1525, 72
    %v2341 = vpop.permute.xlu0 %2340
    %v2344 = vsel %vm280, %v2293, 0
    %2346 = vmatprep.subr.bf16.mxu0 0
    %2347 = vmatpush1.bf16.msra.mxu0 0
    %2348 = vmatprep.subr.bf16.mxu0 0
    %2349 = vmatpush1.bf16.msra.mxu0 0
    %2350 = vmatprep.subr.bf16.mxu0 0
    %2351 = vmatpush1.bf16.msra.mxu0 0
    %2352 = vmatprep.subr.bf16.mxu0 0
    %2353 = vmatpush1.bf16.msra.mxu0 0
    %2354 = vmatprep.subr.bf16.mxu0 0
    %2355 = vmatpush1.bf16.msra.mxu0 0
    %2356 = vmatprep.subr.bf16.mxu0 0
    %2357 = vmatpush1.bf16.msra.mxu0 0
    %2358 = vmatprep.subr.bf16.mxu0 0
    %2359 = vmatpush1.bf16.msra.mxu0 0
    %2360 = vmatprep.subr.bf16.mxu0 0
    %2361 = vmatpush1.bf16.msra.mxu0 %v2341
    %2362 = vmatprep.subr.bf16.mxu0 0
    %2363 = vmatpush2.bf16.msra.mxu0 0
    %2364 = vmatprep.subr.bf16.mxu0 0
    %2365 = vmatpush2.bf16.msra.mxu0 0
    %2366 = vmatprep.subr.bf16.mxu0 0
    %2367 = vmatpush2.bf16.msra.mxu0 0
    %2368 = vmatprep.subr.bf16.mxu0 0
    %2369 = vmatpush2.bf16.msra.mxu0 0
    %2370 = vmatprep.subr.bf16.mxu0 0
    %2371 = vmatpush2.bf16.msra.mxu0 0
    %2372 = vmatprep.subr.bf16.mxu0 0
    %2373 = vmatpush2.bf16.msra.mxu0 0
    %2374 = vmatprep.subr.bf16.mxu0 0
    %2375 = vmatpush2.bf16.msra.mxu0 0
    %2376 = vmatprep.subr.bf16.mxu0 0
    %2377 = vmatpush2.bf16.msra.mxu0 0
    %2378 = vmatprep.mubr.bf16.mxu0 0
    %2379 = vmatmul.mubr.bf16.gmra.mxu0 %v2344
    %v2380 = vpop.f32.mrf.mxu0
    %v2381 = vadd.f32 0.0, %v2380
    %v2382 = vpop.f32.mrf.mxu0
    %v2383 = vpop.f32.mrf.mxu0
    %v2384 = vpop.f32.mrf.mxu0
    %2385 = vdwg.mxu0
    %2388 = vrot.lane.b32.xlu0 %v1903, 8
    %v2389 = vpop.permute.xlu0 %2388
    %2390 = vrot.lane.b32.xlu0 %v1949, 8
    %v2391 = vpop.permute.xlu0 %2390
    %2396 = vrot.lane.b32.xlu0 %v2119, 16
    %v2397 = vpop.permute.xlu0 %2396
    %2398 = vrot.lane.b32.xlu0 %v2165, 16
    %v2399 = vpop.permute.xlu0 %2398
    %2404 = vrot.lane.b32.xlu0 %v2335, 24
    %v2405 = vpop.permute.xlu0 %2404
    %2406 = vrot.lane.b32.xlu0 %v2381, 24
    %v2407 = vpop.permute.xlu0 %2406
    %v2410 = vsel %vm185, %v1684, %v2389
    %v2411 = vsel %vm185, %v1731, %v2391
    %v2412 = vsel %vm280, %v2410, %v2397
    %v2413 = vsel %vm280, %v2411, %v2399
    %v2414 = vsel %vm1207, %v2412, %v2405
    %v2415 = vsel %vm1207, %v2413, %v2407
    %v2416 = vld [vmem:[%s3 + $0x30] sm:$0xf]
    %v2417 = vld [vmem:[%s3 + $0x34] sm:$0xf]
    %v2418 = vld [vmem:[%s3 + $0x38] sm:$0xf]
    %v2419 = vld [vmem:[%s3 + $0x3c] sm:$0xf]
    %v2420 = vpack.c.bf16 %v2415, %v2414
    %v2421 = vld [vmem:[%s5 + $0x28] sm:$0x1]
    %v2422 = vlaneseq
    %v2423 = vshrl.u32 %v2422, 7
    %v2424 = vsub.s32 0, %v2423
    %v2425 = vrot.slane %v2421, %v2424
    %v2430 = vunpack.c.l.b16 %v2416
    %v2431 = vunpack.c.l.b16 %v2417
    %v2432 = vunpack.c.l.b16 %v2418
    %v2433 = vunpack.c.l.b16 %v2419
    %v2434 = vpack.c.b16 %v2431, %v2430
    %v2435 = vpack.c.b16 %v2433, %v2432
    %v2439 = vsel %vm55, %v2420, 0
    %2441 = vmatprep.subr.bf16.mxu0 0
    %2442 = vmatpush1.bf16.msra.mxu0 0
    %2443 = vmatprep.subr.bf16.mxu0 0
    %2444 = vmatpush1.bf16.msra.mxu0 0
    %2445 = vmatprep.subr.bf16.mxu0 0
    %2446 = vmatpush1.bf16.msra.mxu0 0
    %2447 = vmatprep.subr.bf16.mxu0 0
    %2448 = vmatpush1.bf16.msra.mxu0 0
    %2449 = vmatprep.subr.bf16.mxu0 0
    %2450 = vmatpush1.bf16.msra.mxu0 0
    %2451 = vmatprep.subr.bf16.mxu0 0
    %2452 = vmatpush1.bf16.msra.mxu0 0
    %2453 = vmatprep.subr.bf16.mxu0 0
    %2454 = vmatpush1.bf16.msra.mxu0 %v2435
    %2455 = vmatprep.subr.bf16.mxu0 0
    %2456 = vmatpush1.bf16.msra.mxu0 %v2434
    %2457 = vmatprep.subr.bf16.mxu0 0
    %2458 = vmatpush2.bf16.msra.mxu0 0
    %2459 = vmatprep.subr.bf16.mxu0 0
    %2460 = vmatpush2.bf16.msra.mxu0 0
    %2461 = vmatprep.subr.bf16.mxu0 0
    %2462 = vmatpush2.bf16.msra.mxu0 0
    %2463 = vmatprep.subr.bf16.mxu0 0
    %2464 = vmatpush2.bf16.msra.mxu0 0
    %2465 = vmatprep.subr.bf16.mxu0 0
    %2466 = vmatpush2.bf16.msra.mxu0 0
    %2467 = vmatprep.subr.bf16.mxu0 0
    %2468 = vmatpush2.bf16.msra.mxu0 0
    %2469 = vmatprep.subr.bf16.mxu0 0
    %2470 = vmatpush2.bf16.msra.mxu0 0
    %2471 = vmatprep.subr.bf16.mxu0 0
    %2472 = vmatpush2.bf16.msra.mxu0 0
    %2473 = vmatprep.mubr.bf16.mxu0 0
    %2474 = vmatmul.mubr.bf16.gmra.mxu0 %v2439
    %v2475 = vpop.f32.mrf.mxu0
    %v2476 = vadd.f32 %v2425, %v2475
    %v2477 = vpop.f32.mrf.mxu0
    %v2478 = vpop.f32.mrf.mxu0
    %v2479 = vadd.f32 %v2425, %v2478
    %v2480 = vpop.f32.mrf.mxu0
    %2481 = vdwg.mxu0
    %v2482 = vadd.f32 %v2476, %v1361
    %v2483 = vadd.f32 %v2479, %v1363
    %v2484 = vld [vmem:[%s5 + $0x30] sm:$0x1]
    %v2485 = vld [vmem:[%s5 + $0x38] sm:$0x1]
    %v2486 = vsel %vm55, %v2482, 0.0
    %2487 = vadd.xlane.f32.xlu0 %v2486
    %v2488 = vpop.xlane.xlu0 %2487
    %v2489 = vsel %vm55, %v2483, 0.0
    %2490 = vadd.xlane.f32.xlu0 %v2489
    %v2491 = vpop.xlane.xlu0 %2490
    %v2492 = vmul.f32 %v2488, %v1308
    %v2493 = vmul.f32 %v2491, %v1308
    %v2494 = vsub.f32 %v2482, %v2492
    %v2495 = vsub.f32 %v2483, %v2493
    %v2496 = vmul.f32 %v2494, %v2494
    %v2497 = vmul.f32 %v2495, %v2495
    %v2498 = vsel %vm55, %v2496, 0.0
    %2499 = vadd.xlane.f32.xlu0 %v2498
    %v2500 = vpop.xlane.xlu0 %2499
    %v2501 = vsel %vm55, %v2497, 0.0
    %2502 = vadd.xlane.f32.xlu0 %v2501
    %v2503 = vpop.xlane.xlu0 %2502
    %v2504 = vmul.f32 %v2500, %v1308
    %v2505 = vmul.f32 %v2503, %v1308
    %v2506 = vadd.f32 %v2504, 1e-12
    %v2507 = vadd.f32 %v2505, 1e-12
    %v2508 = vrsqrt.pop %v2506
    %v2509 = vrsqrt.pop %v2507
    %v2510 = vmul.f32 %v2494, %v2508
    %v2511 = vmul.f32 %v2495, %v2509
    %v2512 = vlaneseq
    %v2513 = vshrl.u32 %v2512, 7
    %v2514 = vsub.s32 0, %v2513
    %v2515 = vrot.slane %v2484, %v2514
    %v2516 = vmul.f32 %v2510, %v2515
    %v2517 = vmul.f32 %v2511, %v2515
    %v2518 = vlaneseq
    %v2519 = vshrl.u32 %v2518, 7
    %v2520 = vsub.s32 0, %v2519
    %v2521 = vrot.slane %v2485, %v2520
    %v2522 = vadd.f32 %v2516, %v2521
    %v2523 = vadd.f32 %v2517, %v2521
    %v2524 = vld [vmem:[%s2] sm:$0xff]
    %v2525 = vld [vmem:[%s2 + $0x8] sm:$0xff]
    %v2526 = vpack.c.bf16 %v2525, %v2524
    %v2527 = vld [vmem:[%s3 + $0x40] sm:$0xf]
    %v2528 = vld [vmem:[%s3 + $0x44] sm:$0xf]
    %v2529 = vld [vmem:[%s3 + $0x48] sm:$0xf]
    %v2530 = vld [vmem:[%s3 + $0x4c] sm:$0xf]
    %v2531 = vpack.c.bf16 %v2523, %v2522
    %v2532 = vld [vmem:[%s5 + $0x40] sm:$0x1]
    %v2533 = vlaneseq
    %v2534 = vshrl.u32 %v2533, 7
    %v2535 = vsub.s32 0, %v2534
    %v2536 = vrot.slane %v2532, %v2535
    %v2541 = vunpack.c.l.b16 %v2527
    %v2542 = vunpack.c.l.b16 %v2528
    %v2543 = vunpack.c.l.b16 %v2529
    %v2544 = vunpack.c.l.b16 %v2530
    %v2545 = vpack.c.b16 %v2542, %v2541
    %v2546 = vpack.c.b16 %v2544, %v2543
    %v2550 = vsel %vm55, %v2531, 0
    %2552 = vmatprep.subr.bf16.mxu0 0
    %2553 = vmatpush1.bf16.msra.mxu0 0
    %2554 = vmatprep.subr.bf16.mxu0 0
    %2555 = vmatpush1.bf16.msra.mxu0 0
    %2556 = vmatprep.subr.bf16.mxu0 0
    %2557 = vmatpush1.bf16.msra.mxu0 0
    %2558 = vmatprep.subr.bf16.mxu0 0
    %2559 = vmatpush1.bf16.msra.mxu0 0
    %2560 = vmatprep.subr.bf16.mxu0 0
    %2561 = vmatpush1.bf16.msra.mxu0 0
    %2562 = vmatprep.subr.bf16.mxu0 0
    %2563 = vmatpush1.bf16.msra.mxu0 0
    %2564 = vmatprep.subr.bf16.mxu0 0
    %2565 = vmatpush1.bf16.msra.mxu0 %v2546
    %2566 = vmatprep.subr.bf16.mxu0 0
    %2567 = vmatpush1.bf16.msra.mxu0 %v2545
    %2568 = vmatprep.subr.bf16.mxu0 0
    %2569 = vmatpush2.bf16.msra.mxu0 0
    %2570 = vmatprep.subr.bf16.mxu0 0
    %2571 = vmatpush2.bf16.msra.mxu0 0
    %2572 = vmatprep.subr.bf16.mxu0 0
    %2573 = vmatpush2.bf16.msra.mxu0 0
    %2574 = vmatprep.subr.bf16.mxu0 0
    %2575 = vmatpush2.bf16.msra.mxu0 0
    %2576 = vmatprep.subr.bf16.mxu0 0
    %2577 = vmatpush2.bf16.msra.mxu0 0
    %2578 = vmatprep.subr.bf16.mxu0 0
    %2579 = vmatpush2.bf16.msra.mxu0 0
    %2580 = vmatprep.subr.bf16.mxu0 0
    %2581 = vmatpush2.bf16.msra.mxu0 0
    %2582 = vmatprep.subr.bf16.mxu0 0
    %2583 = vmatpush2.bf16.msra.mxu0 0
    %2584 = vmatprep.mubr.bf16.mxu0 0
    %2585 = vmatmul.mubr.bf16.gmra.mxu0 %v2550
    %v2586 = vpop.f32.mrf.mxu0
    %v2587 = vadd.f32 %v2536, %v2586
    %v2588 = vpop.f32.mrf.mxu0
    %v2589 = vpop.f32.mrf.mxu0
    %v2590 = vadd.f32 %v2536, %v2589
    %v2591 = vpop.f32.mrf.mxu0
    %2592 = vdwg.mxu0
    %v2593 = vld [vmem:[%s4 + $0x28] sm:$0xf]
    %v2594 = vld [vmem:[%s4 + $0x2c] sm:$0xf]
    %v2595 = vld [vmem:[%s4 + $0x30] sm:$0xf]
    %v2596 = vld [vmem:[%s6 + $0x10] sm:$0x1]
    %v2597 = vlaneseq
    %v2598 = vshrl.u32 %v2597, 7
    %v2599 = vsub.s32 0, %v2598
    %v2600 = vrot.slane %v2596, %v2599
    %v2604 = vunpack.c.l.b16 %v2593
    %v2605 = vunpack.c.l.b16 %v2594
    %v2606 = vunpack.c.l.b16 %v2595
    %v2607 = vpack.c.b16 %v2605, %v2604
    %v2608 = vpack.c.b16 %v2606, %v2606
    %v2611 = vsel %vm1207, %v2526, 0
    %vm2613 = vcmask 1043456
    %v2615 = vsel %vm2613, %v2608, 0
    %2617 = vmatprep.subr.bf16.mxu0 0
    %2618 = vmatpush1.bf16.msra.mxu0 0
    %2619 = vmatprep.subr.bf16.mxu0 0
    %2620 = vmatpush1.bf16.msra.mxu0 0
    %2621 = vmatprep.subr.bf16.mxu0 0
    %2622 = vmatpush1.bf16.msra.mxu0 0
    %2623 = vmatprep.subr.bf16.mxu0 0
    %2624 = vmatpush1.bf16.msra.mxu0 0
    %2625 = vmatprep.subr.bf16.mxu0 0
    %2626 = vmatpush1.bf16.msra.mxu0 0
    %2627 = vmatprep.subr.bf16.mxu0 0
    %2628 = vmatpush1.bf16.msra.mxu0 0
    %2629 = vmatprep.subr.bf16.mxu0 0
    %2630 = vmatpush1.bf16.msra.mxu0 %v2615
    %2631 = vmatprep.subr.bf16.mxu0 0
    %2632 = vmatpush1.bf16.msra.mxu0 %v2607
    %2633 = vmatprep.subr.bf16.mxu0 0
    %2634 = vmatpush2.bf16.msra.mxu0 0
    %2635 = vmatprep.subr.bf16.mxu0 0
    %2636 = vmatpush2.bf16.msra.mxu0 0
    %2637 = vmatprep.subr.bf16.mxu0 0
    %2638 = vmatpush2.bf16.msra.mxu0 0
    %2639 = vmatprep.subr.bf16.mxu0 0
    %2640 = vmatpush2.bf16.msra.mxu0 0
    %2641 = vmatprep.subr.bf16.mxu0 0
    %2642 = vmatpush2.bf16.msra.mxu0 0
    %2643 = vmatprep.subr.bf16.mxu0 0
    %2644 = vmatpush2.bf16.msra.mxu0 0
    %2645 = vmatprep.subr.bf16.mxu0 0
    %2646 = vmatpush2.bf16.msra.mxu0 0
    %2647 = vmatprep.subr.bf16.mxu0 0
    %2648 = vmatpush2.bf16.msra.mxu0 0
    %2649 = vmatprep.mubr.bf16.mxu0 0
    %2650 = vmatmul.mubr.bf16.gmra.mxu0 %v2611
    %v2651 = vpop.f32.mrf.mxu0
    %v2652 = vadd.f32 %v2600, %v2651
    %v2653 = vpop.f32.mrf.mxu0
    %v2654 = vpop.f32.mrf.mxu0
    %v2655 = vadd.f32 %v2600, %v2654
    %v2656 = vpop.f32.mrf.mxu0
    %2657 = vdwg.mxu0
    %v2658 = vpack.c.bf16 %v2587, %v2587
    %v2659 = vpack.c.bf16 %v2590, %v2590
    %v2660 = vpack.c.bf16 %v2652, %v2652
    %v2661 = vpack.c.bf16 %v2655, %v2655
    %v2663 = vsel %vm185, %v2658, 0
    %v2666 = vsel %vm185, %v2660, 0
    %2668 = vmatprep.subr.bf16.mxu0 0
    %2669 = vmatpush1.bf16.xpose.msra.mxu0 0
    %2670 = vmatprep.subr.bf16.mxu0 0
    %2671 = vmatpush1.bf16.xpose.msra.mxu0 0
    %2672 = vmatprep.subr.bf16.mxu0 0
    %2673 = vmatpush1.bf16.xpose.msra.mxu0 0
    %2674 = vmatprep.subr.bf16.mxu0 0
    %2675 = vmatpush1.bf16.xpose.msra.mxu0 0
    %2676 = vmatprep.subr.bf16.mxu0 0
    %2677 = vmatpush1.bf16.xpose.msra.mxu0 0
    %2678 = vmatprep.subr.bf16.mxu0 0
    %2679 = vmatpush1.bf16.xpose.msra.mxu0 0
    %2680 = vmatprep.subr.bf16.mxu0 0
    %2681 = vmatpush1.bf16.xpose.msra.mxu0 0
    %2682 = vmatprep.subr.bf16.mxu0 0
    %2683 = vmatpush1.bf16.xpose.msra.mxu0 %v2666
    %2684 = vmatprep.subr.bf16.mxu0 0
    %2685 = vmatpush2.bf16.xpose.msra.mxu0 0
    %2686 = vmatprep.subr.bf16.mxu0 0
    %2687 = vmatpush2.bf16.xpose.msra.mxu0 0
    %2688 = vmatprep.subr.bf16.mxu0 0
    %2689 = vmatpush2.bf16.xpose.msra.mxu0 0
    %2690 = vmatprep.subr.bf16.mxu0 0
    %2691 = vmatpush2.bf16.xpose.msra.mxu0 0
    %2692 = vmatprep.subr.bf16.mxu0 0
    %2693 = vmatpush2.bf16.xpose.msra.mxu0 0
    %2694 = vmatprep.subr.bf16.mxu0 0
    %2695 = vmatpush2.bf16.xpose.msra.mxu0 0
    %2696 = vmatprep.subr.bf16.mxu0 0
    %2697 = vmatpush2.bf16.xpose.msra.mxu0 0
    %2698 = vmatprep.subr.bf16.mxu0 0
    %2699 = vmatpush2.bf16.xpose.msra.mxu0 0
    %2700 = vmatprep.mubr.bf16.mxu0 0
    %2701 = vmatmul.mubr.bf16.gmra.mxu0 %v2663
    %v2702 = vpop.f32.mrf.mxu0
    %v2703 = vadd.f32 0.0, %v2702
    %v2704 = vpop.f32.mrf.mxu0
    %v2705 = vpop.f32.mrf.mxu0
    %v2706 = vpop.f32.mrf.mxu0
    %2707 = vdwg.mxu0
    %v2709 = vsel %vm185, %v2659, 0
    %v2712 = vsel %vm185, %v2661, 0
    %2714 = vmatprep.subr.bf16.mxu0 0
    %2715 = vmatpush1.bf16.xpose.msra.mxu0 0
    %2716 = vmatprep.subr.bf16.mxu0 0
    %2717 = vmatpush1.bf16.xpose.msra.mxu0 0
    %2718 = vmatprep.subr.bf16.mxu0 0
    %2719 = vmatpush1.bf16.xpose.msra.mxu0 0
    %2720 = vmatprep.subr.bf16.mxu0 0
    %2721 = vmatpush1.bf16.xpose.msra.mxu0 0
    %2722 = vmatprep.subr.bf16.mxu0 0
    %2723 = vmatpush1.bf16.xpose.msra.mxu0 0
    %2724 = vmatprep.subr.bf16.mxu0 0
    %2725 = vmatpush1.bf16.xpose.msra.mxu0 0
    %2726 = vmatprep.subr.bf16.mxu0 0
    %2727 = vmatpush1.bf16.xpose.msra.mxu0 0
    %2728 = vmatprep.subr.bf16.mxu0 0
    %2729 = vmatpush1.bf16.xpose.msra.mxu0 %v2712
    %2730 = vmatprep.subr.bf16.mxu0 0
    %2731 = vmatpush2.bf16.xpose.msra.mxu0 0
    %2732 = vmatprep.subr.bf16.mxu0 0
    %2733 = vmatpush2.bf16.xpose.msra.mxu0 0
    %2734 = vmatprep.subr.bf16.mxu0 0
    %2735 = vmatpush2.bf16.xpose.msra.mxu0 0
    %2736 = vmatprep.subr.bf16.mxu0 0
    %2737 = vmatpush2.bf16.xpose.msra.mxu0 0
    %2738 = vmatprep.subr.bf16.mxu0 0
    %2739 = vmatpush2.bf16.xpose.msra.mxu0 0
    %2740 = vmatprep.subr.bf16.mxu0 0
    %2741 = vmatpush2.bf16.xpose.msra.mxu0 0
    %2742 = vmatprep.subr.bf16.mxu0 0
    %2743 = vmatpush2.bf16.xpose.msra.mxu0 0
    %2744 = vmatprep.subr.bf16.mxu0 0
    %2745 = vmatpush2.bf16.xpose.msra.mxu0 0
    %2746 = vmatprep.mubr.bf16.mxu0 0
    %2747 = vmatmul.mubr.bf16.gmra.mxu0 %v2709
    %v2748 = vpop.f32.mrf.mxu0
    %v2749 = vadd.f32 0.0, %v2748
    %v2750 = vpop.f32.mrf.mxu0
    %v2751 = vpop.f32.mrf.mxu0
    %v2752 = vpop.f32.mrf.mxu0
    %2753 = vdwg.mxu0
    %v2754 = vsel %vm185, %v2703, -inf
    %2755 = vmax.xlane.f32.xlu0 %v2754
    %v2756 = vpop.xlane.xlu0 %2755
    %v2757 = vsel %vm185, %v2749, -inf
    %2758 = vmax.xlane.f32.xlu0 %v2757
    %v2759 = vpop.xlane.xlu0 %2758
    %v2760 = vsub.f32 %v2703, %v2756
    %v2761 = vsub.f32 %v2749, %v2759
    %v2762 = vmul.f32 %v2760, 1.442695
    %v2763 = vpow.pop %v2762
    %v2764 = vmul.f32 %v2761, 1.442695
    %v2765 = vpow.pop %v2764
    %v2766 = vsel %vm185, %v2763, 0.0
    %2767 = vadd.xlane.f32.xlu0 %v2766
    %v2768 = vpop.xlane.xlu0 %2767
    %v2769 = vsel %vm185, %v2765, 0.0
    %2770 = vadd.xlane.f32.xlu0 %v2769
    %v2771 = vpop.xlane.xlu0 %2770
    %v2772 = vrcp.pop %v2768
    %v2773 = vrcp.pop %v2771
    %v2774 = vmul.f32 %v2763, %v2772
    %v2775 = vmul.f32 %v2765, %v2773
    %v2776 = vpack.c.bf16 %v2774, %v2774
    %v2777 = vpack.c.bf16 %v2775, %v2775
    %2779 = vrot.lane.b32.xlu0 %v2660, 96
    %v2780 = vpop.permute.xlu0 %2779
    %v2782 = vsel %vm185, %v2776, 0
    %v2785 = vsel %vm2613, %v2780, 0
    %2787 = vmatprep.subr.bf16.mxu0 0
    %2788 = vmatpush1.bf16.msra.mxu0 0
    %2789 = vmatprep.subr.bf16.mxu0 0
    %2790 = vmatpush1.bf16.msra.mxu0 0
    %2791 = vmatprep.subr.bf16.mxu0 0
    %2792 = vmatpush1.bf16.msra.mxu0 0
    %2793 = vmatprep.subr.bf16.mxu0 0
    %2794 = vmatpush1.bf16.msra.mxu0 0
    %2795 = vmatprep.subr.bf16.mxu0 0
    %2796 = vmatpush1.bf16.msra.mxu0 0
    %2797 = vmatprep.subr.bf16.mxu0 0
    %2798 = vmatpush1.bf16.msra.mxu0 0
    %2799 = vmatprep.subr.bf16.mxu0 0
    %2800 = vmatpush1.bf16.msra.mxu0 0
    %2801 = vmatprep.subr.bf16.mxu0 0
    %2802 = vmatpush1.bf16.msra.mxu0 %v2785
    %2803 = vmatprep.subr.bf16.mxu0 0
    %2804 = vmatpush2.bf16.msra.mxu0 0
    %2805 = vmatprep.subr.bf16.mxu0 0
    %2806 = vmatpush2.bf16.msra.mxu0 0
    %2807 = vmatprep.subr.bf16.mxu0 0
    %2808 = vmatpush2.bf16.msra.mxu0 0
    %2809 = vmatprep.subr.bf16.mxu0 0
    %2810 = vmatpush2.bf16.msra.mxu0 0
    %2811 = vmatprep.subr.bf16.mxu0 0
    %2812 = vmatpush2.bf16.msra.mxu0 0
    %2813 = vmatprep.subr.bf16.mxu0 0
    %2814 = vmatpush2.bf16.msra.mxu0 0
    %2815 = vmatprep.subr.bf16.mxu0 0
    %2816 = vmatpush2.bf16.msra.mxu0 0
    %2817 = vmatprep.subr.bf16.mxu0 0
    %2818 = vmatpush2.bf16.msra.mxu0 0
    %2819 = vmatprep.mubr.bf16.mxu0 0
    %2820 = vmatmul.mubr.bf16.gmra.mxu0 %v2782
    %v2821 = vpop.f32.mrf.mxu0
    %v2822 = vadd.f32 0.0, %v2821
    %v2823 = vpop.f32.mrf.mxu0
    %v2824 = vpop.f32.mrf.mxu0
    %v2825 = vpop.f32.mrf.mxu0
    %2826 = vdwg.mxu0
    %2828 = vrot.lane.b32.xlu0 %v2661, 96
    %v2829 = vpop.permute.xlu0 %2828
    %v2831 = vsel %vm185, %v2777, 0
    %v2834 = vsel %vm2613, %v2829, 0
    %2836 = vmatprep.subr.bf16.mxu0 0
    %2837 = vmatpush1.bf16.msra.mxu0 0
    %2838 = vmatprep.subr.bf16.mxu0 0
    %2839 = vmatpush1.bf16.msra.mxu0 0
    %2840 = vmatprep.subr.bf16.mxu0 0
    %2841 = vmatpush1.bf16.msra.mxu0 0
    %2842 = vmatprep.subr.bf16.mxu0 0
    %2843 = vmatpush1.bf16.msra.mxu0 0
    %2844 = vmatprep.subr.bf16.mxu0 0
    %2845 = vmatpush1.bf16.msra.mxu0 0
    %2846 = vmatprep.subr.bf16.mxu0 0
    %2847 = vmatpush1.bf16.msra.mxu0 0
    %2848 = vmatprep.subr.bf16.mxu0 0
    %2849 = vmatpush1.bf16.msra.mxu0 0
    %2850 = vmatprep.subr.bf16.mxu0 0
    %2851 = vmatpush1.bf16.msra.mxu0 %v2834
    %2852 = vmatprep.subr.bf16.mxu0 0
    %2853 = vmatpush2.bf16.msra.mxu0 0
    %2854 = vmatprep.subr.bf16.mxu0 0
    %2855 = vmatpush2.bf16.msra.mxu0 0
    %2856 = vmatprep.subr.bf16.mxu0 0
    %2857 = vmatpush2.bf16.msra.mxu0 0
    %2858 = vmatprep.subr.bf16.mxu0 0
    %2859 = vmatpush2.bf16.msra.mxu0 0
    %2860 = vmatprep.subr.bf16.mxu0 0
    %2861 = vmatpush2.bf16.msra.mxu0 0
    %2862 = vmatprep.subr.bf16.mxu0 0
    %2863 = vmatpush2.bf16.msra.mxu0 0
    %2864 = vmatprep.subr.bf16.mxu0 0
    %2865 = vmatpush2.bf16.msra.mxu0 0
    %2866 = vmatprep.subr.bf16.mxu0 0
    %2867 = vmatpush2.bf16.msra.mxu0 0
    %2868 = vmatprep.mubr.bf16.mxu0 0
    %2869 = vmatmul.mubr.bf16.gmra.mxu0 %v2831
    %v2870 = vpop.f32.mrf.mxu0
    %v2871 = vadd.f32 0.0, %v2870
    %v2872 = vpop.f32.mrf.mxu0
    %v2873 = vpop.f32.mrf.mxu0
    %v2874 = vpop.f32.mrf.mxu0
    %2875 = vdwg.mxu0
    %2877 = vrot.lane.b32.xlu0 %v2658, 120
    %v2878 = vpop.permute.xlu0 %2877
    %2879 = vrot.lane.b32.xlu0 %v2660, 120
    %v2880 = vpop.permute.xlu0 %2879
    %v2882 = vsel %vm185, %v2878, 0
    %v2885 = vsel %vm185, %v2880, 0
    %2887 = vmatprep.subr.bf16.mxu0 0
    %2888 = vmatpush1.bf16.xpose.msra.mxu0 0
    %2889 = vmatprep.subr.bf16.mxu0 0
    %2890 = vmatpush1.bf16.xpose.msra.mxu0 0
    %2891 = vmatprep.subr.bf16.mxu0 0
    %2892 = vmatpush1.bf16.xpose.msra.mxu0 0
    %2893 = vmatprep.subr.bf16.mxu0 0
    %2894 = vmatpush1.bf16.xpose.msra.mxu0 0
    %2895 = vmatprep.subr.bf16.mxu0 0
    %2896 = vmatpush1.bf16.xpose.msra.mxu0 0
    %2897 = vmatprep.subr.bf16.mxu0 0
    %2898 = vmatpush1.bf16.xpose.msra.mxu0 0
    %2899 = vmatprep.subr.bf16.mxu0 0
    %2900 = vmatpush1.bf16.xpose.msra.mxu0 0
    %2901 = vmatprep.subr.bf16.mxu0 0
    %2902 = vmatpush1.bf16.xpose.msra.mxu0 %v2885
    %2903 = vmatprep.subr.bf16.mxu0 0
    %2904 = vmatpush2.bf16.xpose.msra.mxu0 0
    %2905 = vmatprep.subr.bf16.mxu0 0
    %2906 = vmatpush2.bf16.xpose.msra.mxu0 0
    %2907 = vmatprep.subr.bf16.mxu0 0
    %2908 = vmatpush2.bf16.xpose.msra.mxu0 0
    %2909 = vmatprep.subr.bf16.mxu0 0
    %2910 = vmatpush2.bf16.xpose.msra.mxu0 0
    %2911 = vmatprep.subr.bf16.mxu0 0
    %2912 = vmatpush2.bf16.xpose.msra.mxu0 0
    %2913 = vmatprep.subr.bf16.mxu0 0
    %2914 = vmatpush2.bf16.xpose.msra.mxu0 0
    %2915 = vmatprep.subr.bf16.mxu0 0
    %2916 = vmatpush2.bf16.xpose.msra.mxu0 0
    %2917 = vmatprep.subr.bf16.mxu0 0
    %2918 = vmatpush2.bf16.xpose.msra.mxu0 0
    %2919 = vmatprep.mubr.bf16.mxu0 0
    %2920 = vmatmul.mubr.bf16.gmra.mxu0 %v2882
    %v2921 = vpop.f32.mrf.mxu0
    %v2922 = vadd.f32 0.0, %v2921
    %v2923 = vpop.f32.mrf.mxu0
    %v2924 = vpop.f32.mrf.mxu0
    %v2925 = vpop.f32.mrf.mxu0
    %2926 = vdwg.mxu0
    %2928 = vrot.lane.b32.xlu0 %v2659, 120
    %v2929 = vpop.permute.xlu0 %2928
    %2930 = vrot.lane.b32.xlu0 %v2661, 120
    %v2931 = vpop.permute.xlu0 %2930
    %v2933 = vsel %vm185, %v2929, 0
    %v2936 = vsel %vm185, %v2931, 0
    %2938 = vmatprep.subr.bf16.mxu0 0
    %2939 = vmatpush1.bf16.xpose.msra.mxu0 0
    %2940 = vmatprep.subr.bf16.mxu0 0
    %2941 = vmatpush1.bf16.xpose.msra.mxu0 0
    %2942 = vmatprep.subr.bf16.mxu0 0
    %2943 = vmatpush1.bf16.xpose.msra.mxu0 0
    %2944 = vmatprep.subr.bf16.mxu0 0
    %2945 = vmatpush1.bf16.xpose.msra.mxu0 0
    %2946 = vmatprep.subr.bf16.mxu0 0
    %2947 = vmatpush1.bf16.xpose.msra.mxu0 0
    %2948 = vmatprep.subr.bf16.mxu0 0
    %2949 = vmatpush1.bf16.xpose.msra.mxu0 0
    %2950 = vmatprep.subr.bf16.mxu0 0
    %2951 = vmatpush1.bf16.xpose.msra.mxu0 0
    %2952 = vmatprep.subr.bf16.mxu0 0
    %2953 = vmatpush1.bf16.xpose.msra.mxu0 %v2936
    %2954 = vmatprep.subr.bf16.mxu0 0
    %2955 = vmatpush2.bf16.xpose.msra.mxu0 0
    %2956 = vmatprep.subr.bf16.mxu0 0
    %2957 = vmatpush2.bf16.xpose.msra.mxu0 0
    %2958 = vmatprep.subr.bf16.mxu0 0
    %2959 = vmatpush2.bf16.xpose.msra.mxu0 0
    %2960 = vmatprep.subr.bf16.mxu0 0
    %2961 = vmatpush2.bf16.xpose.msra.mxu0 0
    %2962 = vmatprep.subr.bf16.mxu0 0
    %2963 = vmatpush2.bf16.xpose.msra.mxu0 0
    %2964 = vmatprep.subr.bf16.mxu0 0
    %2965 = vmatpush2.bf16.xpose.msra.mxu0 0
    %2966 = vmatprep.subr.bf16.mxu0 0
    %2967 = vmatpush2.bf16.xpose.msra.mxu0 0
    %2968 = vmatprep.subr.bf16.mxu0 0
    %2969 = vmatpush2.bf16.xpose.msra.mxu0 0
    %2970 = vmatprep.mubr.bf16.mxu0 0
    %2971 = vmatmul.mubr.bf16.gmra.mxu0 %v2933
    %v2972 = vpop.f32.mrf.mxu0
    %v2973 = vadd.f32 0.0, %v2972
    %v2974 = vpop.f32.mrf.mxu0
    %v2975 = vpop.f32.mrf.mxu0
    %v2976 = vpop.f32.mrf.mxu0
    %2977 = vdwg.mxu0
    %v2978 = vsel %vm185, %v2922, -inf
    %2979 = vmax.xlane.f32.xlu0 %v2978
    %v2980 = vpop.xlane.xlu0 %2979
    %v2981 = vsel %vm185, %v2973, -inf
    %2982 = vmax.xlane.f32.xlu0 %v2981
    %v2983 = vpop.xlane.xlu0 %2982
    %v2984 = vsub.f32 %v2922, %v2980
    %v2985 = vsub.f32 %v2973, %v2983
    %v2986 = vmul.f32 %v2984, 1.442695
    %v2987 = vpow.pop %v2986
    %v2988 = vmul.f32 %v2985, 1.442695
    %v2989 = vpow.pop %v2988
    %v2990 = vsel %vm185, %v2987, 0.0
    %2991 = vadd.xlane.f32.xlu0 %v2990
    %v2992 = vpop.xlane.xlu0 %2991
    %v2993 = vsel %vm185, %v2989, 0.0
    %2994 = vadd.xlane.f32.xlu0 %v2993
    %v2995 = vpop.xlane.xlu0 %2994
    %v2996 = vrcp.pop %v2992
    %v2997 = vrcp.pop %v2995
    %v2998 = vmul.f32 %v2987, %v2996
    %v2999 = vmul.f32 %v2989, %v2997
    %v3000 = vpack.c.bf16 %v2998, %v2998
    %v3001 = vpack.c.bf16 %v2999, %v2999
    %3002 = vrot.lane.b32.xlu0 %v2660, 88
    %v3003 = vpop.permute.xlu0 %3002
    %v3005 = vsel %vm185, %v3000, 0
    %v3008 = vsel %vm2613, %v3003, 0
    %3010 = vmatprep.subr.bf16.mxu0 0
    %3011 = vmatpush1.bf16.msra.mxu0 0
    %3012 = vmatprep.subr.bf16.mxu0 0
    %3013 = vmatpush1.bf16.msra.mxu0 0
    %3014 = vmatprep.subr.bf16.mxu0 0
    %3015 = vmatpush1.bf16.msra.mxu0 0
    %3016 = vmatprep.subr.bf16.mxu0 0
    %3017 = vmatpush1.bf16.msra.mxu0 0
    %3018 = vmatprep.subr.bf16.mxu0 0
    %3019 = vmatpush1.bf16.msra.mxu0 0
    %3020 = vmatprep.subr.bf16.mxu0 0
    %3021 = vmatpush1.bf16.msra.mxu0 0
    %3022 = vmatprep.subr.bf16.mxu0 0
    %3023 = vmatpush1.bf16.msra.mxu0 0
    %3024 = vmatprep.subr.bf16.mxu0 0
    %3025 = vmatpush1.bf16.msra.mxu0 %v3008
    %3026 = vmatprep.subr.bf16.mxu0 0
    %3027 = vmatpush2.bf16.msra.mxu0 0
    %3028 = vmatprep.subr.bf16.mxu0 0
    %3029 = vmatpush2.bf16.msra.mxu0 0
    %3030 = vmatprep.subr.bf16.mxu0 0
    %3031 = vmatpush2.bf16.msra.mxu0 0
    %3032 = vmatprep.subr.bf16.mxu0 0
    %3033 = vmatpush2.bf16.msra.mxu0 0
    %3034 = vmatprep.subr.bf16.mxu0 0
    %3035 = vmatpush2.bf16.msra.mxu0 0
    %3036 = vmatprep.subr.bf16.mxu0 0
    %3037 = vmatpush2.bf16.msra.mxu0 0
    %3038 = vmatprep.subr.bf16.mxu0 0
    %3039 = vmatpush2.bf16.msra.mxu0 0
    %3040 = vmatprep.subr.bf16.mxu0 0
    %3041 = vmatpush2.bf16.msra.mxu0 0
    %3042 = vmatprep.mubr.bf16.mxu0 0
    %3043 = vmatmul.mubr.bf16.gmra.mxu0 %v3005
    %v3044 = vpop.f32.mrf.mxu0
    %v3045 = vadd.f32 0.0, %v3044
    %v3046 = vpop.f32.mrf.mxu0
    %v3047 = vpop.f32.mrf.mxu0
    %v3048 = vpop.f32.mrf.mxu0
    %3049 = vdwg.mxu0
    %3050 = vrot.lane.b32.xlu0 %v2661, 88
    %v3051 = vpop.permute.xlu0 %3050
    %v3053 = vsel %vm185, %v3001, 0
    %v3056 = vsel %vm2613, %v3051, 0
    %3058 = vmatprep.subr.bf16.mxu0 0
    %3059 = vmatpush1.bf16.msra.mxu0 0
    %3060 = vmatprep.subr.bf16.mxu0 0
    %3061 = vmatpush1.bf16.msra.mxu0 0
    %3062 = vmatprep.subr.bf16.mxu0 0
    %3063 = vmatpush1.bf16.msra.mxu0 0
    %3064 = vmatprep.subr.bf16.mxu0 0
    %3065 = vmatpush1.bf16.msra.mxu0 0
    %3066 = vmatprep.subr.bf16.mxu0 0
    %3067 = vmatpush1.bf16.msra.mxu0 0
    %3068 = vmatprep.subr.bf16.mxu0 0
    %3069 = vmatpush1.bf16.msra.mxu0 0
    %3070 = vmatprep.subr.bf16.mxu0 0
    %3071 = vmatpush1.bf16.msra.mxu0 0
    %3072 = vmatprep.subr.bf16.mxu0 0
    %3073 = vmatpush1.bf16.msra.mxu0 %v3056
    %3074 = vmatprep.subr.bf16.mxu0 0
    %3075 = vmatpush2.bf16.msra.mxu0 0
    %3076 = vmatprep.subr.bf16.mxu0 0
    %3077 = vmatpush2.bf16.msra.mxu0 0
    %3078 = vmatprep.subr.bf16.mxu0 0
    %3079 = vmatpush2.bf16.msra.mxu0 0
    %3080 = vmatprep.subr.bf16.mxu0 0
    %3081 = vmatpush2.bf16.msra.mxu0 0
    %3082 = vmatprep.subr.bf16.mxu0 0
    %3083 = vmatpush2.bf16.msra.mxu0 0
    %3084 = vmatprep.subr.bf16.mxu0 0
    %3085 = vmatpush2.bf16.msra.mxu0 0
    %3086 = vmatprep.subr.bf16.mxu0 0
    %3087 = vmatpush2.bf16.msra.mxu0 0
    %3088 = vmatprep.subr.bf16.mxu0 0
    %3089 = vmatpush2.bf16.msra.mxu0 0
    %3090 = vmatprep.mubr.bf16.mxu0 0
    %3091 = vmatmul.mubr.bf16.gmra.mxu0 %v3053
    %v3092 = vpop.f32.mrf.mxu0
    %v3093 = vadd.f32 0.0, %v3092
    %v3094 = vpop.f32.mrf.mxu0
    %v3095 = vpop.f32.mrf.mxu0
    %v3096 = vpop.f32.mrf.mxu0
    %3097 = vdwg.mxu0
    %3098 = vrot.lane.b32.xlu0 %v2658, 112
    %v3099 = vpop.permute.xlu0 %3098
    %3100 = vrot.lane.b32.xlu0 %v2660, 112
    %v3101 = vpop.permute.xlu0 %3100
    %v3103 = vsel %vm185, %v3099, 0
    %v3106 = vsel %vm185, %v3101, 0
    %3108 = vmatprep.subr.bf16.mxu0 0
    %3109 = vmatpush1.bf16.xpose.msra.mxu0 0
    %3110 = vmatprep.subr.bf16.mxu0 0
    %3111 = vmatpush1.bf16.xpose.msra.mxu0 0
    %3112 = vmatprep.subr.bf16.mxu0 0
    %3113 = vmatpush1.bf16.xpose.msra.mxu0 0
    %3114 = vmatprep.subr.bf16.mxu0 0
    %3115 = vmatpush1.bf16.xpose.msra.mxu0 0
    %3116 = vmatprep.subr.bf16.mxu0 0
    %3117 = vmatpush1.bf16.xpose.msra.mxu0 0
    %3118 = vmatprep.subr.bf16.mxu0 0
    %3119 = vmatpush1.bf16.xpose.msra.mxu0 0
    %3120 = vmatprep.subr.bf16.mxu0 0
    %3121 = vmatpush1.bf16.xpose.msra.mxu0 0
    %3122 = vmatprep.subr.bf16.mxu0 0
    %3123 = vmatpush1.bf16.xpose.msra.mxu0 %v3106
    %3124 = vmatprep.subr.bf16.mxu0 0
    %3125 = vmatpush2.bf16.xpose.msra.mxu0 0
    %3126 = vmatprep.subr.bf16.mxu0 0
    %3127 = vmatpush2.bf16.xpose.msra.mxu0 0
    %3128 = vmatprep.subr.bf16.mxu0 0
    %3129 = vmatpush2.bf16.xpose.msra.mxu0 0
    %3130 = vmatprep.subr.bf16.mxu0 0
    %3131 = vmatpush2.bf16.xpose.msra.mxu0 0
    %3132 = vmatprep.subr.bf16.mxu0 0
    %3133 = vmatpush2.bf16.xpose.msra.mxu0 0
    %3134 = vmatprep.subr.bf16.mxu0 0
    %3135 = vmatpush2.bf16.xpose.msra.mxu0 0
    %3136 = vmatprep.subr.bf16.mxu0 0
    %3137 = vmatpush2.bf16.xpose.msra.mxu0 0
    %3138 = vmatprep.subr.bf16.mxu0 0
    %3139 = vmatpush2.bf16.xpose.msra.mxu0 0
    %3140 = vmatprep.mubr.bf16.mxu0 0
    %3141 = vmatmul.mubr.bf16.gmra.mxu0 %v3103
    %v3142 = vpop.f32.mrf.mxu0
    %v3143 = vadd.f32 0.0, %v3142
    %v3144 = vpop.f32.mrf.mxu0
    %v3145 = vpop.f32.mrf.mxu0
    %v3146 = vpop.f32.mrf.mxu0
    %3147 = vdwg.mxu0
    %3148 = vrot.lane.b32.xlu0 %v2659, 112
    %v3149 = vpop.permute.xlu0 %3148
    %3150 = vrot.lane.b32.xlu0 %v2661, 112
    %v3151 = vpop.permute.xlu0 %3150
    %v3153 = vsel %vm185, %v3149, 0
    %v3156 = vsel %vm185, %v3151, 0
    %3158 = vmatprep.subr.bf16.mxu0 0
    %3159 = vmatpush1.bf16.xpose.msra.mxu0 0
    %3160 = vmatprep.subr.bf16.mxu0 0
    %3161 = vmatpush1.bf16.xpose.msra.mxu0 0
    %3162 = vmatprep.subr.bf16.mxu0 0
    %3163 = vmatpush1.bf16.xpose.msra.mxu0 0
    %3164 = vmatprep.subr.bf16.mxu0 0
    %3165 = vmatpush1.bf16.xpose.msra.mxu0 0
    %3166 = vmatprep.subr.bf16.mxu0 0
    %3167 = vmatpush1.bf16.xpose.msra.mxu0 0
    %3168 = vmatprep.subr.bf16.mxu0 0
    %3169 = vmatpush1.bf16.xpose.msra.mxu0 0
    %3170 = vmatprep.subr.bf16.mxu0 0
    %3171 = vmatpush1.bf16.xpose.msra.mxu0 0
    %3172 = vmatprep.subr.bf16.mxu0 0
    %3173 = vmatpush1.bf16.xpose.msra.mxu0 %v3156
    %3174 = vmatprep.subr.bf16.mxu0 0
    %3175 = vmatpush2.bf16.xpose.msra.mxu0 0
    %3176 = vmatprep.subr.bf16.mxu0 0
    %3177 = vmatpush2.bf16.xpose.msra.mxu0 0
    %3178 = vmatprep.subr.bf16.mxu0 0
    %3179 = vmatpush2.bf16.xpose.msra.mxu0 0
    %3180 = vmatprep.subr.bf16.mxu0 0
    %3181 = vmatpush2.bf16.xpose.msra.mxu0 0
    %3182 = vmatprep.subr.bf16.mxu0 0
    %3183 = vmatpush2.bf16.xpose.msra.mxu0 0
    %3184 = vmatprep.subr.bf16.mxu0 0
    %3185 = vmatpush2.bf16.xpose.msra.mxu0 0
    %3186 = vmatprep.subr.bf16.mxu0 0
    %3187 = vmatpush2.bf16.xpose.msra.mxu0 0
    %3188 = vmatprep.subr.bf16.mxu0 0
    %3189 = vmatpush2.bf16.xpose.msra.mxu0 0
    %3190 = vmatprep.mubr.bf16.mxu0 0
    %3191 = vmatmul.mubr.bf16.gmra.mxu0 %v3153
    %v3192 = vpop.f32.mrf.mxu0
    %v3193 = vadd.f32 0.0, %v3192
    %v3194 = vpop.f32.mrf.mxu0
    %v3195 = vpop.f32.mrf.mxu0
    %v3196 = vpop.f32.mrf.mxu0
    %3197 = vdwg.mxu0
    %v3198 = vsel %vm185, %v3143, -inf
    %3199 = vmax.xlane.f32.xlu0 %v3198
    %v3200 = vpop.xlane.xlu0 %3199
    %v3201 = vsel %vm185, %v3193, -inf
    %3202 = vmax.xlane.f32.xlu0 %v3201
    %v3203 = vpop.xlane.xlu0 %3202
    %v3204 = vsub.f32 %v3143, %v3200
    %v3205 = vsub.f32 %v3193, %v3203
    %v3206 = vmul.f32 %v3204, 1.442695
    %v3207 = vpow.pop %v3206
    %v3208 = vmul.f32 %v3205, 1.442695
    %v3209 = vpow.pop %v3208
    %v3210 = vsel %vm185, %v3207, 0.0
    %3211 = vadd.xlane.f32.xlu0 %v3210
    %v3212 = vpop.xlane.xlu0 %3211
    %v3213 = vsel %vm185, %v3209, 0.0
    %3214 = vadd.xlane.f32.xlu0 %v3213
    %v3215 = vpop.xlane.xlu0 %3214
    %v3216 = vrcp.pop %v3212
    %v3217 = vrcp.pop %v3215
    %v3218 = vmul.f32 %v3207, %v3216
    %v3219 = vmul.f32 %v3209, %v3217
    %v3220 = vpack.c.bf16 %v3218, %v3218
    %v3221 = vpack.c.bf16 %v3219, %v3219
    %3222 = vrot.lane.b32.xlu0 %v2660, 80
    %v3223 = vpop.permute.xlu0 %3222
    %v3225 = vsel %vm185, %v3220, 0
    %v3228 = vsel %vm2613, %v3223, 0
    %3230 = vmatprep.subr.bf16.mxu0 0
    %3231 = vmatpush1.bf16.msra.mxu0 0
    %3232 = vmatprep.subr.bf16.mxu0 0
    %3233 = vmatpush1.bf16.msra.mxu0 0
    %3234 = vmatprep.subr.bf16.mxu0 0
    %3235 = vmatpush1.bf16.msra.mxu0 0
    %3236 = vmatprep.subr.bf16.mxu0 0
    %3237 = vmatpush1.bf16.msra.mxu0 0
    %3238 = vmatprep.subr.bf16.mxu0 0
    %3239 = vmatpush1.bf16.msra.mxu0 0
    %3240 = vmatprep.subr.bf16.mxu0 0
    %3241 = vmatpush1.bf16.msra.mxu0 0
    %3242 = vmatprep.subr.bf16.mxu0 0
    %3243 = vmatpush1.bf16.msra.mxu0 0
    %3244 = vmatprep.subr.bf16.mxu0 0
    %3245 = vmatpush1.bf16.msra.mxu0 %v3228
    %3246 = vmatprep.subr.bf16.mxu0 0
    %3247 = vmatpush2.bf16.msra.mxu0 0
    %3248 = vmatprep.subr.bf16.mxu0 0
    %3249 = vmatpush2.bf16.msra.mxu0 0
    %3250 = vmatprep.subr.bf16.mxu0 0
    %3251 = vmatpush2.bf16.msra.mxu0 0
    %3252 = vmatprep.subr.bf16.mxu0 0
    %3253 = vmatpush2.bf16.msra.mxu0 0
    %3254 = vmatprep.subr.bf16.mxu0 0
    %3255 = vmatpush2.bf16.msra.mxu0 0
    %3256 = vmatprep.subr.bf16.mxu0 0
    %3257 = vmatpush2.bf16.msra.mxu0 0
    %3258 = vmatprep.subr.bf16.mxu0 0
    %3259 = vmatpush2.bf16.msra.mxu0 0
    %3260 = vmatprep.subr.bf16.mxu0 0
    %3261 = vmatpush2.bf16.msra.mxu0 0
    %3262 = vmatprep.mubr.bf16.mxu0 0
    %3263 = vmatmul.mubr.bf16.gmra.mxu0 %v3225
    %v3264 = vpop.f32.mrf.mxu0
    %v3265 = vadd.f32 0.0, %v3264
    %v3266 = vpop.f32.mrf.mxu0
    %v3267 = vpop.f32.mrf.mxu0
    %v3268 = vpop.f32.mrf.mxu0
    %3269 = vdwg.mxu0
    %3270 = vrot.lane.b32.xlu0 %v2661, 80
    %v3271 = vpop.permute.xlu0 %3270
    %v3273 = vsel %vm185, %v3221, 0
    %v3276 = vsel %vm2613, %v3271, 0
    %3278 = vmatprep.subr.bf16.mxu0 0
    %3279 = vmatpush1.bf16.msra.mxu0 0
    %3280 = vmatprep.subr.bf16.mxu0 0
    %3281 = vmatpush1.bf16.msra.mxu0 0
    %3282 = vmatprep.subr.bf16.mxu0 0
    %3283 = vmatpush1.bf16.msra.mxu0 0
    %3284 = vmatprep.subr.bf16.mxu0 0
    %3285 = vmatpush1.bf16.msra.mxu0 0
    %3286 = vmatprep.subr.bf16.mxu0 0
    %3287 = vmatpush1.bf16.msra.mxu0 0
    %3288 = vmatprep.subr.bf16.mxu0 0
    %3289 = vmatpush1.bf16.msra.mxu0 0
    %3290 = vmatprep.subr.bf16.mxu0 0
    %3291 = vmatpush1.bf16.msra.mxu0 0
    %3292 = vmatprep.subr.bf16.mxu0 0
    %3293 = vmatpush1.bf16.msra.mxu0 %v3276
    %3294 = vmatprep.subr.bf16.mxu0 0
    %3295 = vmatpush2.bf16.msra.mxu0 0
    %3296 = vmatprep.subr.bf16.mxu0 0
    %3297 = vmatpush2.bf16.msra.mxu0 0
    %3298 = vmatprep.subr.bf16.mxu0 0
    %3299 = vmatpush2.bf16.msra.mxu0 0
    %3300 = vmatprep.subr.bf16.mxu0 0
    %3301 = vmatpush2.bf16.msra.mxu0 0
    %3302 = vmatprep.subr.bf16.mxu0 0
    %3303 = vmatpush2.bf16.msra.mxu0 0
    %3304 = vmatprep.subr.bf16.mxu0 0
    %3305 = vmatpush2.bf16.msra.mxu0 0
    %3306 = vmatprep.subr.bf16.mxu0 0
    %3307 = vmatpush2.bf16.msra.mxu0 0
    %3308 = vmatprep.subr.bf16.mxu0 0
    %3309 = vmatpush2.bf16.msra.mxu0 0
    %3310 = vmatprep.mubr.bf16.mxu0 0
    %3311 = vmatmul.mubr.bf16.gmra.mxu0 %v3273
    %v3312 = vpop.f32.mrf.mxu0
    %v3313 = vadd.f32 0.0, %v3312
    %v3314 = vpop.f32.mrf.mxu0
    %v3315 = vpop.f32.mrf.mxu0
    %v3316 = vpop.f32.mrf.mxu0
    %3317 = vdwg.mxu0
    %3318 = vrot.lane.b32.xlu0 %v2658, 104
    %v3319 = vpop.permute.xlu0 %3318
    %3320 = vrot.lane.b32.xlu0 %v2660, 104
    %v3321 = vpop.permute.xlu0 %3320
    %v3323 = vsel %vm185, %v3319, 0
    %v3326 = vsel %vm185, %v3321, 0
    %3328 = vmatprep.subr.bf16.mxu0 0
    %3329 = vmatpush1.bf16.xpose.msra.mxu0 0
    %3330 = vmatprep.subr.bf16.mxu0 0
    %3331 = vmatpush1.bf16.xpose.msra.mxu0 0
    %3332 = vmatprep.subr.bf16.mxu0 0
    %3333 = vmatpush1.bf16.xpose.msra.mxu0 0
    %3334 = vmatprep.subr.bf16.mxu0 0
    %3335 = vmatpush1.bf16.xpose.msra.mxu0 0
    %3336 = vmatprep.subr.bf16.mxu0 0
    %3337 = vmatpush1.bf16.xpose.msra.mxu0 0
    %3338 = vmatprep.subr.bf16.mxu0 0
    %3339 = vmatpush1.bf16.xpose.msra.mxu0 0
    %3340 = vmatprep.subr.bf16.mxu0 0
    %3341 = vmatpush1.bf16.xpose.msra.mxu0 0
    %3342 = vmatprep.subr.bf16.mxu0 0
    %3343 = vmatpush1.bf16.xpose.msra.mxu0 %v3326
    %3344 = vmatprep.subr.bf16.mxu0 0
    %3345 = vmatpush2.bf16.xpose.msra.mxu0 0
    %3346 = vmatprep.subr.bf16.mxu0 0
    %3347 = vmatpush2.bf16.xpose.msra.mxu0 0
    %3348 = vmatprep.subr.bf16.mxu0 0
    %3349 = vmatpush2.bf16.xpose.msra.mxu0 0
    %3350 = vmatprep.subr.bf16.mxu0 0
    %3351 = vmatpush2.bf16.xpose.msra.mxu0 0
    %3352 = vmatprep.subr.bf16.mxu0 0
    %3353 = vmatpush2.bf16.xpose.msra.mxu0 0
    %3354 = vmatprep.subr.bf16.mxu0 0
    %3355 = vmatpush2.bf16.xpose.msra.mxu0 0
    %3356 = vmatprep.subr.bf16.mxu0 0
    %3357 = vmatpush2.bf16.xpose.msra.mxu0 0
    %3358 = vmatprep.subr.bf16.mxu0 0
    %3359 = vmatpush2.bf16.xpose.msra.mxu0 0
    %3360 = vmatprep.mubr.bf16.mxu0 0
    %3361 = vmatmul.mubr.bf16.gmra.mxu0 %v3323
    %v3362 = vpop.f32.mrf.mxu0
    %v3363 = vadd.f32 0.0, %v3362
    %v3364 = vpop.f32.mrf.mxu0
    %v3365 = vpop.f32.mrf.mxu0
    %v3366 = vpop.f32.mrf.mxu0
    %3367 = vdwg.mxu0
    %3368 = vrot.lane.b32.xlu0 %v2659, 104
    %v3369 = vpop.permute.xlu0 %3368
    %3370 = vrot.lane.b32.xlu0 %v2661, 104
    %v3371 = vpop.permute.xlu0 %3370
    %v3373 = vsel %vm185, %v3369, 0
    %v3376 = vsel %vm185, %v3371, 0
    %3378 = vmatprep.subr.bf16.mxu0 0
    %3379 = vmatpush1.bf16.xpose.msra.mxu0 0
    %3380 = vmatprep.subr.bf16.mxu0 0
    %3381 = vmatpush1.bf16.xpose.msra.mxu0 0
    %3382 = vmatprep.subr.bf16.mxu0 0
    %3383 = vmatpush1.bf16.xpose.msra.mxu0 0
    %3384 = vmatprep.subr.bf16.mxu0 0
    %3385 = vmatpush1.bf16.xpose.msra.mxu0 0
    %3386 = vmatprep.subr.bf16.mxu0 0
    %3387 = vmatpush1.bf16.xpose.msra.mxu0 0
    %3388 = vmatprep.subr.bf16.mxu0 0
    %3389 = vmatpush1.bf16.xpose.msra.mxu0 0
    %3390 = vmatprep.subr.bf16.mxu0 0
    %3391 = vmatpush1.bf16.xpose.msra.mxu0 0
    %3392 = vmatprep.subr.bf16.mxu0 0
    %3393 = vmatpush1.bf16.xpose.msra.mxu0 %v3376
    %3394 = vmatprep.subr.bf16.mxu0 0
    %3395 = vmatpush2.bf16.xpose.msra.mxu0 0
    %3396 = vmatprep.subr.bf16.mxu0 0
    %3397 = vmatpush2.bf16.xpose.msra.mxu0 0
    %3398 = vmatprep.subr.bf16.mxu0 0
    %3399 = vmatpush2.bf16.xpose.msra.mxu0 0
    %3400 = vmatprep.subr.bf16.mxu0 0
    %3401 = vmatpush2.bf16.xpose.msra.mxu0 0
    %3402 = vmatprep.subr.bf16.mxu0 0
    %3403 = vmatpush2.bf16.xpose.msra.mxu0 0
    %3404 = vmatprep.subr.bf16.mxu0 0
    %3405 = vmatpush2.bf16.xpose.msra.mxu0 0
    %3406 = vmatprep.subr.bf16.mxu0 0
    %3407 = vmatpush2.bf16.xpose.msra.mxu0 0
    %3408 = vmatprep.subr.bf16.mxu0 0
    %3409 = vmatpush2.bf16.xpose.msra.mxu0 0
    %3410 = vmatprep.mubr.bf16.mxu0 0
    %3411 = vmatmul.mubr.bf16.gmra.mxu0 %v3373
    %v3412 = vpop.f32.mrf.mxu0
    %v3413 = vadd.f32 0.0, %v3412
    %v3414 = vpop.f32.mrf.mxu0
    %v3415 = vpop.f32.mrf.mxu0
    %v3416 = vpop.f32.mrf.mxu0
    %3417 = vdwg.mxu0
    %v3418 = vsel %vm185, %v3363, -inf
    %3419 = vmax.xlane.f32.xlu0 %v3418
    %v3420 = vpop.xlane.xlu0 %3419
    %v3421 = vsel %vm185, %v3413, -inf
    %3422 = vmax.xlane.f32.xlu0 %v3421
    %v3423 = vpop.xlane.xlu0 %3422
    %v3424 = vsub.f32 %v3363, %v3420
    %v3425 = vsub.f32 %v3413, %v3423
    %v3426 = vmul.f32 %v3424, 1.442695
    %v3427 = vpow.pop %v3426
    %v3428 = vmul.f32 %v3425, 1.442695
    %v3429 = vpow.pop %v3428
    %v3430 = vsel %vm185, %v3427, 0.0
    %3431 = vadd.xlane.f32.xlu0 %v3430
    %v3432 = vpop.xlane.xlu0 %3431
    %v3433 = vsel %vm185, %v3429, 0.0
    %3434 = vadd.xlane.f32.xlu0 %v3433
    %v3435 = vpop.xlane.xlu0 %3434
    %v3436 = vrcp.pop %v3432
    %v3437 = vrcp.pop %v3435
    %v3438 = vmul.f32 %v3427, %v3436
    %v3439 = vmul.f32 %v3429, %v3437
    %v3440 = vpack.c.bf16 %v3438, %v3438
    %v3441 = vpack.c.bf16 %v3439, %v3439
    %3442 = vrot.lane.b32.xlu0 %v2660, 72
    %v3443 = vpop.permute.xlu0 %3442
    %v3445 = vsel %vm185, %v3440, 0
    %v3448 = vsel %vm2613, %v3443, 0
    %3450 = vmatprep.subr.bf16.mxu0 0
    %3451 = vmatpush1.bf16.msra.mxu0 0
    %3452 = vmatprep.subr.bf16.mxu0 0
    %3453 = vmatpush1.bf16.msra.mxu0 0
    %3454 = vmatprep.subr.bf16.mxu0 0
    %3455 = vmatpush1.bf16.msra.mxu0 0
    %3456 = vmatprep.subr.bf16.mxu0 0
    %3457 = vmatpush1.bf16.msra.mxu0 0
    %3458 = vmatprep.subr.bf16.mxu0 0
    %3459 = vmatpush1.bf16.msra.mxu0 0
    %3460 = vmatprep.subr.bf16.mxu0 0
    %3461 = vmatpush1.bf16.msra.mxu0 0
    %3462 = vmatprep.subr.bf16.mxu0 0
    %3463 = vmatpush1.bf16.msra.mxu0 0
    %3464 = vmatprep.subr.bf16.mxu0 0
    %3465 = vmatpush1.bf16.msra.mxu0 %v3448
    %3466 = vmatprep.subr.bf16.mxu0 0
    %3467 = vmatpush2.bf16.msra.mxu0 0
    %3468 = vmatprep.subr.bf16.mxu0 0
    %3469 = vmatpush2.bf16.msra.mxu0 0
    %3470 = vmatprep.subr.bf16.mxu0 0
    %3471 = vmatpush2.bf16.msra.mxu0 0
    %3472 = vmatprep.subr.bf16.mxu0 0
    %3473 = vmatpush2.bf16.msra.mxu0 0
    %3474 = vmatprep.subr.bf16.mxu0 0
    %3475 = vmatpush2.bf16.msra.mxu0 0
    %3476 = vmatprep.subr.bf16.mxu0 0
    %3477 = vmatpush2.bf16.msra.mxu0 0
    %3478 = vmatprep.subr.bf16.mxu0 0
    %3479 = vmatpush2.bf16.msra.mxu0 0
    %3480 = vmatprep.subr.bf16.mxu0 0
    %3481 = vmatpush2.bf16.msra.mxu0 0
    %3482 = vmatprep.mubr.bf16.mxu0 0
    %3483 = vmatmul.mubr.bf16.gmra.mxu0 %v3445
    %v3484 = vpop.f32.mrf.mxu0
    %v3485 = vadd.f32 0.0, %v3484
    %v3486 = vpop.f32.mrf.mxu0
    %v3487 = vpop.f32.mrf.mxu0
    %v3488 = vpop.f32.mrf.mxu0
    %3489 = vdwg.mxu0
    %3490 = vrot.lane.b32.xlu0 %v2661, 72
    %v3491 = vpop.permute.xlu0 %3490
    %v3493 = vsel %vm185, %v3441, 0
    %v3496 = vsel %vm2613, %v3491, 0
    %3498 = vmatprep.subr.bf16.mxu0 0
    %3499 = vmatpush1.bf16.msra.mxu0 0
    %3500 = vmatprep.subr.bf16.mxu0 0
    %3501 = vmatpush1.bf16.msra.mxu0 0
    %3502 = vmatprep.subr.bf16.mxu0 0
    %3503 = vmatpush1.bf16.msra.mxu0 0
    %3504 = vmatprep.subr.bf16.mxu0 0
    %3505 = vmatpush1.bf16.msra.mxu0 0
    %3506 = vmatprep.subr.bf16.mxu0 0
    %3507 = vmatpush1.bf16.msra.mxu0 0
    %3508 = vmatprep.subr.bf16.mxu0 0
    %3509 = vmatpush1.bf16.msra.mxu0 0
    %3510 = vmatprep.subr.bf16.mxu0 0
    %3511 = vmatpush1.bf16.msra.mxu0 0
    %3512 = vmatprep.subr.bf16.mxu0 0
    %3513 = vmatpush1.bf16.msra.mxu0 %v3496
    %3514 = vmatprep.subr.bf16.mxu0 0
    %3515 = vmatpush2.bf16.msra.mxu0 0
    %3516 = vmatprep.subr.bf16.mxu0 0
    %3517 = vmatpush2.bf16.msra.mxu0 0
    %3518 = vmatprep.subr.bf16.mxu0 0
    %3519 = vmatpush2.bf16.msra.mxu0 0
    %3520 = vmatprep.subr.bf16.mxu0 0
    %3521 = vmatpush2.bf16.msra.mxu0 0
    %3522 = vmatprep.subr.bf16.mxu0 0
    %3523 = vmatpush2.bf16.msra.mxu0 0
    %3524 = vmatprep.subr.bf16.mxu0 0
    %3525 = vmatpush2.bf16.msra.mxu0 0
    %3526 = vmatprep.subr.bf16.mxu0 0
    %3527 = vmatpush2.bf16.msra.mxu0 0
    %3528 = vmatprep.subr.bf16.mxu0 0
    %3529 = vmatpush2.bf16.msra.mxu0 0
    %3530 = vmatprep.mubr.bf16.mxu0 0
    %3531 = vmatmul.mubr.bf16.gmra.mxu0 %v3493
    %v3532 = vpop.f32.mrf.mxu0
    %v3533 = vadd.f32 0.0, %v3532
    %v3534 = vpop.f32.mrf.mxu0
    %v3535 = vpop.f32.mrf.mxu0
    %v3536 = vpop.f32.mrf.mxu0
    %3537 = vdwg.mxu0
    %3540 = vrot.lane.b32.xlu0 %v3045, 8
    %v3541 = vpop.permute.xlu0 %3540
    %3542 = vrot.lane.b32.xlu0 %v3093, 8
    %v3543 = vpop.permute.xlu0 %3542
    %3548 = vrot.lane.b32.xlu0 %v3265, 16
    %v3549 = vpop.permute.xlu0 %3548
    %3550 = vrot.lane.b32.xlu0 %v3313, 16
    %v3551 = vpop.permute.xlu0 %3550
    %3556 = vrot.lane.b32.xlu0 %v3485, 24
    %v3557 = vpop.permute.xlu0 %3556
    %3558 = vrot.lane.b32.xlu0 %v3533, 24
    %v3559 = vpop.permute.xlu0 %3558
    %v3562 = vsel %vm185, %v2822, %v3541
    %v3563 = vsel %vm185, %v2871, %v3543
    %v3564 = vsel %vm280, %v3562, %v3549
    %v3565 = vsel %vm280, %v3563, %v3551
    %v3566 = vsel %vm1207, %v3564, %v3557
    %v3567 = vsel %vm1207, %v3565, %v3559
    %v3568 = vld [vmem:[%s3 + $0x50] sm:$0xf]
    %v3569 = vld [vmem:[%s3 + $0x54] sm:$0xf]
    %v3570 = vld [vmem:[%s3 + $0x58] sm:$0xf]
    %v3571 = vld [vmem:[%s3 + $0x5c] sm:$0xf]
    %v3572 = vpack.c.bf16 %v3567, %v3566
    %v3573 = vld [vmem:[%s5 + $0x48] sm:$0x1]
    %v3574 = vlaneseq
    %v3575 = vshrl.u32 %v3574, 7
    %v3576 = vsub.s32 0, %v3575
    %v3577 = vrot.slane %v3573, %v3576
    %v3582 = vunpack.c.l.b16 %v3568
    %v3583 = vunpack.c.l.b16 %v3569
    %v3584 = vunpack.c.l.b16 %v3570
    %v3585 = vunpack.c.l.b16 %v3571
    %v3586 = vpack.c.b16 %v3583, %v3582
    %v3587 = vpack.c.b16 %v3585, %v3584
    %v3591 = vsel %vm55, %v3572, 0
    %3593 = vmatprep.subr.bf16.mxu0 0
    %3594 = vmatpush1.bf16.msra.mxu0 0
    %3595 = vmatprep.subr.bf16.mxu0 0
    %3596 = vmatpush1.bf16.msra.mxu0 0
    %3597 = vmatprep.subr.bf16.mxu0 0
    %3598 = vmatpush1.bf16.msra.mxu0 0
    %3599 = vmatprep.subr.bf16.mxu0 0
    %3600 = vmatpush1.bf16.msra.mxu0 0
    %3601 = vmatprep.subr.bf16.mxu0 0
    %3602 = vmatpush1.bf16.msra.mxu0 0
    %3603 = vmatprep.subr.bf16.mxu0 0
    %3604 = vmatpush1.bf16.msra.mxu0 0
    %3605 = vmatprep.subr.bf16.mxu0 0
    %3606 = vmatpush1.bf16.msra.mxu0 %v3587
    %3607 = vmatprep.subr.bf16.mxu0 0
    %3608 = vmatpush1.bf16.msra.mxu0 %v3586
    %3609 = vmatprep.subr.bf16.mxu0 0
    %3610 = vmatpush2.bf16.msra.mxu0 0
    %3611 = vmatprep.subr.bf16.mxu0 0
    %3612 = vmatpush2.bf16.msra.mxu0 0
    %3613 = vmatprep.subr.bf16.mxu0 0
    %3614 = vmatpush2.bf16.msra.mxu0 0
    %3615 = vmatprep.subr.bf16.mxu0 0
    %3616 = vmatpush2.bf16.msra.mxu0 0
    %3617 = vmatprep.subr.bf16.mxu0 0
    %3618 = vmatpush2.bf16.msra.mxu0 0
    %3619 = vmatprep.subr.bf16.mxu0 0
    %3620 = vmatpush2.bf16.msra.mxu0 0
    %3621 = vmatprep.subr.bf16.mxu0 0
    %3622 = vmatpush2.bf16.msra.mxu0 0
    %3623 = vmatprep.subr.bf16.mxu0 0
    %3624 = vmatpush2.bf16.msra.mxu0 0
    %3625 = vmatprep.mubr.bf16.mxu0 0
    %3626 = vmatmul.mubr.bf16.gmra.mxu0 %v3591
    %v3627 = vpop.f32.mrf.mxu0
    %v3628 = vadd.f32 %v3577, %v3627
    %v3629 = vpop.f32.mrf.mxu0
    %v3630 = vpop.f32.mrf.mxu0
    %v3631 = vadd.f32 %v3577, %v3630
    %v3632 = vpop.f32.mrf.mxu0
    %3633 = vdwg.mxu0
    %v3634 = vadd.f32 %v3628, %v2522
    %v3635 = vadd.f32 %v3631, %v2523
    %v3636 = vld [vmem:[%s5 + $0x50] sm:$0x1]
    %v3637 = vld [vmem:[%s5 + $0x58] sm:$0x1]
    %v3638 = vsel %vm55, %v3634, 0.0
    %3639 = vadd.xlane.f32.xlu0 %v3638
    %v3640 = vpop.xlane.xlu0 %3639
    %v3641 = vsel %vm55, %v3635, 0.0
    %3642 = vadd.xlane.f32.xlu0 %v3641
    %v3643 = vpop.xlane.xlu0 %3642
    %v3644 = vmul.f32 %v3640, %v1308
    %v3645 = vmul.f32 %v3643, %v1308
    %v3646 = vsub.f32 %v3634, %v3644
    %v3647 = vsub.f32 %v3635, %v3645
    %v3648 = vmul.f32 %v3646, %v3646
    %v3649 = vmul.f32 %v3647, %v3647
    %v3650 = vsel %vm55, %v3648, 0.0
    %3651 = vadd.xlane.f32.xlu0 %v3650
    %v3652 = vpop.xlane.xlu0 %3651
    %v3653 = vsel %vm55, %v3649, 0.0
    %3654 = vadd.xlane.f32.xlu0 %v3653
    %v3655 = vpop.xlane.xlu0 %3654
    %v3656 = vmul.f32 %v3652, %v1308
    %v3657 = vmul.f32 %v3655, %v1308
    %v3658 = vadd.f32 %v3656, 1e-12
    %v3659 = vadd.f32 %v3657, 1e-12
    %v3660 = vrsqrt.pop %v3658
    %v3661 = vrsqrt.pop %v3659
    %v3662 = vmul.f32 %v3646, %v3660
    %v3663 = vmul.f32 %v3647, %v3661
    %v3664 = vlaneseq
    %v3665 = vshrl.u32 %v3664, 7
    %v3666 = vsub.s32 0, %v3665
    %v3667 = vrot.slane %v3636, %v3666
    %v3668 = vmul.f32 %v3662, %v3667
    %v3669 = vmul.f32 %v3663, %v3667
    %v3670 = vlaneseq
    %v3671 = vshrl.u32 %v3670, 7
    %v3672 = vsub.s32 0, %v3671
    %v3673 = vrot.slane %v3637, %v3672
    %v3674 = vadd.f32 %v3668, %v3673
    %v3675 = vadd.f32 %v3669, %v3673
    %v3676 = vld [vmem:[%s4 + $0x38] sm:$0xf]
    %v3677 = vld [vmem:[%s4 + $0x3c] sm:$0xf]
    %v3678 = vld [vmem:[%s4 + $0x40] sm:$0xf]
    %v3679 = vld [vmem:[%s4 + $0x44] sm:$0xf]
    %v3680 = vpack.c.bf16 %v3675, %v3674
    %v3681 = vld [vmem:[%s6 + $0x18] sm:$0x1]
    %v3682 = vlaneseq
    %v3683 = vshrl.u32 %v3682, 7
    %v3684 = vsub.s32 0, %v3683
    %v3685 = vrot.slane %v3681, %v3684
    %v3690 = vunpack.c.l.b16 %v3676
    %v3691 = vunpack.c.l.b16 %v3677
    %v3692 = vunpack.c.l.b16 %v3678
    %v3693 = vunpack.c.l.b16 %v3679
    %v3694 = vpack.c.b16 %v3691, %v3690
    %v3695 = vpack.c.b16 %v3693, %v3692
    %v3699 = vsel %vm55, %v3680, 0
    %3701 = vmatprep.subr.bf16.mxu0 0
    %3702 = vmatpush1.bf16.msra.mxu0 0
    %3703 = vmatprep.subr.bf16.mxu0 0
    %3704 = vmatpush1.bf16.msra.mxu0 0
    %3705 = vmatprep.subr.bf16.mxu0 0
    %3706 = vmatpush1.bf16.msra.mxu0 0
    %3707 = vmatprep.subr.bf16.mxu0 0
    %3708 = vmatpush1.bf16.msra.mxu0 0
    %3709 = vmatprep.subr.bf16.mxu0 0
    %3710 = vmatpush1.bf16.msra.mxu0 0
    %3711 = vmatprep.subr.bf16.mxu0 0
    %3712 = vmatpush1.bf16.msra.mxu0 0
    %3713 = vmatprep.subr.bf16.mxu0 0
    %3714 = vmatpush1.bf16.msra.mxu0 %v3695
    %3715 = vmatprep.subr.bf16.mxu0 0
    %3716 = vmatpush1.bf16.msra.mxu0 %v3694
    %3717 = vmatprep.subr.bf16.mxu0 0
    %3718 = vmatpush2.bf16.msra.mxu0 0
    %3719 = vmatprep.subr.bf16.mxu0 0
    %3720 = vmatpush2.bf16.msra.mxu0 0
    %3721 = vmatprep.subr.bf16.mxu0 0
    %3722 = vmatpush2.bf16.msra.mxu0 0
    %3723 = vmatprep.subr.bf16.mxu0 0
    %3724 = vmatpush2.bf16.msra.mxu0 0
    %3725 = vmatprep.subr.bf16.mxu0 0
    %3726 = vmatpush2.bf16.msra.mxu0 0
    %3727 = vmatprep.subr.bf16.mxu0 0
    %3728 = vmatpush2.bf16.msra.mxu0 0
    %3729 = vmatprep.subr.bf16.mxu0 0
    %3730 = vmatpush2.bf16.msra.mxu0 0
    %3731 = vmatprep.subr.bf16.mxu0 0
    %3732 = vmatpush2.bf16.msra.mxu0 0
    %3733 = vmatprep.mubr.bf16.mxu0 0
    %3734 = vmatmul.mubr.bf16.gmra.mxu0 %v3699
    %v3735 = vpop.f32.mrf.mxu0
    %v3736 = vadd.f32 %v3685, %v3735
    %v3737 = vpop.f32.mrf.mxu0
    %v3738 = vpop.f32.mrf.mxu0
    %v3739 = vadd.f32 %v3685, %v3738
    %v3740 = vpop.f32.mrf.mxu0
    %3741 = vdwg.mxu0
    %v3742 = vmul.f32 %v3736, 0.5
    %v3743 = vmul.f32 %v3739, 0.5
    %v3744 = vmul.f32 %v3736, 0.70710677
    %v3745 = vmul.f32 %v3739, 0.70710677
    %vm3746 = vcmp.ge.f32.partialorder %v3744, 0.0
    %vm3747 = vcmp.ge.f32.partialorder %v3745, 0.0
    %v3748 = vsel %vm3746, 1.0, -1.0
    %v3749 = vsel %vm3747, 1.0, -1.0
    %v3750 = vand.u32 2147483647, %v3744
    %v3751 = vand.u32 2147483647, %v3745
    %v3752 = vmul.f32 %v3750, 0.3275911
    %v3753 = vmul.f32 %v3751, 0.3275911
    %v3754 = vadd.f32 %v3752, 1.0
    %v3755 = vadd.f32 %v3753, 1.0
    %v3756 = vrcp.pop %v3754
    %v3757 = vmul.f32 1.0, %v3756
    %v3758 = vrcp.pop %v3755
    %v3759 = vmul.f32 1.0, %v3758
    %v3760 = vmul.f32 %v3757, 1.0614054
    %v3761 = vmul.f32 %v3759, 1.0614054
    %v3762 = vadd.f32 %v3760, -1.4531521
    %v3763 = vadd.f32 %v3761, -1.4531521
    %v3764 = vmul.f32 %v3762, %v3757
    %v3765 = vmul.f32 %v3763, %v3759
    %v3766 = vadd.f32 %v3764, 1.4214138
    %v3767 = vadd.f32 %v3765, 1.4214138
    %v3768 = vmul.f32 %v3766, %v3757
    %v3769 = vmul.f32 %v3767, %v3759
    %v3770 = vadd.f32 %v3768, -0.28449672
    %v3771 = vadd.f32 %v3769, -0.28449672
    %v3772 = vmul.f32 %v3770, %v3757
    %v3773 = vmul.f32 %v3771, %v3759
    %v3774 = vadd.f32 %v3772, 0.2548296
    %v3775 = vadd.f32 %v3773, 0.2548296
    %v3776 = vmul.f32 %v3774, %v3757
    %v3777 = vmul.f32 %v3775, %v3759
    %v3778 = vsub.f32 0.0, %v3750
    %v3779 = vsub.f32 0.0, %v3751
    %v3780 = vmul.f32 %v3778, %v3750
    %v3781 = vmul.f32 %v3779, %v3751
    %v3782 = vmul.f32 %v3780, 1.442695
    %v3783 = vpow.pop %v3782
    %v3784 = vmul.f32 %v3781, 1.442695
    %v3785 = vpow.pop %v3784
    %v3786 = vmul.f32 %v3776, %v3783
    %v3787 = vmul.f32 %v3777, %v3785
    %v3788 = vsub.f32 1.0, %v3786
    %v3789 = vsub.f32 1.0, %v3787
    %v3790 = vmul.f32 %v3748, %v3788
    %v3791 = vmul.f32 %v3749, %v3789
    %v3792 = vadd.f32 %v3790, 1.0
    %v3793 = vadd.f32 %v3791, 1.0
    %v3794 = vmul.f32 %v3742, %v3792
    %v3795 = vmul.f32 %v3743, %v3793
    %v3796 = vld [vmem:[%s3 + $0x60] sm:$0xf]
    %v3797 = vld [vmem:[%s3 + $0x64] sm:$0xf]
    %v3798 = vld [vmem:[%s3 + $0x68] sm:$0xf]
    %v3799 = vld [vmem:[%s3 + $0x6c] sm:$0xf]
    %v3800 = vld [vmem:[%s3 + $0x70] sm:$0xf]
    %v3801 = vld [vmem:[%s3 + $0x74] sm:$0xf]
    %v3802 = vld [vmem:[%s3 + $0x78] sm:$0xf]
    %v3803 = vld [vmem:[%s3 + $0x7c] sm:$0xf]
    %v3804 = vpack.c.bf16 %v3795, %v3794
    %v3805 = vld [vmem:[%s5 + $0x60] sm:$0x1]
    %v3806 = vlaneseq
    %v3807 = vshrl.u32 %v3806, 7
    %v3808 = vsub.s32 0, %v3807
    %v3809 = vrot.slane %v3805, %v3808
    %v3818 = vunpack.c.l.b16 %v3796
    %v3819 = vunpack.c.l.b16 %v3797
    %v3820 = vunpack.c.l.b16 %v3798
    %v3821 = vunpack.c.l.b16 %v3799
    %v3822 = vunpack.c.l.b16 %v3800
    %v3823 = vunpack.c.l.b16 %v3801
    %v3824 = vunpack.c.l.b16 %v3802
    %v3825 = vunpack.c.l.b16 %v3803
    %v3826 = vpack.c.b16 %v3819, %v3818
    %v3827 = vpack.c.b16 %v3821, %v3820
    %v3828 = vpack.c.b16 %v3823, %v3822
    %v3829 = vpack.c.b16 %v3825, %v3824
    %vm3834 = vcmask 523264
    %v3836 = vsel %vm3834, %v3804, 0
    %3838 = vmatprep.subr.bf16.mxu0 0
    %3839 = vmatpush1.bf16.msra.mxu0 0
    %3840 = vmatprep.subr.bf16.mxu0 0
    %3841 = vmatpush1.bf16.msra.mxu0 0
    %3842 = vmatprep.subr.bf16.mxu0 0
    %3843 = vmatpush1.bf16.msra.mxu0 0
    %3844 = vmatprep.subr.bf16.mxu0 0
    %3845 = vmatpush1.bf16.msra.mxu0 0
    %3846 = vmatprep.subr.bf16.mxu0 0
    %3847 = vmatpush1.bf16.msra.mxu0 %v3829
    %3848 = vmatprep.subr.bf16.mxu0 0
    %3849 = vmatpush1.bf16.msra.mxu0 %v3828
    %3850 = vmatprep.subr.bf16.mxu0 0
    %3851 = vmatpush1.bf16.msra.mxu0 %v3827
    %3852 = vmatprep.subr.bf16.mxu0 0
    %3853 = vmatpush1.bf16.msra.mxu0 %v3826
    %3854 = vmatprep.subr.bf16.mxu0 0
    %3855 = vmatpush2.bf16.msra.mxu0 0
    %3856 = vmatprep.subr.bf16.mxu0 0
    %3857 = vmatpush2.bf16.msra.mxu0 0
    %3858 = vmatprep.subr.bf16.mxu0 0
    %3859 = vmatpush2.bf16.msra.mxu0 0
    %3860 = vmatprep.subr.bf16.mxu0 0
    %3861 = vmatpush2.bf16.msra.mxu0 0
    %3862 = vmatprep.subr.bf16.mxu0 0
    %3863 = vmatpush2.bf16.msra.mxu0 0
    %3864 = vmatprep.subr.bf16.mxu0 0
    %3865 = vmatpush2.bf16.msra.mxu0 0
    %3866 = vmatprep.subr.bf16.mxu0 0
    %3867 = vmatpush2.bf16.msra.mxu0 0
    %3868 = vmatprep.subr.bf16.mxu0 0
    %3869 = vmatpush2.bf16.msra.mxu0 0
    %3870 = vmatprep.mubr.bf16.mxu0 0
    %3871 = vmatmul.mubr.bf16.gmra.mxu0 %v3836
    %v3872 = vpop.f32.mrf.mxu0
    %v3873 = vadd.f32 %v3809, %v3872
    %v3874 = vpop.f32.mrf.mxu0
    %v3875 = vpop.f32.mrf.mxu0
    %v3876 = vadd.f32 %v3809, %v3875
    %v3877 = vpop.f32.mrf.mxu0
    %3878 = vdwg.mxu0
    %v3879 = vadd.f32 %v3873, %v3674
    %v3880 = vadd.f32 %v3876, %v3675
    %v3881 = vld [vmem:[%s5 + $0x68] sm:$0x1]
    %v3882 = vld [vmem:[%s5 + $0x70] sm:$0x1]
    %v3883 = vsel %vm55, %v3879, 0.0
    %3884 = vadd.xlane.f32.xlu0 %v3883
    %v3885 = vpop.xlane.xlu0 %3884
    %v3886 = vsel %vm55, %v3880, 0.0
    %3887 = vadd.xlane.f32.xlu0 %v3886
    %v3888 = vpop.xlane.xlu0 %3887
    %v3889 = vmul.f32 %v3885, %v1308
    %v3890 = vmul.f32 %v3888, %v1308
    %v3891 = vsub.f32 %v3879, %v3889
    %v3892 = vsub.f32 %v3880, %v3890
    %v3893 = vmul.f32 %v3891, %v3891
    %v3894 = vmul.f32 %v3892, %v3892
    %v3895 = vsel %vm55, %v3893, 0.0
    %3896 = vadd.xlane.f32.xlu0 %v3895
    %v3897 = vpop.xlane.xlu0 %3896
    %v3898 = vsel %vm55, %v3894, 0.0
    %3899 = vadd.xlane.f32.xlu0 %v3898
    %v3900 = vpop.xlane.xlu0 %3899
    %v3901 = vmul.f32 %v3897, %v1308
    %v3902 = vmul.f32 %v3900, %v1308
    %v3903 = vadd.f32 %v3901, 1e-12
    %v3904 = vadd.f32 %v3902, 1e-12
    %v3905 = vrsqrt.pop %v3903
    %v3906 = vrsqrt.pop %v3904
    %v3907 = vmul.f32 %v3891, %v3905
    %v3908 = vmul.f32 %v3892, %v3906
    %v3909 = vlaneseq
    %v3910 = vshrl.u32 %v3909, 7
    %v3911 = vsub.s32 0, %v3910
    %v3912 = vrot.slane %v3881, %v3911
    %v3913 = vmul.f32 %v3907, %v3912
    %v3914 = vmul.f32 %v3908, %v3912
    %v3915 = vlaneseq
    %v3916 = vshrl.u32 %v3915, 7
    %v3917 = vsub.s32 0, %v3916
    %v3918 = vrot.slane %v3882, %v3917
    %v3919 = vadd.f32 %v3913, %v3918
    %v3920 = vadd.f32 %v3914, %v3918
    %v3921 = vld [vmem:[%s4 + $0x48] sm:$0xf]
    %v3922 = vld [vmem:[%s4 + $0x4c] sm:$0xf]
    %v3923 = vld [vmem:[%s4 + $0x50] sm:$0xf]
    %v3924 = vld [vmem:[%s4 + $0x54] sm:$0xf]
    %v3925 = vpack.c.bf16 %v1364, %v1362
    %v3926 = vld [vmem:[%s6 + $0x20] sm:$0x1]
    %v3927 = vlaneseq
    %v3928 = vshrl.u32 %v3927, 7
    %v3929 = vsub.s32 0, %v3928
    %v3930 = vrot.slane %v3926, %v3929
    %v3935 = vunpack.c.l.b16 %v3921
    %v3936 = vunpack.c.l.b16 %v3922
    %v3937 = vunpack.c.l.b16 %v3923
    %v3938 = vunpack.c.l.b16 %v3924
    %v3939 = vpack.c.b16 %v3936, %v3935
    %v3940 = vpack.c.b16 %v3938, %v3937
    %v3944 = vsel %vm55, %v3925, 0
    %3946 = vmatprep.subr.bf16.mxu0 0
    %3947 = vmatpush1.bf16.msra.mxu0 0
    %3948 = vmatprep.subr.bf16.mxu0 0
    %3949 = vmatpush1.bf16.msra.mxu0 0
    %3950 = vmatprep.subr.bf16.mxu0 0
    %3951 = vmatpush1.bf16.msra.mxu0 0
    %3952 = vmatprep.subr.bf16.mxu0 0
    %3953 = vmatpush1.bf16.msra.mxu0 0
    %3954 = vmatprep.subr.bf16.mxu0 0
    %3955 = vmatpush1.bf16.msra.mxu0 0
    %3956 = vmatprep.subr.bf16.mxu0 0
    %3957 = vmatpush1.bf16.msra.mxu0 0
    %3958 = vmatprep.subr.bf16.mxu0 0
    %3959 = vmatpush1.bf16.msra.mxu0 %v3940
    %3960 = vmatprep.subr.bf16.mxu0 0
    %3961 = vmatpush1.bf16.msra.mxu0 %v3939
    %3962 = vmatprep.subr.bf16.mxu0 0
    %3963 = vmatpush2.bf16.msra.mxu0 0
    %3964 = vmatprep.subr.bf16.mxu0 0
    %3965 = vmatpush2.bf16.msra.mxu0 0
    %3966 = vmatprep.subr.bf16.mxu0 0
    %3967 = vmatpush2.bf16.msra.mxu0 0
    %3968 = vmatprep.subr.bf16.mxu0 0
    %3969 = vmatpush2.bf16.msra.mxu0 0
    %3970 = vmatprep.subr.bf16.mxu0 0
    %3971 = vmatpush2.bf16.msra.mxu0 0
    %3972 = vmatprep.subr.bf16.mxu0 0
    %3973 = vmatpush2.bf16.msra.mxu0 0
    %3974 = vmatprep.subr.bf16.mxu0 0
    %3975 = vmatpush2.bf16.msra.mxu0 0
    %3976 = vmatprep.subr.bf16.mxu0 0
    %3977 = vmatpush2.bf16.msra.mxu0 0
    %3978 = vmatprep.mubr.bf16.mxu0 0
    %3979 = vmatmul.mubr.bf16.gmra.mxu0 %v3944
    %v3980 = vpop.f32.mrf.mxu0
    %v3981 = vadd.f32 %v3930, %v3980
    %v3982 = vpop.f32.mrf.mxu0
    %v3983 = vpop.f32.mrf.mxu0
    %v3984 = vadd.f32 %v3930, %v3983
    %v3985 = vpop.f32.mrf.mxu0
    %3986 = vdwg.mxu0
    %v3987 = vmul.f32 %v3981, 0.5
    %v3988 = vmul.f32 %v3984, 0.5
    %v3989 = vmul.f32 %v3981, 0.70710677
    %v3990 = vmul.f32 %v3984, 0.70710677
    %vm3991 = vcmp.ge.f32.partialorder %v3989, 0.0
    %vm3992 = vcmp.ge.f32.partialorder %v3990, 0.0
    %v3993 = vsel %vm3991, 1.0, -1.0
    %v3994 = vsel %vm3992, 1.0, -1.0
    %v3995 = vand.u32 2147483647, %v3989
    %v3996 = vand.u32 2147483647, %v3990
    %v3997 = vmul.f32 %v3995, 0.3275911
    %v3998 = vmul.f32 %v3996, 0.3275911
    %v3999 = vadd.f32 %v3997, 1.0
    %v4000 = vadd.f32 %v3998, 1.0
    %v4001 = vrcp.pop %v3999
    %v4002 = vmul.f32 1.0, %v4001
    %v4003 = vrcp.pop %v4000
    %v4004 = vmul.f32 1.0, %v4003
    %v4005 = vmul.f32 %v4002, 1.0614054
    %v4006 = vmul.f32 %v4004, 1.0614054
    %v4007 = vadd.f32 %v4005, -1.4531521
    %v4008 = vadd.f32 %v4006, -1.4531521
    %v4009 = vmul.f32 %v4007, %v4002
    %v4010 = vmul.f32 %v4008, %v4004
    %v4011 = vadd.f32 %v4009, 1.4214138
    %v4012 = vadd.f32 %v4010, 1.4214138
    %v4013 = vmul.f32 %v4011, %v4002
    %v4014 = vmul.f32 %v4012, %v4004
    %v4015 = vadd.f32 %v4013, -0.28449672
    %v4016 = vadd.f32 %v4014, -0.28449672
    %v4017 = vmul.f32 %v4015, %v4002
    %v4018 = vmul.f32 %v4016, %v4004
    %v4019 = vadd.f32 %v4017, 0.2548296
    %v4020 = vadd.f32 %v4018, 0.2548296
    %v4021 = vmul.f32 %v4019, %v4002
    %v4022 = vmul.f32 %v4020, %v4004
    %v4023 = vsub.f32 0.0, %v3995
    %v4024 = vsub.f32 0.0, %v3996
    %v4025 = vmul.f32 %v4023, %v3995
    %v4026 = vmul.f32 %v4024, %v3996
    %v4027 = vmul.f32 %v4025, 1.442695
    %v4028 = vpow.pop %v4027
    %v4029 = vmul.f32 %v4026, 1.442695
    %v4030 = vpow.pop %v4029
    %v4031 = vmul.f32 %v4021, %v4028
    %v4032 = vmul.f32 %v4022, %v4030
    %v4033 = vsub.f32 1.0, %v4031
    %v4034 = vsub.f32 1.0, %v4032
    %v4035 = vmul.f32 %v3993, %v4033
    %v4036 = vmul.f32 %v3994, %v4034
    %v4037 = vadd.f32 %v4035, 1.0
    %v4038 = vadd.f32 %v4036, 1.0
    %v4039 = vmul.f32 %v3987, %v4037
    %v4040 = vmul.f32 %v3988, %v4038
    %v4041 = vld [vmem:[%s3 + $0x80] sm:$0xf]
    %v4042 = vld [vmem:[%s3 + $0x84] sm:$0xf]
    %v4043 = vld [vmem:[%s3 + $0x88] sm:$0xf]
    %v4044 = vld [vmem:[%s3 + $0x8c] sm:$0xf]
    %v4045 = vld [vmem:[%s3 + $0x90] sm:$0xf]
    %v4046 = vld [vmem:[%s3 + $0x94] sm:$0xf]
    %v4047 = vld [vmem:[%s3 + $0x98] sm:$0xf]
    %v4048 = vld [vmem:[%s3 + $0x9c] sm:$0xf]
    %v4049 = vpack.c.bf16 %v4040, %v4039
    %v4050 = vld [vmem:[%s5 + $0x78] sm:$0x1]
    %v4051 = vlaneseq
    %v4052 = vshrl.u32 %v4051, 7
    %v4053 = vsub.s32 0, %v4052
    %v4054 = vrot.slane %v4050, %v4053
    %v4063 = vunpack.c.l.b16 %v4041
    %v4064 = vunpack.c.l.b16 %v4042
    %v4065 = vunpack.c.l.b16 %v4043
    %v4066 = vunpack.c.l.b16 %v4044
    %v4067 = vunpack.c.l.b16 %v4045
    %v4068 = vunpack.c.l.b16 %v4046
    %v4069 = vunpack.c.l.b16 %v4047
    %v4070 = vunpack.c.l.b16 %v4048
    %v4071 = vpack.c.b16 %v4064, %v4063
    %v4072 = vpack.c.b16 %v4066, %v4065
    %v4073 = vpack.c.b16 %v4068, %v4067
    %v4074 = vpack.c.b16 %v4070, %v4069
    %v4080 = vsel %vm3834, %v4049, 0
    %4082 = vmatprep.subr.bf16.mxu0 0
    %4083 = vmatpush1.bf16.msra.mxu0 0
    %4084 = vmatprep.subr.bf16.mxu0 0
    %4085 = vmatpush1.bf16.msra.mxu0 0
    %4086 = vmatprep.subr.bf16.mxu0 0
    %4087 = vmatpush1.bf16.msra.mxu0 0
    %4088 = vmatprep.subr.bf16.mxu0 0
    %4089 = vmatpush1.bf16.msra.mxu0 0
    %4090 = vmatprep.subr.bf16.mxu0 0
    %4091 = vmatpush1.bf16.msra.mxu0 %v4074
    %4092 = vmatprep.subr.bf16.mxu0 0
    %4093 = vmatpush1.bf16.msra.mxu0 %v4073
    %4094 = vmatprep.subr.bf16.mxu0 0
    %4095 = vmatpush1.bf16.msra.mxu0 %v4072
    %4096 = vmatprep.subr.bf16.mxu0 0
    %4097 = vmatpush1.bf16.msra.mxu0 %v4071
    %4098 = vmatprep.subr.bf16.mxu0 0
    %4099 = vmatpush2.bf16.msra.mxu0 0
    %4100 = vmatprep.subr.bf16.mxu0 0
    %4101 = vmatpush2.bf16.msra.mxu0 0
    %4102 = vmatprep.subr.bf16.mxu0 0
    %4103 = vmatpush2.bf16.msra.mxu0 0
    %4104 = vmatprep.subr.bf16.mxu0 0
    %4105 = vmatpush2.bf16.msra.mxu0 0
    %4106 = vmatprep.subr.bf16.mxu0 0
    %4107 = vmatpush2.bf16.msra.mxu0 0
    %4108 = vmatprep.subr.bf16.mxu0 0
    %4109 = vmatpush2.bf16.msra.mxu0 0
    %4110 = vmatprep.subr.bf16.mxu0 0
    %4111 = vmatpush2.bf16.msra.mxu0 0
    %4112 = vmatprep.subr.bf16.mxu0 0
    %4113 = vmatpush2.bf16.msra.mxu0 0
    %4114 = vmatprep.mubr.bf16.mxu0 0
    %4115 = vmatmul.mubr.bf16.gmra.mxu0 %v4080
    %v4116 = vpop.f32.mrf.mxu0
    %v4117 = vadd.f32 %v4054, %v4116
    %v4118 = vpop.f32.mrf.mxu0
    %v4119 = vpop.f32.mrf.mxu0
    %v4120 = vadd.f32 %v4054, %v4119
    %v4121 = vpop.f32.mrf.mxu0
    %4122 = vdwg.mxu0
    %v4123 = vadd.f32 %v4117, %v1362
    %v4124 = vadd.f32 %v4120, %v1364
    %v4125 = vld [vmem:[%s5 + $0x80] sm:$0x1]
    %v4126 = vld [vmem:[%s5 + $0x88] sm:$0x1]
    %v4127 = vsel %vm55, %v4123, 0.0
    %4128 = vadd.xlane.f32.xlu0 %v4127
    %v4129 = vpop.xlane.xlu0 %4128
    %v4130 = vsel %vm55, %v4124, 0.0
    %4131 = vadd.xlane.f32.xlu0 %v4130
    %v4132 = vpop.xlane.xlu0 %4131
    %v4133 = vmul.f32 %v4129, %v1308
    %v4134 = vmul.f32 %v4132, %v1308
    %v4135 = vsub.f32 %v4123, %v4133
    %v4136 = vsub.f32 %v4124, %v4134
    %v4137 = vmul.f32 %v4135, %v4135
    %v4138 = vmul.f32 %v4136, %v4136
    %v4139 = vsel %vm55, %v4137, 0.0
    %4140 = vadd.xlane.f32.xlu0 %v4139
    %v4141 = vpop.xlane.xlu0 %4140
    %v4142 = vsel %vm55, %v4138, 0.0
    %4143 = vadd.xlane.f32.xlu0 %v4142
    %v4144 = vpop.xlane.xlu0 %4143
    %v4145 = vmul.f32 %v4141, %v1308
    %v4146 = vmul.f32 %v4144, %v1308
    %v4147 = vadd.f32 %v4145, 1e-12
    %v4148 = vadd.f32 %v4146, 1e-12
    %v4149 = vrsqrt.pop %v4147
    %v4150 = vrsqrt.pop %v4148
    %v4151 = vmul.f32 %v4135, %v4149
    %v4152 = vmul.f32 %v4136, %v4150
    %v4153 = vlaneseq
    %v4154 = vshrl.u32 %v4153, 7
    %v4155 = vsub.s32 0, %v4154
    %v4156 = vrot.slane %v4125, %v4155
    %v4157 = vmul.f32 %v4151, %v4156
    %v4158 = vmul.f32 %v4152, %v4156
    %v4159 = vlaneseq
    %v4160 = vshrl.u32 %v4159, 7
    %v4161 = vsub.s32 0, %v4160
    %v4162 = vrot.slane %v4126, %v4161
    %v4163 = vadd.f32 %v4157, %v4162
    %v4164 = vadd.f32 %v4158, %v4162
    %4165 = vst.msk [vmem:[#allocation2] sm:$0xff] %vm55, %v3919
    %4166 = vst.msk [vmem:[#allocation2 + $0x8] sm:$0xff] %vm55, %v4163
    %4167 = vst.msk [vmem:[#allocation2 + $0x10] sm:$0xff] %vm55, %v3920
    %4168 = vst.msk [vmem:[#allocation2 + $0x18] sm:$0xff] %vm55, %v4164
    // Predicated region
    $region30: #{tpu_custom_call.1} parent=1 // pred_check
      _
    $region31: #{tpu_custom_call.1} parent=1 // pred_check_branch
      %4170 = sbr.rel (0) target = $region33
    $region32: #{tpu_custom_call.1} parent=1 // pred_region
      %s4172 = ssub.s32 512, 512
      %4173 = vsyncadd [#allocation3], %s4172
      %s4174 = sshll.u32 [#allocation2], 4
      %s4175 = int_to_ptr.vmem [resolvable:$true] %s4174
      %4180 = dma.vmem_to_hbm [thread:$0]  %s4175, 512, %s7, [#allocation3], 128, 128, 8
    $region33: #{tpu_custom_call.1} parent=1 // pred_fallthru
      _
    // Predicated region
    $region34: #{tpu_custom_call.1} parent=1 // pred_check
      _
    $region35: #{tpu_custom_call.1} parent=1 // pred_check_branch
      %4182 = sbr.rel (0) target = $region37
    $region36: #{tpu_custom_call.1} parent=1 // pred_region
      %4183 = dma.done [#allocation3], 512
    $region37: #{tpu_custom_call.1} parent=1 // pred_fallthru
      _
    %4184 = vsyncpa [#allocation3], 1

</llo_original>
